<compile_context>
chip_gen: v6e
topology: v6e:2x2x1
jax: 0.10.0
libtpu: 0.0.40
codegen_flags: <defaults>
</compile_context>

<pallas_src>
import jax
import jax.numpy as jnp
from jax import lax
from jax.experimental import pallas as pl
from jax.experimental.pallas import tpu as pltpu

_BT = 8  # batch tile = one sublane tile


# ----------------------------------------------------------------------------
# Fused encoder kernel (all GRU layers + h2o linear in one pallas_call)
# ----------------------------------------------------------------------------
def _make_encoder_kernel(num_layers, T, H):
    """Builds a kernel with statically-unrolled, wavefront-interleaved loops.

    refs layout (per grid point = one batch tile of 8 rows):
      x_ref                              : (T*8, D)  t-major rows (row = t*8+b)
      per layer l (4 refs each):
        wih : (D_l, 3H)   fused input->gate weights, gate order (r, z, n)
        whh : (H, 3H)     fused hidden->gate weights
        bi  : (1, 3H)     b_ih with b_hr/b_hz folded in: [b_ir+b_hr, b_iz+b_hz, b_in]
        bhn : (1, H)      b_hn (must stay inside r * (...))
      w_out : (H, out)    linear head weight
      b_out : (1, out)    linear head bias
      o_ref : (8, out)    output tile
    """
    BT = _BT

    def kernel(*refs):
        x_ref = refs[0]
        layer_refs = refs[1:1 + 4 * num_layers]
        w_out_ref, b_out_ref, o_ref = refs[1 + 4 * num_layers:]

        wih = [layer_refs[4 * l][...] for l in range(num_layers)]      # (D_l, 3H)
        whh = [layer_refs[4 * l + 1][...] for l in range(num_layers)]  # (H, 3H)
        # Pre-broadcast biases once (JAX does not CSE broadcast_in_dim).
        bi = [jnp.broadcast_to(layer_refs[4 * l + 2][...], (BT, 3 * H))
              for l in range(num_layers)]
        bhn = [jnp.broadcast_to(layer_refs[4 * l + 3][...], (BT, H))
               for l in range(num_layers)]

        # Hoisted layer-0 input projection: one MXU pass over all T*BT rows,
        # bias folded in.  Rows are already t-major (wrapper-side transpose),
        # so per-step tiles are sublane-aligned static slices.
        gi0 = (jnp.dot(x_ref[...], wih[0], preferred_element_type=jnp.float32)
               + layer_refs[2][...])

        def gru_cell(gi, h_prev, whh_l, bhn_l):
            gh = jnp.dot(h_prev, whh_l, preferred_element_type=jnp.float32)
            rz = jax.nn.sigmoid(gi[:, :2 * H] + gh[:, :2 * H])
            r = rz[:, :H]
            z = rz[:, H:]
            n = jnp.tanh(gi[:, 2 * H:] + r * (gh[:, 2 * H:] + bhn_l))
            return (1.0 - z) * n + z * h_prev

        h = [jnp.zeros((BT, H), jnp.float32) for _ in range(num_layers)]  # h0 = 0
        y_pend = [None] * num_layers  # layer-l output at its most recent step

        # Wavefront interleave over (layer, time): at wave w, layer l handles
        # step t = w - l.  Layer l's (l>0) input projection depends only on
        # layer l-1's step-t output (off layer l's recurrent chain), so each
        # wave exposes independent MXU+EUP work from the other layers.
        # Descending layer order consumes y_pend[l-1] (== step t) before layer
        # l-1 overwrites it this wave; live range is one (8,H) tile per layer.
        for w in range(T + num_layers - 1):
            lo = max(0, w - T + 1)
            hi = min(num_layers - 1, w)
            for l in range(hi, lo - 1, -1):
                t = w - l
                if l == 0:
                    gi = gi0[t * BT:(t + 1) * BT, :]
                else:
                    gi = (jnp.dot(y_pend[l - 1], wih[l],
                                  preferred_element_type=jnp.float32) + bi[l])
                h[l] = gru_cell(gi, h[l], whh[l], bhn[l])
                if l < num_layers - 1:
                    y_pend[l] = h[l]

        # TODO(synk): whh could be held resident in MXU weight registers across
        # the unrolled steps via pltpu.matmul_push_rhs/acc_lhs/pop, and the
        # 3H=96 gate width padded to 128 lanes on v5e; left on jnp.dot for
        # portability.
        o_ref[...] = (
            jnp.dot(h[num_layers - 1], w_out_ref[...],
                    preferred_element_type=jnp.float32) + b_out_ref[...]
        ).astype(o_ref.dtype)

    return kernel


# ----------------------------------------------------------------------------
# Wrapper
# ----------------------------------------------------------------------------
def encoder_forward(x_btd, fused):
    """x_btd: (B, T, obs_dim) float32 (batch_first, like the PyTorch module)."""
    B, T, D = x_btd.shape
    layers = fused["layers"]
    num_layers = len(layers)
    H = layers[0]["whh"].shape[0]
    out_dim = fused["w_out"].shape[-1]

    # Pad batch to whole sublane tiles and reorder to t-major rows per batch
    # tile on the XLA side (one-time HBM-side transpose, no in-kernel gathers):
    #   (B,T,D) -> (Bp,T,D) -> (nbt,8,T,D) -> (nbt,T,8,D) -> (nbt,T*8,D)
    Bp = pl.cdiv(B, _BT) * _BT
    nbt = Bp // _BT
    xp = jnp.zeros((Bp, T, D), jnp.float32).at[:B].set(x_btd.astype(jnp.float32))
    x_rows = xp.reshape(nbt, _BT, T, D).transpose(0, 2, 1, 3).reshape(nbt, T * _BT, D)

    def full_spec(shape):
        nd = len(shape)
        return pl.BlockSpec(shape, lambda j, nd=nd: (0,) * nd)

    flat_weights = []
    in_specs = [pl.BlockSpec((None, T * _BT, D), lambda j: (j, 0, 0))]
    for lp in layers:
        for name in ("wih", "whh", "bi", "bhn"):
            w = lp[name]
            flat_weights.append(w)
            in_specs.append(full_spec(w.shape))
    flat_weights += [fused["w_out"], fused["b_out"]]
    in_specs += [full_spec((H, out_dim)), full_spec((1, out_dim))]

    # Advisory cost hint for XLA scheduling around the custom call.
    flops = 2 * T * Bp * D * 3 * H                     # hoisted layer-0 projection
    flops += (num_layers - 1) * 2 * T * Bp * H * 3 * H  # per-step l>0 projections
    flops += num_layers * 2 * T * Bp * H * 3 * H        # per-step hidden projections
    flops += 2 * Bp * H * out_dim                        # linear head
    transcendentals = num_layers * 3 * T * Bp * H
    bytes_accessed = 4 * (
        int(x_rows.size) + sum(int(w.size) for w in flat_weights) + Bp * out_dim
    )

    out = pl.pallas_call(
        _make_encoder_kernel(num_layers, T, H),
        out_shape=jax.ShapeDtypeStruct((Bp, out_dim), jnp.float32),
        grid=(nbt,),
        in_specs=in_specs,
        out_specs=pl.BlockSpec((_BT, out_dim), lambda j: (j, 0)),
        compiler_params=pltpu.CompilerParams(
            dimension_semantics=("parallel",),       # batch tiles -> 2 TCs on v7x
            vmem_limit_bytes=32 * 1024 * 1024,
        ),
        cost_estimate=pl.CostEstimate(
            flops=flops,
            transcendentals=transcendentals,
            bytes_accessed=bytes_accessed,
        ),
    )(x_rows, *flat_weights)
    return out[:B]


# ----------------------------------------------------------------------------
# Parameter construction (PyTorch shapes / gate order) + fused layout
# ----------------------------------------------------------------------------
def init_params(key, latent_dim, obs_dim, hidden_units, hidden_layers):
    k = 1.0 / jnp.sqrt(jnp.float32(hidden_units))
    params = {"gru": []}
    for l in range(hidden_layers):
        d_in = obs_dim if l == 0 else hidden_units
        key, k1, k2, k3, k4 = jax.random.split(key, 5)
        params["gru"].append(
            {
                # (3, D, H): transposed per-gate PyTorch weight_ih_l{l}; gates (r, z, n)
                "wih": jax.random.uniform(k1, (3, d_in, hidden_units), jnp.float32, -k, k),
                "whh": jax.random.uniform(k2, (3, hidden_units, hidden_units), jnp.float32, -k, k),
                "bih": jax.random.uniform(k3, (3, 1, hidden_units), jnp.float32, -k, k),
                "bhh": jax.random.uniform(k4, (3, 1, hidden_units), jnp.float32, -k, k),
            }
        )
    key, k5, k6 = jax.random.split(key, 3)
    params["w_out"] = jax.random.uniform(
        k5, (hidden_units, 2 * latent_dim), jnp.float32, -k, k
    )
    params["b_out"] = jax.random.uniform(k6, (1, 2 * latent_dim), jnp.float32, -k, k)
    return params


def fuse_params(params):
    """Re-lay PyTorch-style per-gate params into the fused kernel layout."""
    fused = {"layers": [], "w_out": params["w_out"], "b_out": params["b_out"]}
    for layer in params["gru"]:
        wih, whh, bih, bhh = layer["wih"], layer["whh"], layer["bih"], layer["bhh"]
        fused["layers"].append(
            {
                "wih": jnp.concatenate([wih[0], wih[1], wih[2]], axis=1),   # (D, 3H)
                "whh": jnp.concatenate([whh[0], whh[1], whh[2]], axis=1),   # (H, 3H)
                # fold b_hr / b_hz into the hoisted input bias; b_hn stays separate
                "bi": jnp.concatenate(
                    [bih[0] + bhh[0], bih[1] + bhh[1], bih[2]], axis=1
                ),                                                           # (1, 3H)
                "bhn": bhh[2],                                               # (1, H)
            }
        )
    return fused


# ----------------------------------------------------------------------------
# Pure-JAX reference (PyTorch GRU semantics, lax.scan) for a sanity check
# ----------------------------------------------------------------------------
def encoder_reference(x_btd, params):
    y = jnp.transpose(x_btd.astype(jnp.float32), (1, 0, 2))  # (T, B, D)
    for layer in params["gru"]:
        wih, whh, bih, bhh = layer["wih"], layer["whh"], layer["bih"], layer["bhh"]
        B = y.shape[1]
        H = whh.shape[-1]

        def step(h, x_t):
            gi = jnp.einsum("bd,gdh->gbh", x_t, wih) + bih
            gh = jnp.einsum("bh,ghk->gbk", h, whh) + bhh
            r = jax.nn.sigmoid(gi[0] + gh[0])
            z = jax.nn.sigmoid(gi[1] + gh[1])
            n = jnp.tanh(gi[2] + r * gh[2])
            h_new = (1.0 - z) * n + z * h
            return h_new, h_new

        _, y = lax.scan(step, jnp.zeros((B, H), jnp.float32), y)
    h_last = y[-1]
    return h_last @ params["w_out"] + params["b_out"]


# ----------------------------------------------------------------------------
if __name__ == "__main__":
    # Small shapes consistent with the module: latent_dim=4, obs_dim=16,
    # hidden_units=32, hidden_layers=2; input x: (batch=2, seq=8, obs_dim=16).
    latent_dim, obs_dim, hidden_units, hidden_layers = 4, 16, 32, 2
    B, T = 2, 8

    key = jax.random.PRNGKey(0)
    key, kx = jax.random.split(key)
    x = jax.random.normal(kx, (B, T, obs_dim), jnp.float32)

    params = init_params(key, latent_dim, obs_dim, hidden_units, hidden_layers)
    fused = fuse_params(params)

    out = encoder_forward(x, fused)
    out = jax.block_until_ready(out)

    ref = encoder_reference(x, params)
    assert out.shape == (B, 2 * latent_dim), out.shape
    assert jnp.allclose(out, ref, atol=1e-4, rtol=1e-4), (out, ref)

    print("KERNEL_OK")
</pallas_src>

<mosaic_0001>
module attributes {stable_mosaic.version = 11 : i64} {
  func.func @kernel(%arg0: i32, %arg1: memref<1x64x16xf32, #tpu.memory_space<vmem>>, %arg2: memref<16x96xf32, #tpu.memory_space<vmem>>, %arg3: memref<32x96xf32, #tpu.memory_space<vmem>>, %arg4: memref<1x96xf32, #tpu.memory_space<vmem>>, %arg5: memref<1x32xf32, #tpu.memory_space<vmem>>, %arg6: memref<32x96xf32, #tpu.memory_space<vmem>>, %arg7: memref<32x96xf32, #tpu.memory_space<vmem>>, %arg8: memref<1x96xf32, #tpu.memory_space<vmem>>, %arg9: memref<1x32xf32, #tpu.memory_space<vmem>>, %arg10: memref<32x8xf32, #tpu.memory_space<vmem>>, %arg11: memref<1x8xf32, #tpu.memory_space<vmem>>, %arg12: memref<8x8xf32, #tpu.memory_space<vmem>>) attributes {dimension_semantics = [#tpu.dimension_semantics<parallel>], iteration_bounds = array<i64: 1>, scalar_prefetch = 0 : i64, scratch_operands = 0 : i64, tpu.core_type = #tpu.core_type<tc>, window_params = [{transform_indices = @transform_0, window_bounds = array<i64: 1, 64, 16>}, {pipeline_mode = #tpu.pipeline_mode<synchronous>, transform_indices = @transform_1, window_bounds = array<i64: 16, 96>}, {pipeline_mode = #tpu.pipeline_mode<synchronous>, transform_indices = @transform_2, window_bounds = array<i64: 32, 96>}, {pipeline_mode = #tpu.pipeline_mode<synchronous>, transform_indices = @transform_3, window_bounds = array<i64: 1, 96>}, {pipeline_mode = #tpu.pipeline_mode<synchronous>, transform_indices = @transform_4, window_bounds = array<i64: 1, 32>}, {pipeline_mode = #tpu.pipeline_mode<synchronous>, transform_indices = @transform_5, window_bounds = array<i64: 32, 96>}, {pipeline_mode = #tpu.pipeline_mode<synchronous>, transform_indices = @transform_6, window_bounds = array<i64: 32, 96>}, {pipeline_mode = #tpu.pipeline_mode<synchronous>, transform_indices = @transform_7, window_bounds = array<i64: 1, 96>}, {pipeline_mode = #tpu.pipeline_mode<synchronous>, transform_indices = @transform_8, window_bounds = array<i64: 1, 32>}, {pipeline_mode = #tpu.pipeline_mode<synchronous>, transform_indices = @transform_9, window_bounds = array<i64: 32, 8>}, {pipeline_mode = #tpu.pipeline_mode<synchronous>, transform_indices = @transform_10, window_bounds = array<i64: 1, 8>}, {transform_indices = @transform_11, window_bounds = array<i64: 8, 8>}]} {
    %c0 = arith.constant 0 : index
    %c0_0 = arith.constant 0 : index
    %0 = vector.load %arg2[%c0, %c0_0] : memref<16x96xf32, #tpu.memory_space<vmem>>, vector<16x96xf32>
    %c0_1 = arith.constant 0 : index
    %c0_2 = arith.constant 0 : index
    %1 = vector.load %arg6[%c0_1, %c0_2] : memref<32x96xf32, #tpu.memory_space<vmem>>, vector<32x96xf32>
    %c0_3 = arith.constant 0 : index
    %c0_4 = arith.constant 0 : index
    %2 = vector.load %arg3[%c0_3, %c0_4] : memref<32x96xf32, #tpu.memory_space<vmem>>, vector<32x96xf32>
    %c0_5 = arith.constant 0 : index
    %c0_6 = arith.constant 0 : index
    %3 = vector.load %arg7[%c0_5, %c0_6] : memref<32x96xf32, #tpu.memory_space<vmem>>, vector<32x96xf32>
    %c0_7 = arith.constant 0 : index
    %c0_8 = arith.constant 0 : index
    %4 = vector.load %arg8[%c0_7, %c0_8] : memref<1x96xf32, #tpu.memory_space<vmem>>, vector<1x96xf32>
    %5 = vector.shape_cast %4 : vector<1x96xf32> to vector<1x96xf32>
    %6 = vector.broadcast %5 : vector<1x96xf32> to vector<8x96xf32>
    %c0_9 = arith.constant 0 : index
    %c0_10 = arith.constant 0 : index
    %7 = vector.load %arg5[%c0_9, %c0_10] : memref<1x32xf32, #tpu.memory_space<vmem>>, vector<1x32xf32>
    %8 = vector.shape_cast %7 : vector<1x32xf32> to vector<1x32xf32>
    %9 = vector.broadcast %8 : vector<1x32xf32> to vector<8x32xf32>
    %c0_11 = arith.constant 0 : index
    %c0_12 = arith.constant 0 : index
    %10 = vector.load %arg9[%c0_11, %c0_12] : memref<1x32xf32, #tpu.memory_space<vmem>>, vector<1x32xf32>
    %11 = vector.shape_cast %10 : vector<1x32xf32> to vector<1x32xf32>
    %12 = vector.broadcast %11 : vector<1x32xf32> to vector<8x32xf32>
    %c0_13 = arith.constant 0 : index
    %c0_14 = arith.constant 0 : index
    %c0_15 = arith.constant 0 : index
    %13 = vector.load %arg1[%c0_13, %c0_14, %c0_15] : memref<1x64x16xf32, #tpu.memory_space<vmem>>, vector<1x64x16xf32>
    %14 = vector.shape_cast %13 : vector<1x64x16xf32> to vector<64x16xf32>
    %cst = arith.constant dense<0.000000e+00> : vector<64x96xf32>
    %15 = tpu.matmul %14, %0, %cst {dimension_numbers = #tpu.dot_dimension_numbers<[1], [0], [0], [1], [0, 0, 1, 1], [], []>} : vector<64x16xf32>, vector<16x96xf32>, vector<64x96xf32> -> vector<64x96xf32>
    %c0_16 = arith.constant 0 : index
    %c0_17 = arith.constant 0 : index
    %16 = vector.load %arg4[%c0_16, %c0_17] : memref<1x96xf32, #tpu.memory_space<vmem>>, vector<1x96xf32>
    %17 = vector.broadcast %16 : vector<1x96xf32> to vector<64x96xf32>
    %18 = arith.addf %15, %17 : vector<64x96xf32>
    %cst_18 = arith.constant 0.000000e+00 : f32
    %19 = vector.broadcast %cst_18 : f32 to vector<8x32xf32>
    %cst_19 = arith.constant 0.000000e+00 : f32
    %20 = vector.broadcast %cst_19 : f32 to vector<8x32xf32>
    %21 = vector.extract_strided_slice %18 {offsets = [0, 0], sizes = [8, 96], strides = [1, 1]} : vector<64x96xf32> to vector<8x96xf32>
    %cst_20 = arith.constant dense<0.000000e+00> : vector<8x96xf32>
    %22 = tpu.matmul %19, %2, %cst_20 {dimension_numbers = #tpu.dot_dimension_numbers<[1], [0], [0], [1], [0, 0, 1, 1], [], []>} : vector<8x32xf32>, vector<32x96xf32>, vector<8x96xf32> -> vector<8x96xf32>
    %23 = vector.extract_strided_slice %21 {offsets = [0, 0], sizes = [8, 64], strides = [1, 1]} : vector<8x96xf32> to vector<8x64xf32>
    %24 = vector.extract_strided_slice %22 {offsets = [0, 0], sizes = [8, 64], strides = [1, 1]} : vector<8x96xf32> to vector<8x64xf32>
    %25 = arith.addf %23, %24 : vector<8x64xf32>
    %26 = arith.negf %25 : vector<8x64xf32>
    %27 = math.exp %26 : vector<8x64xf32>
    %cst_21 = arith.constant 1.000000e+00 : f32
    %28 = vector.broadcast %cst_21 : f32 to vector<8x64xf32>
    %29 = arith.addf %28, %27 : vector<8x64xf32>
    %30 = arith.divf %28, %29 : vector<8x64xf32>
    %31 = vector.extract_strided_slice %30 {offsets = [0, 0], sizes = [8, 32], strides = [1, 1]} : vector<8x64xf32> to vector<8x32xf32>
    %32 = vector.extract_strided_slice %30 {offsets = [0, 32], sizes = [8, 32], strides = [1, 1]} : vector<8x64xf32> to vector<8x32xf32>
    %33 = vector.extract_strided_slice %21 {offsets = [0, 64], sizes = [8, 32], strides = [1, 1]} : vector<8x96xf32> to vector<8x32xf32>
    %34 = vector.extract_strided_slice %22 {offsets = [0, 64], sizes = [8, 32], strides = [1, 1]} : vector<8x96xf32> to vector<8x32xf32>
    %35 = arith.addf %34, %9 : vector<8x32xf32>
    %36 = arith.mulf %31, %35 : vector<8x32xf32>
    %37 = arith.addf %33, %36 : vector<8x32xf32>
    %38 = math.tanh %37 : vector<8x32xf32>
    %cst_22 = arith.constant 1.000000e+00 : f32
    %39 = vector.broadcast %cst_22 : f32 to vector<8x32xf32>
    %40 = arith.subf %39, %32 : vector<8x32xf32>
    %41 = arith.mulf %40, %38 : vector<8x32xf32>
    %42 = arith.mulf %32, %19 : vector<8x32xf32>
    %43 = arith.addf %41, %42 : vector<8x32xf32>
    %cst_23 = arith.constant dense<0.000000e+00> : vector<8x96xf32>
    %44 = tpu.matmul %43, %1, %cst_23 {dimension_numbers = #tpu.dot_dimension_numbers<[1], [0], [0], [1], [0, 0, 1, 1], [], []>} : vector<8x32xf32>, vector<32x96xf32>, vector<8x96xf32> -> vector<8x96xf32>
    %45 = arith.addf %44, %6 : vector<8x96xf32>
    %cst_24 = arith.constant dense<0.000000e+00> : vector<8x96xf32>
    %46 = tpu.matmul %20, %3, %cst_24 {dimension_numbers = #tpu.dot_dimension_numbers<[1], [0], [0], [1], [0, 0, 1, 1], [], []>} : vector<8x32xf32>, vector<32x96xf32>, vector<8x96xf32> -> vector<8x96xf32>
    %47 = vector.extract_strided_slice %45 {offsets = [0, 0], sizes = [8, 64], strides = [1, 1]} : vector<8x96xf32> to vector<8x64xf32>
    %48 = vector.extract_strided_slice %46 {offsets = [0, 0], sizes = [8, 64], strides = [1, 1]} : vector<8x96xf32> to vector<8x64xf32>
    %49 = arith.addf %47, %48 : vector<8x64xf32>
    %50 = arith.negf %49 : vector<8x64xf32>
    %51 = math.exp %50 : vector<8x64xf32>
    %cst_25 = arith.constant 1.000000e+00 : f32
    %52 = vector.broadcast %cst_25 : f32 to vector<8x64xf32>
    %53 = arith.addf %52, %51 : vector<8x64xf32>
    %54 = arith.divf %52, %53 : vector<8x64xf32>
    %55 = vector.extract_strided_slice %54 {offsets = [0, 0], sizes = [8, 32], strides = [1, 1]} : vector<8x64xf32> to vector<8x32xf32>
    %56 = vector.extract_strided_slice %54 {offsets = [0, 32], sizes = [8, 32], strides = [1, 1]} : vector<8x64xf32> to vector<8x32xf32>
    %57 = vector.extract_strided_slice %45 {offsets = [0, 64], sizes = [8, 32], strides = [1, 1]} : vector<8x96xf32> to vector<8x32xf32>
    %58 = vector.extract_strided_slice %46 {offsets = [0, 64], sizes = [8, 32], strides = [1, 1]} : vector<8x96xf32> to vector<8x32xf32>
    %59 = arith.addf %58, %12 : vector<8x32xf32>
    %60 = arith.mulf %55, %59 : vector<8x32xf32>
    %61 = arith.addf %57, %60 : vector<8x32xf32>
    %62 = math.tanh %61 : vector<8x32xf32>
    %cst_26 = arith.constant 1.000000e+00 : f32
    %63 = vector.broadcast %cst_26 : f32 to vector<8x32xf32>
    %64 = arith.subf %63, %56 : vector<8x32xf32>
    %65 = arith.mulf %64, %62 : vector<8x32xf32>
    %66 = arith.mulf %56, %20 : vector<8x32xf32>
    %67 = arith.addf %65, %66 : vector<8x32xf32>
    %68 = vector.extract_strided_slice %18 {offsets = [8, 0], sizes = [8, 96], strides = [1, 1]} : vector<64x96xf32> to vector<8x96xf32>
    %cst_27 = arith.constant dense<0.000000e+00> : vector<8x96xf32>
    %69 = tpu.matmul %43, %2, %cst_27 {dimension_numbers = #tpu.dot_dimension_numbers<[1], [0], [0], [1], [0, 0, 1, 1], [], []>} : vector<8x32xf32>, vector<32x96xf32>, vector<8x96xf32> -> vector<8x96xf32>
    %70 = vector.extract_strided_slice %68 {offsets = [0, 0], sizes = [8, 64], strides = [1, 1]} : vector<8x96xf32> to vector<8x64xf32>
    %71 = vector.extract_strided_slice %69 {offsets = [0, 0], sizes = [8, 64], strides = [1, 1]} : vector<8x96xf32> to vector<8x64xf32>
    %72 = arith.addf %70, %71 : vector<8x64xf32>
    %73 = arith.negf %72 : vector<8x64xf32>
    %74 = math.exp %73 : vector<8x64xf32>
    %cst_28 = arith.constant 1.000000e+00 : f32
    %75 = vector.broadcast %cst_28 : f32 to vector<8x64xf32>
    %76 = arith.addf %75, %74 : vector<8x64xf32>
    %77 = arith.divf %75, %76 : vector<8x64xf32>
    %78 = vector.extract_strided_slice %77 {offsets = [0, 0], sizes = [8, 32], strides = [1, 1]} : vector<8x64xf32> to vector<8x32xf32>
    %79 = vector.extract_strided_slice %77 {offsets = [0, 32], sizes = [8, 32], strides = [1, 1]} : vector<8x64xf32> to vector<8x32xf32>
    %80 = vector.extract_strided_slice %68 {offsets = [0, 64], sizes = [8, 32], strides = [1, 1]} : vector<8x96xf32> to vector<8x32xf32>
    %81 = vector.extract_strided_slice %69 {offsets = [0, 64], sizes = [8, 32], strides = [1, 1]} : vector<8x96xf32> to vector<8x32xf32>
    %82 = arith.addf %81, %9 : vector<8x32xf32>
    %83 = arith.mulf %78, %82 : vector<8x32xf32>
    %84 = arith.addf %80, %83 : vector<8x32xf32>
    %85 = math.tanh %84 : vector<8x32xf32>
    %cst_29 = arith.constant 1.000000e+00 : f32
    %86 = vector.broadcast %cst_29 : f32 to vector<8x32xf32>
    %87 = arith.subf %86, %79 : vector<8x32xf32>
    %88 = arith.mulf %87, %85 : vector<8x32xf32>
    %89 = arith.mulf %79, %43 : vector<8x32xf32>
    %90 = arith.addf %88, %89 : vector<8x32xf32>
    %cst_30 = arith.constant dense<0.000000e+00> : vector<8x96xf32>
    %91 = tpu.matmul %90, %1, %cst_30 {dimension_numbers = #tpu.dot_dimension_numbers<[1], [0], [0], [1], [0, 0, 1, 1], [], []>} : vector<8x32xf32>, vector<32x96xf32>, vector<8x96xf32> -> vector<8x96xf32>
    %92 = arith.addf %91, %6 : vector<8x96xf32>
    %cst_31 = arith.constant dense<0.000000e+00> : vector<8x96xf32>
    %93 = tpu.matmul %67, %3, %cst_31 {dimension_numbers = #tpu.dot_dimension_numbers<[1], [0], [0], [1], [0, 0, 1, 1], [], []>} : vector<8x32xf32>, vector<32x96xf32>, vector<8x96xf32> -> vector<8x96xf32>
    %94 = vector.extract_strided_slice %92 {offsets = [0, 0], sizes = [8, 64], strides = [1, 1]} : vector<8x96xf32> to vector<8x64xf32>
    %95 = vector.extract_strided_slice %93 {offsets = [0, 0], sizes = [8, 64], strides = [1, 1]} : vector<8x96xf32> to vector<8x64xf32>
    %96 = arith.addf %94, %95 : vector<8x64xf32>
    %97 = arith.negf %96 : vector<8x64xf32>
    %98 = math.exp %97 : vector<8x64xf32>
    %cst_32 = arith.constant 1.000000e+00 : f32
    %99 = vector.broadcast %cst_32 : f32 to vector<8x64xf32>
    %100 = arith.addf %99, %98 : vector<8x64xf32>
    %101 = arith.divf %99, %100 : vector<8x64xf32>
    %102 = vector.extract_strided_slice %101 {offsets = [0, 0], sizes = [8, 32], strides = [1, 1]} : vector<8x64xf32> to vector<8x32xf32>
    %103 = vector.extract_strided_slice %101 {offsets = [0, 32], sizes = [8, 32], strides = [1, 1]} : vector<8x64xf32> to vector<8x32xf32>
    %104 = vector.extract_strided_slice %92 {offsets = [0, 64], sizes = [8, 32], strides = [1, 1]} : vector<8x96xf32> to vector<8x32xf32>
    %105 = vector.extract_strided_slice %93 {offsets = [0, 64], sizes = [8, 32], strides = [1, 1]} : vector<8x96xf32> to vector<8x32xf32>
    %106 = arith.addf %105, %12 : vector<8x32xf32>
    %107 = arith.mulf %102, %106 : vector<8x32xf32>
    %108 = arith.addf %104, %107 : vector<8x32xf32>
    %109 = math.tanh %108 : vector<8x32xf32>
    %cst_33 = arith.constant 1.000000e+00 : f32
    %110 = vector.broadcast %cst_33 : f32 to vector<8x32xf32>
    %111 = arith.subf %110, %103 : vector<8x32xf32>
    %112 = arith.mulf %111, %109 : vector<8x32xf32>
    %113 = arith.mulf %103, %67 : vector<8x32xf32>
    %114 = arith.addf %112, %113 : vector<8x32xf32>
    %115 = vector.extract_strided_slice %18 {offsets = [16, 0], sizes = [8, 96], strides = [1, 1]} : vector<64x96xf32> to vector<8x96xf32>
    %cst_34 = arith.constant dense<0.000000e+00> : vector<8x96xf32>
    %116 = tpu.matmul %90, %2, %cst_34 {dimension_numbers = #tpu.dot_dimension_numbers<[1], [0], [0], [1], [0, 0, 1, 1], [], []>} : vector<8x32xf32>, vector<32x96xf32>, vector<8x96xf32> -> vector<8x96xf32>
    %117 = vector.extract_strided_slice %115 {offsets = [0, 0], sizes = [8, 64], strides = [1, 1]} : vector<8x96xf32> to vector<8x64xf32>
    %118 = vector.extract_strided_slice %116 {offsets = [0, 0], sizes = [8, 64], strides = [1, 1]} : vector<8x96xf32> to vector<8x64xf32>
    %119 = arith.addf %117, %118 : vector<8x64xf32>
    %120 = arith.negf %119 : vector<8x64xf32>
    %121 = math.exp %120 : vector<8x64xf32>
    %cst_35 = arith.constant 1.000000e+00 : f32
    %122 = vector.broadcast %cst_35 : f32 to vector<8x64xf32>
    %123 = arith.addf %122, %121 : vector<8x64xf32>
    %124 = arith.divf %122, %123 : vector<8x64xf32>
    %125 = vector.extract_strided_slice %124 {offsets = [0, 0], sizes = [8, 32], strides = [1, 1]} : vector<8x64xf32> to vector<8x32xf32>
    %126 = vector.extract_strided_slice %124 {offsets = [0, 32], sizes = [8, 32], strides = [1, 1]} : vector<8x64xf32> to vector<8x32xf32>
    %127 = vector.extract_strided_slice %115 {offsets = [0, 64], sizes = [8, 32], strides = [1, 1]} : vector<8x96xf32> to vector<8x32xf32>
    %128 = vector.extract_strided_slice %116 {offsets = [0, 64], sizes = [8, 32], strides = [1, 1]} : vector<8x96xf32> to vector<8x32xf32>
    %129 = arith.addf %128, %9 : vector<8x32xf32>
    %130 = arith.mulf %125, %129 : vector<8x32xf32>
    %131 = arith.addf %127, %130 : vector<8x32xf32>
    %132 = math.tanh %131 : vector<8x32xf32>
    %cst_36 = arith.constant 1.000000e+00 : f32
    %133 = vector.broadcast %cst_36 : f32 to vector<8x32xf32>
    %134 = arith.subf %133, %126 : vector<8x32xf32>
    %135 = arith.mulf %134, %132 : vector<8x32xf32>
    %136 = arith.mulf %126, %90 : vector<8x32xf32>
    %137 = arith.addf %135, %136 : vector<8x32xf32>
    %cst_37 = arith.constant dense<0.000000e+00> : vector<8x96xf32>
    %138 = tpu.matmul %137, %1, %cst_37 {dimension_numbers = #tpu.dot_dimension_numbers<[1], [0], [0], [1], [0, 0, 1, 1], [], []>} : vector<8x32xf32>, vector<32x96xf32>, vector<8x96xf32> -> vector<8x96xf32>
    %139 = arith.addf %138, %6 : vector<8x96xf32>
    %cst_38 = arith.constant dense<0.000000e+00> : vector<8x96xf32>
    %140 = tpu.matmul %114, %3, %cst_38 {dimension_numbers = #tpu.dot_dimension_numbers<[1], [0], [0], [1], [0, 0, 1, 1], [], []>} : vector<8x32xf32>, vector<32x96xf32>, vector<8x96xf32> -> vector<8x96xf32>
    %141 = vector.extract_strided_slice %139 {offsets = [0, 0], sizes = [8, 64], strides = [1, 1]} : vector<8x96xf32> to vector<8x64xf32>
    %142 = vector.extract_strided_slice %140 {offsets = [0, 0], sizes = [8, 64], strides = [1, 1]} : vector<8x96xf32> to vector<8x64xf32>
    %143 = arith.addf %141, %142 : vector<8x64xf32>
    %144 = arith.negf %143 : vector<8x64xf32>
    %145 = math.exp %144 : vector<8x64xf32>
    %cst_39 = arith.constant 1.000000e+00 : f32
    %146 = vector.broadcast %cst_39 : f32 to vector<8x64xf32>
    %147 = arith.addf %146, %145 : vector<8x64xf32>
    %148 = arith.divf %146, %147 : vector<8x64xf32>
    %149 = vector.extract_strided_slice %148 {offsets = [0, 0], sizes = [8, 32], strides = [1, 1]} : vector<8x64xf32> to vector<8x32xf32>
    %150 = vector.extract_strided_slice %148 {offsets = [0, 32], sizes = [8, 32], strides = [1, 1]} : vector<8x64xf32> to vector<8x32xf32>
    %151 = vector.extract_strided_slice %139 {offsets = [0, 64], sizes = [8, 32], strides = [1, 1]} : vector<8x96xf32> to vector<8x32xf32>
    %152 = vector.extract_strided_slice %140 {offsets = [0, 64], sizes = [8, 32], strides = [1, 1]} : vector<8x96xf32> to vector<8x32xf32>
    %153 = arith.addf %152, %12 : vector<8x32xf32>
    %154 = arith.mulf %149, %153 : vector<8x32xf32>
    %155 = arith.addf %151, %154 : vector<8x32xf32>
    %156 = math.tanh %155 : vector<8x32xf32>
    %cst_40 = arith.constant 1.000000e+00 : f32
    %157 = vector.broadcast %cst_40 : f32 to vector<8x32xf32>
    %158 = arith.subf %157, %150 : vector<8x32xf32>
    %159 = arith.mulf %158, %156 : vector<8x32xf32>
    %160 = arith.mulf %150, %114 : vector<8x32xf32>
    %161 = arith.addf %159, %160 : vector<8x32xf32>
    %162 = vector.extract_strided_slice %18 {offsets = [24, 0], sizes = [8, 96], strides = [1, 1]} : vector<64x96xf32> to vector<8x96xf32>
    %cst_41 = arith.constant dense<0.000000e+00> : vector<8x96xf32>
    %163 = tpu.matmul %137, %2, %cst_41 {dimension_numbers = #tpu.dot_dimension_numbers<[1], [0], [0], [1], [0, 0, 1, 1], [], []>} : vector<8x32xf32>, vector<32x96xf32>, vector<8x96xf32> -> vector<8x96xf32>
    %164 = vector.extract_strided_slice %162 {offsets = [0, 0], sizes = [8, 64], strides = [1, 1]} : vector<8x96xf32> to vector<8x64xf32>
    %165 = vector.extract_strided_slice %163 {offsets = [0, 0], sizes = [8, 64], strides = [1, 1]} : vector<8x96xf32> to vector<8x64xf32>
    %166 = arith.addf %164, %165 : vector<8x64xf32>
    %167 = arith.negf %166 : vector<8x64xf32>
    %168 = math.exp %167 : vector<8x64xf32>
    %cst_42 = arith.constant 1.000000e+00 : f32
    %169 = vector.broadcast %cst_42 : f32 to vector<8x64xf32>
    %170 = arith.addf %169, %168 : vector<8x64xf32>
    %171 = arith.divf %169, %170 : vector<8x64xf32>
    %172 = vector.extract_strided_slice %171 {offsets = [0, 0], sizes = [8, 32], strides = [1, 1]} : vector<8x64xf32> to vector<8x32xf32>
    %173 = vector.extract_strided_slice %171 {offsets = [0, 32], sizes = [8, 32], strides = [1, 1]} : vector<8x64xf32> to vector<8x32xf32>
    %174 = vector.extract_strided_slice %162 {offsets = [0, 64], sizes = [8, 32], strides = [1, 1]} : vector<8x96xf32> to vector<8x32xf32>
    %175 = vector.extract_strided_slice %163 {offsets = [0, 64], sizes = [8, 32], strides = [1, 1]} : vector<8x96xf32> to vector<8x32xf32>
    %176 = arith.addf %175, %9 : vector<8x32xf32>
    %177 = arith.mulf %172, %176 : vector<8x32xf32>
    %178 = arith.addf %174, %177 : vector<8x32xf32>
    %179 = math.tanh %178 : vector<8x32xf32>
    %cst_43 = arith.constant 1.000000e+00 : f32
    %180 = vector.broadcast %cst_43 : f32 to vector<8x32xf32>
    %181 = arith.subf %180, %173 : vector<8x32xf32>
    %182 = arith.mulf %181, %179 : vector<8x32xf32>
    %183 = arith.mulf %173, %137 : vector<8x32xf32>
    %184 = arith.addf %182, %183 : vector<8x32xf32>
    %cst_44 = arith.constant dense<0.000000e+00> : vector<8x96xf32>
    %185 = tpu.matmul %184, %1, %cst_44 {dimension_numbers = #tpu.dot_dimension_numbers<[1], [0], [0], [1], [0, 0, 1, 1], [], []>} : vector<8x32xf32>, vector<32x96xf32>, vector<8x96xf32> -> vector<8x96xf32>
    %186 = arith.addf %185, %6 : vector<8x96xf32>
    %cst_45 = arith.constant dense<0.000000e+00> : vector<8x96xf32>
    %187 = tpu.matmul %161, %3, %cst_45 {dimension_numbers = #tpu.dot_dimension_numbers<[1], [0], [0], [1], [0, 0, 1, 1], [], []>} : vector<8x32xf32>, vector<32x96xf32>, vector<8x96xf32> -> vector<8x96xf32>
    %188 = vector.extract_strided_slice %186 {offsets = [0, 0], sizes = [8, 64], strides = [1, 1]} : vector<8x96xf32> to vector<8x64xf32>
    %189 = vector.extract_strided_slice %187 {offsets = [0, 0], sizes = [8, 64], strides = [1, 1]} : vector<8x96xf32> to vector<8x64xf32>
    %190 = arith.addf %188, %189 : vector<8x64xf32>
    %191 = arith.negf %190 : vector<8x64xf32>
    %192 = math.exp %191 : vector<8x64xf32>
    %cst_46 = arith.constant 1.000000e+00 : f32
    %193 = vector.broadcast %cst_46 : f32 to vector<8x64xf32>
    %194 = arith.addf %193, %192 : vector<8x64xf32>
    %195 = arith.divf %193, %194 : vector<8x64xf32>
    %196 = vector.extract_strided_slice %195 {offsets = [0, 0], sizes = [8, 32], strides = [1, 1]} : vector<8x64xf32> to vector<8x32xf32>
    %197 = vector.extract_strided_slice %195 {offsets = [0, 32], sizes = [8, 32], strides = [1, 1]} : vector<8x64xf32> to vector<8x32xf32>
    %198 = vector.extract_strided_slice %186 {offsets = [0, 64], sizes = [8, 32], strides = [1, 1]} : vector<8x96xf32> to vector<8x32xf32>
    %199 = vector.extract_strided_slice %187 {offsets = [0, 64], sizes = [8, 32], strides = [1, 1]} : vector<8x96xf32> to vector<8x32xf32>
    %200 = arith.addf %199, %12 : vector<8x32xf32>
    %201 = arith.mulf %196, %200 : vector<8x32xf32>
    %202 = arith.addf %198, %201 : vector<8x32xf32>
    %203 = math.tanh %202 : vector<8x32xf32>
    %cst_47 = arith.constant 1.000000e+00 : f32
    %204 = vector.broadcast %cst_47 : f32 to vector<8x32xf32>
    %205 = arith.subf %204, %197 : vector<8x32xf32>
    %206 = arith.mulf %205, %203 : vector<8x32xf32>
    %207 = arith.mulf %197, %161 : vector<8x32xf32>
    %208 = arith.addf %206, %207 : vector<8x32xf32>
    %209 = vector.extract_strided_slice %18 {offsets = [32, 0], sizes = [8, 96], strides = [1, 1]} : vector<64x96xf32> to vector<8x96xf32>
    %cst_48 = arith.constant dense<0.000000e+00> : vector<8x96xf32>
    %210 = tpu.matmul %184, %2, %cst_48 {dimension_numbers = #tpu.dot_dimension_numbers<[1], [0], [0], [1], [0, 0, 1, 1], [], []>} : vector<8x32xf32>, vector<32x96xf32>, vector<8x96xf32> -> vector<8x96xf32>
    %211 = vector.extract_strided_slice %209 {offsets = [0, 0], sizes = [8, 64], strides = [1, 1]} : vector<8x96xf32> to vector<8x64xf32>
    %212 = vector.extract_strided_slice %210 {offsets = [0, 0], sizes = [8, 64], strides = [1, 1]} : vector<8x96xf32> to vector<8x64xf32>
    %213 = arith.addf %211, %212 : vector<8x64xf32>
    %214 = arith.negf %213 : vector<8x64xf32>
    %215 = math.exp %214 : vector<8x64xf32>
    %cst_49 = arith.constant 1.000000e+00 : f32
    %216 = vector.broadcast %cst_49 : f32 to vector<8x64xf32>
    %217 = arith.addf %216, %215 : vector<8x64xf32>
    %218 = arith.divf %216, %217 : vector<8x64xf32>
    %219 = vector.extract_strided_slice %218 {offsets = [0, 0], sizes = [8, 32], strides = [1, 1]} : vector<8x64xf32> to vector<8x32xf32>
    %220 = vector.extract_strided_slice %218 {offsets = [0, 32], sizes = [8, 32], strides = [1, 1]} : vector<8x64xf32> to vector<8x32xf32>
    %221 = vector.extract_strided_slice %209 {offsets = [0, 64], sizes = [8, 32], strides = [1, 1]} : vector<8x96xf32> to vector<8x32xf32>
    %222 = vector.extract_strided_slice %210 {offsets = [0, 64], sizes = [8, 32], strides = [1, 1]} : vector<8x96xf32> to vector<8x32xf32>
    %223 = arith.addf %222, %9 : vector<8x32xf32>
    %224 = arith.mulf %219, %223 : vector<8x32xf32>
    %225 = arith.addf %221, %224 : vector<8x32xf32>
    %226 = math.tanh %225 : vector<8x32xf32>
    %cst_50 = arith.constant 1.000000e+00 : f32
    %227 = vector.broadcast %cst_50 : f32 to vector<8x32xf32>
    %228 = arith.subf %227, %220 : vector<8x32xf32>
    %229 = arith.mulf %228, %226 : vector<8x32xf32>
    %230 = arith.mulf %220, %184 : vector<8x32xf32>
    %231 = arith.addf %229, %230 : vector<8x32xf32>
    %cst_51 = arith.constant dense<0.000000e+00> : vector<8x96xf32>
    %232 = tpu.matmul %231, %1, %cst_51 {dimension_numbers = #tpu.dot_dimension_numbers<[1], [0], [0], [1], [0, 0, 1, 1], [], []>} : vector<8x32xf32>, vector<32x96xf32>, vector<8x96xf32> -> vector<8x96xf32>
    %233 = arith.addf %232, %6 : vector<8x96xf32>
    %cst_52 = arith.constant dense<0.000000e+00> : vector<8x96xf32>
    %234 = tpu.matmul %208, %3, %cst_52 {dimension_numbers = #tpu.dot_dimension_numbers<[1], [0], [0], [1], [0, 0, 1, 1], [], []>} : vector<8x32xf32>, vector<32x96xf32>, vector<8x96xf32> -> vector<8x96xf32>
    %235 = vector.extract_strided_slice %233 {offsets = [0, 0], sizes = [8, 64], strides = [1, 1]} : vector<8x96xf32> to vector<8x64xf32>
    %236 = vector.extract_strided_slice %234 {offsets = [0, 0], sizes = [8, 64], strides = [1, 1]} : vector<8x96xf32> to vector<8x64xf32>
    %237 = arith.addf %235, %236 : vector<8x64xf32>
    %238 = arith.negf %237 : vector<8x64xf32>
    %239 = math.exp %238 : vector<8x64xf32>
    %cst_53 = arith.constant 1.000000e+00 : f32
    %240 = vector.broadcast %cst_53 : f32 to vector<8x64xf32>
    %241 = arith.addf %240, %239 : vector<8x64xf32>
    %242 = arith.divf %240, %241 : vector<8x64xf32>
    %243 = vector.extract_strided_slice %242 {offsets = [0, 0], sizes = [8, 32], strides = [1, 1]} : vector<8x64xf32> to vector<8x32xf32>
    %244 = vector.extract_strided_slice %242 {offsets = [0, 32], sizes = [8, 32], strides = [1, 1]} : vector<8x64xf32> to vector<8x32xf32>
    %245 = vector.extract_strided_slice %233 {offsets = [0, 64], sizes = [8, 32], strides = [1, 1]} : vector<8x96xf32> to vector<8x32xf32>
    %246 = vector.extract_strided_slice %234 {offsets = [0, 64], sizes = [8, 32], strides = [1, 1]} : vector<8x96xf32> to vector<8x32xf32>
    %247 = arith.addf %246, %12 : vector<8x32xf32>
    %248 = arith.mulf %243, %247 : vector<8x32xf32>
    %249 = arith.addf %245, %248 : vector<8x32xf32>
    %250 = math.tanh %249 : vector<8x32xf32>
    %cst_54 = arith.constant 1.000000e+00 : f32
    %251 = vector.broadcast %cst_54 : f32 to vector<8x32xf32>
    %252 = arith.subf %251, %244 : vector<8x32xf32>
    %253 = arith.mulf %252, %250 : vector<8x32xf32>
    %254 = arith.mulf %244, %208 : vector<8x32xf32>
    %255 = arith.addf %253, %254 : vector<8x32xf32>
    %256 = vector.extract_strided_slice %18 {offsets = [40, 0], sizes = [8, 96], strides = [1, 1]} : vector<64x96xf32> to vector<8x96xf32>
    %cst_55 = arith.constant dense<0.000000e+00> : vector<8x96xf32>
    %257 = tpu.matmul %231, %2, %cst_55 {dimension_numbers = #tpu.dot_dimension_numbers<[1], [0], [0], [1], [0, 0, 1, 1], [], []>} : vector<8x32xf32>, vector<32x96xf32>, vector<8x96xf32> -> vector<8x96xf32>
    %258 = vector.extract_strided_slice %256 {offsets = [0, 0], sizes = [8, 64], strides = [1, 1]} : vector<8x96xf32> to vector<8x64xf32>
    %259 = vector.extract_strided_slice %257 {offsets = [0, 0], sizes = [8, 64], strides = [1, 1]} : vector<8x96xf32> to vector<8x64xf32>
    %260 = arith.addf %258, %259 : vector<8x64xf32>
    %261 = arith.negf %260 : vector<8x64xf32>
    %262 = math.exp %261 : vector<8x64xf32>
    %cst_56 = arith.constant 1.000000e+00 : f32
    %263 = vector.broadcast %cst_56 : f32 to vector<8x64xf32>
    %264 = arith.addf %263, %262 : vector<8x64xf32>
    %265 = arith.divf %263, %264 : vector<8x64xf32>
    %266 = vector.extract_strided_slice %265 {offsets = [0, 0], sizes = [8, 32], strides = [1, 1]} : vector<8x64xf32> to vector<8x32xf32>
    %267 = vector.extract_strided_slice %265 {offsets = [0, 32], sizes = [8, 32], strides = [1, 1]} : vector<8x64xf32> to vector<8x32xf32>
    %268 = vector.extract_strided_slice %256 {offsets = [0, 64], sizes = [8, 32], strides = [1, 1]} : vector<8x96xf32> to vector<8x32xf32>
    %269 = vector.extract_strided_slice %257 {offsets = [0, 64], sizes = [8, 32], strides = [1, 1]} : vector<8x96xf32> to vector<8x32xf32>
    %270 = arith.addf %269, %9 : vector<8x32xf32>
    %271 = arith.mulf %266, %270 : vector<8x32xf32>
    %272 = arith.addf %268, %271 : vector<8x32xf32>
    %273 = math.tanh %272 : vector<8x32xf32>
    %cst_57 = arith.constant 1.000000e+00 : f32
    %274 = vector.broadcast %cst_57 : f32 to vector<8x32xf32>
    %275 = arith.subf %274, %267 : vector<8x32xf32>
    %276 = arith.mulf %275, %273 : vector<8x32xf32>
    %277 = arith.mulf %267, %231 : vector<8x32xf32>
    %278 = arith.addf %276, %277 : vector<8x32xf32>
    %cst_58 = arith.constant dense<0.000000e+00> : vector<8x96xf32>
    %279 = tpu.matmul %278, %1, %cst_58 {dimension_numbers = #tpu.dot_dimension_numbers<[1], [0], [0], [1], [0, 0, 1, 1], [], []>} : vector<8x32xf32>, vector<32x96xf32>, vector<8x96xf32> -> vector<8x96xf32>
    %280 = arith.addf %279, %6 : vector<8x96xf32>
    %cst_59 = arith.constant dense<0.000000e+00> : vector<8x96xf32>
    %281 = tpu.matmul %255, %3, %cst_59 {dimension_numbers = #tpu.dot_dimension_numbers<[1], [0], [0], [1], [0, 0, 1, 1], [], []>} : vector<8x32xf32>, vector<32x96xf32>, vector<8x96xf32> -> vector<8x96xf32>
    %282 = vector.extract_strided_slice %280 {offsets = [0, 0], sizes = [8, 64], strides = [1, 1]} : vector<8x96xf32> to vector<8x64xf32>
    %283 = vector.extract_strided_slice %281 {offsets = [0, 0], sizes = [8, 64], strides = [1, 1]} : vector<8x96xf32> to vector<8x64xf32>
    %284 = arith.addf %282, %283 : vector<8x64xf32>
    %285 = arith.negf %284 : vector<8x64xf32>
    %286 = math.exp %285 : vector<8x64xf32>
    %cst_60 = arith.constant 1.000000e+00 : f32
    %287 = vector.broadcast %cst_60 : f32 to vector<8x64xf32>
    %288 = arith.addf %287, %286 : vector<8x64xf32>
    %289 = arith.divf %287, %288 : vector<8x64xf32>
    %290 = vector.extract_strided_slice %289 {offsets = [0, 0], sizes = [8, 32], strides = [1, 1]} : vector<8x64xf32> to vector<8x32xf32>
    %291 = vector.extract_strided_slice %289 {offsets = [0, 32], sizes = [8, 32], strides = [1, 1]} : vector<8x64xf32> to vector<8x32xf32>
    %292 = vector.extract_strided_slice %280 {offsets = [0, 64], sizes = [8, 32], strides = [1, 1]} : vector<8x96xf32> to vector<8x32xf32>
    %293 = vector.extract_strided_slice %281 {offsets = [0, 64], sizes = [8, 32], strides = [1, 1]} : vector<8x96xf32> to vector<8x32xf32>
    %294 = arith.addf %293, %12 : vector<8x32xf32>
    %295 = arith.mulf %290, %294 : vector<8x32xf32>
    %296 = arith.addf %292, %295 : vector<8x32xf32>
    %297 = math.tanh %296 : vector<8x32xf32>
    %cst_61 = arith.constant 1.000000e+00 : f32
    %298 = vector.broadcast %cst_61 : f32 to vector<8x32xf32>
    %299 = arith.subf %298, %291 : vector<8x32xf32>
    %300 = arith.mulf %299, %297 : vector<8x32xf32>
    %301 = arith.mulf %291, %255 : vector<8x32xf32>
    %302 = arith.addf %300, %301 : vector<8x32xf32>
    %303 = vector.extract_strided_slice %18 {offsets = [48, 0], sizes = [8, 96], strides = [1, 1]} : vector<64x96xf32> to vector<8x96xf32>
    %cst_62 = arith.constant dense<0.000000e+00> : vector<8x96xf32>
    %304 = tpu.matmul %278, %2, %cst_62 {dimension_numbers = #tpu.dot_dimension_numbers<[1], [0], [0], [1], [0, 0, 1, 1], [], []>} : vector<8x32xf32>, vector<32x96xf32>, vector<8x96xf32> -> vector<8x96xf32>
    %305 = vector.extract_strided_slice %303 {offsets = [0, 0], sizes = [8, 64], strides = [1, 1]} : vector<8x96xf32> to vector<8x64xf32>
    %306 = vector.extract_strided_slice %304 {offsets = [0, 0], sizes = [8, 64], strides = [1, 1]} : vector<8x96xf32> to vector<8x64xf32>
    %307 = arith.addf %305, %306 : vector<8x64xf32>
    %308 = arith.negf %307 : vector<8x64xf32>
    %309 = math.exp %308 : vector<8x64xf32>
    %cst_63 = arith.constant 1.000000e+00 : f32
    %310 = vector.broadcast %cst_63 : f32 to vector<8x64xf32>
    %311 = arith.addf %310, %309 : vector<8x64xf32>
    %312 = arith.divf %310, %311 : vector<8x64xf32>
    %313 = vector.extract_strided_slice %312 {offsets = [0, 0], sizes = [8, 32], strides = [1, 1]} : vector<8x64xf32> to vector<8x32xf32>
    %314 = vector.extract_strided_slice %312 {offsets = [0, 32], sizes = [8, 32], strides = [1, 1]} : vector<8x64xf32> to vector<8x32xf32>
    %315 = vector.extract_strided_slice %303 {offsets = [0, 64], sizes = [8, 32], strides = [1, 1]} : vector<8x96xf32> to vector<8x32xf32>
    %316 = vector.extract_strided_slice %304 {offsets = [0, 64], sizes = [8, 32], strides = [1, 1]} : vector<8x96xf32> to vector<8x32xf32>
    %317 = arith.addf %316, %9 : vector<8x32xf32>
    %318 = arith.mulf %313, %317 : vector<8x32xf32>
    %319 = arith.addf %315, %318 : vector<8x32xf32>
    %320 = math.tanh %319 : vector<8x32xf32>
    %cst_64 = arith.constant 1.000000e+00 : f32
    %321 = vector.broadcast %cst_64 : f32 to vector<8x32xf32>
    %322 = arith.subf %321, %314 : vector<8x32xf32>
    %323 = arith.mulf %322, %320 : vector<8x32xf32>
    %324 = arith.mulf %314, %278 : vector<8x32xf32>
    %325 = arith.addf %323, %324 : vector<8x32xf32>
    %cst_65 = arith.constant dense<0.000000e+00> : vector<8x96xf32>
    %326 = tpu.matmul %325, %1, %cst_65 {dimension_numbers = #tpu.dot_dimension_numbers<[1], [0], [0], [1], [0, 0, 1, 1], [], []>} : vector<8x32xf32>, vector<32x96xf32>, vector<8x96xf32> -> vector<8x96xf32>
    %327 = arith.addf %326, %6 : vector<8x96xf32>
    %cst_66 = arith.constant dense<0.000000e+00> : vector<8x96xf32>
    %328 = tpu.matmul %302, %3, %cst_66 {dimension_numbers = #tpu.dot_dimension_numbers<[1], [0], [0], [1], [0, 0, 1, 1], [], []>} : vector<8x32xf32>, vector<32x96xf32>, vector<8x96xf32> -> vector<8x96xf32>
    %329 = vector.extract_strided_slice %327 {offsets = [0, 0], sizes = [8, 64], strides = [1, 1]} : vector<8x96xf32> to vector<8x64xf32>
    %330 = vector.extract_strided_slice %328 {offsets = [0, 0], sizes = [8, 64], strides = [1, 1]} : vector<8x96xf32> to vector<8x64xf32>
    %331 = arith.addf %329, %330 : vector<8x64xf32>
    %332 = arith.negf %331 : vector<8x64xf32>
    %333 = math.exp %332 : vector<8x64xf32>
    %cst_67 = arith.constant 1.000000e+00 : f32
    %334 = vector.broadcast %cst_67 : f32 to vector<8x64xf32>
    %335 = arith.addf %334, %333 : vector<8x64xf32>
    %336 = arith.divf %334, %335 : vector<8x64xf32>
    %337 = vector.extract_strided_slice %336 {offsets = [0, 0], sizes = [8, 32], strides = [1, 1]} : vector<8x64xf32> to vector<8x32xf32>
    %338 = vector.extract_strided_slice %336 {offsets = [0, 32], sizes = [8, 32], strides = [1, 1]} : vector<8x64xf32> to vector<8x32xf32>
    %339 = vector.extract_strided_slice %327 {offsets = [0, 64], sizes = [8, 32], strides = [1, 1]} : vector<8x96xf32> to vector<8x32xf32>
    %340 = vector.extract_strided_slice %328 {offsets = [0, 64], sizes = [8, 32], strides = [1, 1]} : vector<8x96xf32> to vector<8x32xf32>
    %341 = arith.addf %340, %12 : vector<8x32xf32>
    %342 = arith.mulf %337, %341 : vector<8x32xf32>
    %343 = arith.addf %339, %342 : vector<8x32xf32>
    %344 = math.tanh %343 : vector<8x32xf32>
    %cst_68 = arith.constant 1.000000e+00 : f32
    %345 = vector.broadcast %cst_68 : f32 to vector<8x32xf32>
    %346 = arith.subf %345, %338 : vector<8x32xf32>
    %347 = arith.mulf %346, %344 : vector<8x32xf32>
    %348 = arith.mulf %338, %302 : vector<8x32xf32>
    %349 = arith.addf %347, %348 : vector<8x32xf32>
    %350 = vector.extract_strided_slice %18 {offsets = [56, 0], sizes = [8, 96], strides = [1, 1]} : vector<64x96xf32> to vector<8x96xf32>
    %cst_69 = arith.constant dense<0.000000e+00> : vector<8x96xf32>
    %351 = tpu.matmul %325, %2, %cst_69 {dimension_numbers = #tpu.dot_dimension_numbers<[1], [0], [0], [1], [0, 0, 1, 1], [], []>} : vector<8x32xf32>, vector<32x96xf32>, vector<8x96xf32> -> vector<8x96xf32>
    %352 = vector.extract_strided_slice %350 {offsets = [0, 0], sizes = [8, 64], strides = [1, 1]} : vector<8x96xf32> to vector<8x64xf32>
    %353 = vector.extract_strided_slice %351 {offsets = [0, 0], sizes = [8, 64], strides = [1, 1]} : vector<8x96xf32> to vector<8x64xf32>
    %354 = arith.addf %352, %353 : vector<8x64xf32>
    %355 = arith.negf %354 : vector<8x64xf32>
    %356 = math.exp %355 : vector<8x64xf32>
    %cst_70 = arith.constant 1.000000e+00 : f32
    %357 = vector.broadcast %cst_70 : f32 to vector<8x64xf32>
    %358 = arith.addf %357, %356 : vector<8x64xf32>
    %359 = arith.divf %357, %358 : vector<8x64xf32>
    %360 = vector.extract_strided_slice %359 {offsets = [0, 0], sizes = [8, 32], strides = [1, 1]} : vector<8x64xf32> to vector<8x32xf32>
    %361 = vector.extract_strided_slice %359 {offsets = [0, 32], sizes = [8, 32], strides = [1, 1]} : vector<8x64xf32> to vector<8x32xf32>
    %362 = vector.extract_strided_slice %350 {offsets = [0, 64], sizes = [8, 32], strides = [1, 1]} : vector<8x96xf32> to vector<8x32xf32>
    %363 = vector.extract_strided_slice %351 {offsets = [0, 64], sizes = [8, 32], strides = [1, 1]} : vector<8x96xf32> to vector<8x32xf32>
    %364 = arith.addf %363, %9 : vector<8x32xf32>
    %365 = arith.mulf %360, %364 : vector<8x32xf32>
    %366 = arith.addf %362, %365 : vector<8x32xf32>
    %367 = math.tanh %366 : vector<8x32xf32>
    %cst_71 = arith.constant 1.000000e+00 : f32
    %368 = vector.broadcast %cst_71 : f32 to vector<8x32xf32>
    %369 = arith.subf %368, %361 : vector<8x32xf32>
    %370 = arith.mulf %369, %367 : vector<8x32xf32>
    %371 = arith.mulf %361, %325 : vector<8x32xf32>
    %372 = arith.addf %370, %371 : vector<8x32xf32>
    %cst_72 = arith.constant dense<0.000000e+00> : vector<8x96xf32>
    %373 = tpu.matmul %372, %1, %cst_72 {dimension_numbers = #tpu.dot_dimension_numbers<[1], [0], [0], [1], [0, 0, 1, 1], [], []>} : vector<8x32xf32>, vector<32x96xf32>, vector<8x96xf32> -> vector<8x96xf32>
    %374 = arith.addf %373, %6 : vector<8x96xf32>
    %cst_73 = arith.constant dense<0.000000e+00> : vector<8x96xf32>
    %375 = tpu.matmul %349, %3, %cst_73 {dimension_numbers = #tpu.dot_dimension_numbers<[1], [0], [0], [1], [0, 0, 1, 1], [], []>} : vector<8x32xf32>, vector<32x96xf32>, vector<8x96xf32> -> vector<8x96xf32>
    %376 = vector.extract_strided_slice %374 {offsets = [0, 0], sizes = [8, 64], strides = [1, 1]} : vector<8x96xf32> to vector<8x64xf32>
    %377 = vector.extract_strided_slice %375 {offsets = [0, 0], sizes = [8, 64], strides = [1, 1]} : vector<8x96xf32> to vector<8x64xf32>
    %378 = arith.addf %376, %377 : vector<8x64xf32>
    %379 = arith.negf %378 : vector<8x64xf32>
    %380 = math.exp %379 : vector<8x64xf32>
    %cst_74 = arith.constant 1.000000e+00 : f32
    %381 = vector.broadcast %cst_74 : f32 to vector<8x64xf32>
    %382 = arith.addf %381, %380 : vector<8x64xf32>
    %383 = arith.divf %381, %382 : vector<8x64xf32>
    %384 = vector.extract_strided_slice %383 {offsets = [0, 0], sizes = [8, 32], strides = [1, 1]} : vector<8x64xf32> to vector<8x32xf32>
    %385 = vector.extract_strided_slice %383 {offsets = [0, 32], sizes = [8, 32], strides = [1, 1]} : vector<8x64xf32> to vector<8x32xf32>
    %386 = vector.extract_strided_slice %374 {offsets = [0, 64], sizes = [8, 32], strides = [1, 1]} : vector<8x96xf32> to vector<8x32xf32>
    %387 = vector.extract_strided_slice %375 {offsets = [0, 64], sizes = [8, 32], strides = [1, 1]} : vector<8x96xf32> to vector<8x32xf32>
    %388 = arith.addf %387, %12 : vector<8x32xf32>
    %389 = arith.mulf %384, %388 : vector<8x32xf32>
    %390 = arith.addf %386, %389 : vector<8x32xf32>
    %391 = math.tanh %390 : vector<8x32xf32>
    %cst_75 = arith.constant 1.000000e+00 : f32
    %392 = vector.broadcast %cst_75 : f32 to vector<8x32xf32>
    %393 = arith.subf %392, %385 : vector<8x32xf32>
    %394 = arith.mulf %393, %391 : vector<8x32xf32>
    %395 = arith.mulf %385, %349 : vector<8x32xf32>
    %396 = arith.addf %394, %395 : vector<8x32xf32>
    %c0_76 = arith.constant 0 : index
    %c0_77 = arith.constant 0 : index
    %397 = vector.load %arg10[%c0_76, %c0_77] : memref<32x8xf32, #tpu.memory_space<vmem>>, vector<32x8xf32>
    %cst_78 = arith.constant dense<0.000000e+00> : vector<8x8xf32>
    %398 = tpu.matmul %396, %397, %cst_78 {dimension_numbers = #tpu.dot_dimension_numbers<[1], [0], [0], [1], [0, 0, 1, 1], [], []>} : vector<8x32xf32>, vector<32x8xf32>, vector<8x8xf32> -> vector<8x8xf32>
    %c0_79 = arith.constant 0 : index
    %c0_80 = arith.constant 0 : index
    %399 = vector.load %arg11[%c0_79, %c0_80] : memref<1x8xf32, #tpu.memory_space<vmem>>, vector<1x8xf32>
    %400 = vector.broadcast %399 : vector<1x8xf32> to vector<8x8xf32>
    %401 = arith.addf %398, %400 : vector<8x8xf32>
    %c0_81 = arith.constant 0 : index
    %c0_82 = arith.constant 0 : index
    %402 = vector.load %arg12[%c0_81, %c0_82] : memref<8x8xf32, #tpu.memory_space<vmem>>, vector<8x8xf32>
    tpu.vector_store %arg12[%c0_81, %c0_82], %401 {strides = array<i32>} : memref<8x8xf32, #tpu.memory_space<vmem>>, vector<8x8xf32>,
    return
  }
  func.func @transform_0(%arg0: i32) -> (i32, i32, i32) {
    %c0_i32 = arith.constant 0 : i32
    %c0_i32_0 = arith.constant 0 : i32
    %c0_i32_1 = arith.constant 0 : i32
    return %arg0, %c0_i32, %c0_i32_0 : i32, i32, i32
  }
  func.func @transform_1(%arg0: i32) -> (i32, i32) {
    %c0_i32 = arith.constant 0 : i32
    %c0_i32_0 = arith.constant 0 : i32
    %c0_i32_1 = arith.constant 0 : i32
    return %c0_i32, %c0_i32_0 : i32, i32
  }
  func.func @transform_2(%arg0: i32) -> (i32, i32) {
    %c0_i32 = arith.constant 0 : i32
    %c0_i32_0 = arith.constant 0 : i32
    %c0_i32_1 = arith.constant 0 : i32
    return %c0_i32, %c0_i32_0 : i32, i32
  }
  func.func @transform_3(%arg0: i32) -> (i32, i32) {
    %c0_i32 = arith.constant 0 : i32
    %c0_i32_0 = arith.constant 0 : i32
    %c0_i32_1 = arith.constant 0 : i32
    return %c0_i32, %c0_i32_0 : i32, i32
  }
  func.func @transform_4(%arg0: i32) -> (i32, i32) {
    %c0_i32 = arith.constant 0 : i32
    %c0_i32_0 = arith.constant 0 : i32
    %c0_i32_1 = arith.constant 0 : i32
    return %c0_i32, %c0_i32_0 : i32, i32
  }
  func.func @transform_5(%arg0: i32) -> (i32, i32) {
    %c0_i32 = arith.constant 0 : i32
    %c0_i32_0 = arith.constant 0 : i32
    %c0_i32_1 = arith.constant 0 : i32
    return %c0_i32, %c0_i32_0 : i32, i32
  }
  func.func @transform_6(%arg0: i32) -> (i32, i32) {
    %c0_i32 = arith.constant 0 : i32
    %c0_i32_0 = arith.constant 0 : i32
    %c0_i32_1 = arith.constant 0 : i32
    return %c0_i32, %c0_i32_0 : i32, i32
  }
  func.func @transform_7(%arg0: i32) -> (i32, i32) {
    %c0_i32 = arith.constant 0 : i32
    %c0_i32_0 = arith.constant 0 : i32
    %c0_i32_1 = arith.constant 0 : i32
    return %c0_i32, %c0_i32_0 : i32, i32
  }
  func.func @transform_8(%arg0: i32) -> (i32, i32) {
    %c0_i32 = arith.constant 0 : i32
    %c0_i32_0 = arith.constant 0 : i32
    %c0_i32_1 = arith.constant 0 : i32
    return %c0_i32, %c0_i32_0 : i32, i32
  }
  func.func @transform_9(%arg0: i32) -> (i32, i32) {
    %c0_i32 = arith.constant 0 : i32
    %c0_i32_0 = arith.constant 0 : i32
    %c0_i32_1 = arith.constant 0 : i32
    return %c0_i32, %c0_i32_0 : i32, i32
  }
  func.func @transform_10(%arg0: i32) -> (i32, i32) {
    %c0_i32 = arith.constant 0 : i32
    %c0_i32_0 = arith.constant 0 : i32
    %c0_i32_1 = arith.constant 0 : i32
    return %c0_i32, %c0_i32_0 : i32, i32
  }
  func.func @transform_11(%arg0: i32) -> (i32, i32) {
    %c0_i32 = arith.constant 0 : i32
    %c0_i32_0 = arith.constant 0 : i32
    return %arg0, %c0_i32 : i32, i32
  }
}

</mosaic_0001>

<llo_original>
// kernel: tpu_custom_call.1
$region0: #{tpu_custom_call.1}
  #allocation0 [shape = 'u32[]', space=smem, size = 0x4, offset = 0x4, fixed_abs, tag = 'smem constant byte address 0x4 - core index']
  #allocation1 [shape = 'u32[144,128]{1,0:T(1,128)}', space=vmem, size = 0x12000, scoped, tag = 'internal scratch']
  %s0 = inlined_call_operand.vmem [shape: f32[1,64,16], index: 0, kind: input, shape index: {}]
  %s1 = inlined_call_operand.vmem [shape: f32[16,96], index: 1, kind: input, shape index: {}]
  %s2 = inlined_call_operand.vmem [shape: f32[32,96], index: 2, kind: input, shape index: {}]
  %s3 = inlined_call_operand.vmem [shape: f32[1,96], index: 3, kind: input, shape index: {}]
  %s4 = inlined_call_operand.vmem [shape: f32[1,32], index: 4, kind: input, shape index: {}]
  %s5 = inlined_call_operand.vmem [shape: f32[32,96], index: 5, kind: input, shape index: {}]
  %s6 = inlined_call_operand.vmem [shape: f32[32,96], index: 6, kind: input, shape index: {}]
  %s7 = inlined_call_operand.vmem [shape: f32[1,96], index: 7, kind: input, shape index: {}]
  %s8 = inlined_call_operand.vmem [shape: f32[1,32], index: 8, kind: input, shape index: {}]
  %s9 = inlined_call_operand.vmem [shape: f32[32,8], index: 9, kind: input, shape index: {}]
  %s10 = inlined_call_operand.vmem [shape: f32[1,8], index: 10, kind: input, shape index: {}]
  %s11 = inlined_call_operand.hbm [shape: f32[8,8], index: 11, kind: output, shape index: {}]
  %s12 = sld [smem:[#allocation0]]
  $region54: #{tpu_custom_call.1} parent=0
    _
  %s14 = ssub.s32 1, %s12
  %s15 = scalar_select 0, %s14, %s12
  $region1: #{tpu_custom_call.1} parent=0
    #allocation2 [shape = 'u8[4096]{0}', space=vmem, size = 0x1000, scoped, tag = 'output window, operand 0, single buffered']
    #allocation3 [shape = 's32[1]{0}', space=sflag, size = 0x4, scoped, tag = 'scoped memory for tpu_custom_call.1']
    %16 = vsyncpa [#allocation3], 0
    // Predicated region
    $region2: #{tpu_custom_call.1} parent=1 // pred_check
      _
    $region3: #{tpu_custom_call.1} parent=1 // pred_check_branch
      %18 = sbr.rel (0) target = $region5
    $region4: #{tpu_custom_call.1} parent=1 // pred_region
      _
    $region5: #{tpu_custom_call.1} parent=1 // pred_fallthru
      _
    // Predicated region
    $region6: #{tpu_custom_call.1} parent=1 // pred_check
      _
    $region7: #{tpu_custom_call.1} parent=1 // pred_check_branch
      %20 = sbr.rel (0) target = $region9
    $region8: #{tpu_custom_call.1} parent=1 // pred_region
      _
    $region9: #{tpu_custom_call.1} parent=1 // pred_fallthru
      _
    // Predicated region
    $region10: #{tpu_custom_call.1} parent=1 // pred_check
      _
    $region11: #{tpu_custom_call.1} parent=1 // pred_check_branch
      %22 = sbr.rel (0) target = $region13
    $region12: #{tpu_custom_call.1} parent=1 // pred_region
      _
    $region13: #{tpu_custom_call.1} parent=1 // pred_fallthru
      _
    // Predicated region
    $region14: #{tpu_custom_call.1} parent=1 // pred_check
      _
    $region15: #{tpu_custom_call.1} parent=1 // pred_check_branch
      %24 = sbr.rel (0) target = $region17
    $region16: #{tpu_custom_call.1} parent=1 // pred_region
      _
    $region17: #{tpu_custom_call.1} parent=1 // pred_fallthru
      _
    // Predicated region
    $region18: #{tpu_custom_call.1} parent=1 // pred_check
      _
    $region19: #{tpu_custom_call.1} parent=1 // pred_check_branch
      %26 = sbr.rel (0) target = $region21
    $region20: #{tpu_custom_call.1} parent=1 // pred_region
      _
    $region21: #{tpu_custom_call.1} parent=1 // pred_fallthru
      _
    // Predicated region
    $region22: #{tpu_custom_call.1} parent=1 // pred_check
      _
    $region23: #{tpu_custom_call.1} parent=1 // pred_check_branch
      %28 = sbr.rel (0) target = $region25
    $region24: #{tpu_custom_call.1} parent=1 // pred_region
      _
    $region25: #{tpu_custom_call.1} parent=1 // pred_fallthru
      _
    // Predicated region
    $region26: #{tpu_custom_call.1} parent=1 // pred_check
      _
    $region27: #{tpu_custom_call.1} parent=1 // pred_check_branch
      %30 = sbr.rel (0) target = $region29
    $region28: #{tpu_custom_call.1} parent=1 // pred_region
      _
    $region29: #{tpu_custom_call.1} parent=1 // pred_fallthru
      _
    // Predicated region
    $region30: #{tpu_custom_call.1} parent=1 // pred_check
      _
    $region31: #{tpu_custom_call.1} parent=1 // pred_check_branch
      %32 = sbr.rel (0) target = $region33
    $region32: #{tpu_custom_call.1} parent=1 // pred_region
      _
    $region33: #{tpu_custom_call.1} parent=1 // pred_fallthru
      _
    // Predicated region
    $region34: #{tpu_custom_call.1} parent=1 // pred_check
      _
    $region35: #{tpu_custom_call.1} parent=1 // pred_check_branch
      %34 = sbr.rel (0) target = $region37
    $region36: #{tpu_custom_call.1} parent=1 // pred_region
      _
    $region37: #{tpu_custom_call.1} parent=1 // pred_fallthru
      _
    // Predicated region
    $region38: #{tpu_custom_call.1} parent=1 // pred_check
      _
    $region39: #{tpu_custom_call.1} parent=1 // pred_check_branch
      %36 = sbr.rel (0) target = $region41
    $region40: #{tpu_custom_call.1} parent=1 // pred_region
      _
    $region41: #{tpu_custom_call.1} parent=1 // pred_fallthru
      _
    // Predicated region
    $region42: #{tpu_custom_call.1} parent=1 // pred_check
      _
    $region43: #{tpu_custom_call.1} parent=1 // pred_check_branch
      %38 = sbr.rel (0) target = $region45
    $region44: #{tpu_custom_call.1} parent=1 // pred_region
      _
    $region45: #{tpu_custom_call.1} parent=1 // pred_fallthru
      _
    %v39 = vld [vmem:[%s1] sm:$0xff]
    %v40 = vld [vmem:[%s1 + $0x8] sm:$0xff]
    %v41 = vld [vmem:[%s5] sm:$0xff]
    %v42 = vld [vmem:[%s5 + $0x8] sm:$0xff]
    %v43 = vld [vmem:[%s5 + $0x10] sm:$0xff]
    %v44 = vld [vmem:[%s5 + $0x18] sm:$0xff]
    %v45 = vld [vmem:[%s2] sm:$0xff]
    %v46 = vld [vmem:[%s2 + $0x8] sm:$0xff]
    %v47 = vld [vmem:[%s2 + $0x10] sm:$0xff]
    %v48 = vld [vmem:[%s2 + $0x18] sm:$0xff]
    %v49 = vld [vmem:[%s6] sm:$0xff]
    %v50 = vld [vmem:[%s6 + $0x8] sm:$0xff]
    %v51 = vld [vmem:[%s6 + $0x10] sm:$0xff]
    %v52 = vld [vmem:[%s6 + $0x18] sm:$0xff]
    %v53 = vld [vmem:[%s7] sm:$0x1]
    %v55 = vlaneseq
    %v56 = vshrl.u32 %v55, 7
    %v57 = vsub.s32 0, %v56
    %v58 = vrot.slane %v53, %v57
    %v60 = vld [vmem:[%s4] sm:$0x1]
    %v62 = vlaneseq
    %v63 = vshrl.u32 %v62, 7
    %v64 = vsub.s32 0, %v63
    %v65 = vrot.slane %v60, %v64
    %v66 = vld [vmem:[%s8] sm:$0x1]
    %v68 = vlaneseq
    %v69 = vshrl.u32 %v68, 7
    %v70 = vsub.s32 0, %v69
    %v71 = vrot.slane %v66, %v70
    %v72 = vld [vmem:[%s0] sm:$0xff]
    %v73 = vld [vmem:[%s0 + $0x8] sm:$0xff]
    %v74 = vld [vmem:[%s0 + $0x10] sm:$0xff]
    %v75 = vld [vmem:[%s0 + $0x18] sm:$0xff]
    %v76 = vld [vmem:[%s0 + $0x20] sm:$0xff]
    %v77 = vld [vmem:[%s0 + $0x28] sm:$0xff]
    %v78 = vld [vmem:[%s0 + $0x30] sm:$0xff]
    %v79 = vld [vmem:[%s0 + $0x38] sm:$0xff]
    %v80 = vld [vmem:[%s3] sm:$0x1]
    %v82 = vlaneseq
    %v83 = vshrl.u32 %v82, 7
    %v84 = vsub.s32 0, %v83
    %v85 = vrot.slane %v80, %v84
    %vm87 = vcmask 130048
    %v89 = vsel %vm87, %v72, 0
    %v92 = vsel %vm87, %v73, 0
    %v95 = vsel %vm87, %v74, 0
    %v98 = vsel %vm87, %v75, 0
    %v101 = vsel %vm87, %v76, 0
    %v104 = vsel %vm87, %v77, 0
    %v107 = vsel %vm87, %v78, 0
    %v110 = vsel %vm87, %v79, 0
    %112 = vmatprep.subr.mxu0 0.0
    %113 = vmatpush1.msra.mxu0 0.0
    %114 = vmatprep.subr.mxu0 0.0
    %115 = vmatpush1.msra.mxu0 0.0
    %116 = vmatprep.subr.mxu0 0.0
    %117 = vmatpush1.msra.mxu0 0.0
    %118 = vmatprep.subr.mxu0 0.0
    %119 = vmatpush1.msra.mxu0 0.0
    %120 = vmatprep.subr.mxu0 0.0
    %121 = vmatpush1.msra.mxu0 0.0
    %122 = vmatprep.subr.mxu0 0.0
    %123 = vmatpush1.msra.mxu0 0.0
    %124 = vmatprep.subr.mxu0 0.0
    %125 = vmatpush1.msra.mxu0 0.0
    %126 = vmatprep.subr.mxu0 0.0
    %127 = vmatpush1.msra.mxu0 0.0
    %128 = vmatprep.subr.mxu0 0.0
    %129 = vmatpush1.msra.mxu0 0.0
    %130 = vmatprep.subr.mxu0 0.0
    %131 = vmatpush1.msra.mxu0 0.0
    %132 = vmatprep.subr.mxu0 0.0
    %133 = vmatpush1.msra.mxu0 0.0
    %134 = vmatprep.subr.mxu0 0.0
    %135 = vmatpush1.msra.mxu0 0.0
    %136 = vmatprep.subr.mxu0 0.0
    %137 = vmatpush1.msra.mxu0 0.0
    %138 = vmatprep.subr.mxu0 0.0
    %139 = vmatpush1.msra.mxu0 0.0
    %140 = vmatprep.subr.mxu0 0.0
    %141 = vmatpush1.msra.mxu0 %v40
    %142 = vmatprep.subr.mxu0 0.0
    %143 = vmatpush1.msra.mxu0 %v39
    %144 = vmatprep.subr.mxu0 0.0
    %145 = vmatpush2.msra.mxu0 0.0
    %146 = vmatprep.subr.mxu0 0.0
    %147 = vmatpush2.msra.mxu0 0.0
    %148 = vmatprep.subr.mxu0 0.0
    %149 = vmatpush2.msra.mxu0 0.0
    %150 = vmatprep.subr.mxu0 0.0
    %151 = vmatpush2.msra.mxu0 0.0
    %152 = vmatprep.subr.mxu0 0.0
    %153 = vmatpush2.msra.mxu0 0.0
    %154 = vmatprep.subr.mxu0 0.0
    %155 = vmatpush2.msra.mxu0 0.0
    %156 = vmatprep.subr.mxu0 0.0
    %157 = vmatpush2.msra.mxu0 0.0
    %158 = vmatprep.subr.mxu0 0.0
    %159 = vmatpush2.msra.mxu0 0.0
    %160 = vmatprep.subr.mxu0 0.0
    %161 = vmatpush2.msra.mxu0 0.0
    %162 = vmatprep.subr.mxu0 0.0
    %163 = vmatpush2.msra.mxu0 0.0
    %164 = vmatprep.subr.mxu0 0.0
    %165 = vmatpush2.msra.mxu0 0.0
    %166 = vmatprep.subr.mxu0 0.0
    %167 = vmatpush2.msra.mxu0 0.0
    %168 = vmatprep.subr.mxu0 0.0
    %169 = vmatpush2.msra.mxu0 0.0
    %170 = vmatprep.subr.mxu0 0.0
    %171 = vmatpush2.msra.mxu0 0.0
    %172 = vmatprep.subr.mxu0 0.0
    %173 = vmatpush2.msra.mxu0 0.0
    %174 = vmatprep.subr.mxu0 0.0
    %175 = vmatpush2.msra.mxu0 0.0
    %176 = vmatprep.mubr.f32.mxu0 0.0
    %177 = vmatmul.mubr.f32.gmra.mxu0 %v89
    %v178 = vpop.f32.mrf.mxu0
    %v179 = vadd.f32 %v85, %v178
    %v180 = vpop.f32.mrf.mxu0
    %181 = vmatprep.mubr.f32.mxu0 0.0
    %182 = vmatmul.mubr.f32.gmra.mxu0 %v92
    %v183 = vpop.f32.mrf.mxu0
    %v184 = vadd.f32 %v85, %v183
    %v185 = vpop.f32.mrf.mxu0
    %186 = vmatprep.mubr.f32.mxu0 0.0
    %187 = vmatmul.mubr.f32.gmra.mxu0 %v95
    %v188 = vpop.f32.mrf.mxu0
    %v189 = vadd.f32 %v85, %v188
    %v190 = vpop.f32.mrf.mxu0
    %191 = vmatprep.mubr.f32.mxu0 0.0
    %192 = vmatmul.mubr.f32.gmra.mxu0 %v98
    %v193 = vpop.f32.mrf.mxu0
    %v194 = vadd.f32 %v85, %v193
    %v195 = vpop.f32.mrf.mxu0
    %196 = vmatprep.mubr.f32.mxu0 0.0
    %197 = vmatmul.mubr.f32.gmra.mxu0 %v101
    %v198 = vpop.f32.mrf.mxu0
    %v199 = vadd.f32 %v85, %v198
    %v200 = vpop.f32.mrf.mxu0
    %201 = vmatprep.mubr.f32.mxu0 0.0
    %202 = vmatmul.mubr.f32.gmra.mxu0 %v104
    %v203 = vpop.f32.mrf.mxu0
    %v204 = vadd.f32 %v85, %v203
    %v205 = vpop.f32.mrf.mxu0
    %206 = vmatprep.mubr.f32.mxu0 0.0
    %207 = vmatmul.mubr.f32.gmra.mxu0 %v107
    %v208 = vpop.f32.mrf.mxu0
    %v209 = vadd.f32 %v85, %v208
    %v210 = vpop.f32.mrf.mxu0
    %211 = vmatprep.mubr.f32.mxu0 0.0
    %212 = vmatmul.mubr.f32.gmra.mxu0 %v110
    %v213 = vpop.f32.mrf.mxu0
    %v214 = vadd.f32 %v85, %v213
    %v215 = vpop.f32.mrf.mxu0
    %216 = vdwg.mxu0
    %vm217 = vcmask 261120
    %v219 = vsel %vm217, 0.0, 0
    %221 = vmatprep.subr.mxu0 0.0
    %222 = vmatpush1.msra.mxu0 0.0
    %223 = vmatprep.subr.mxu0 0.0
    %224 = vmatpush1.msra.mxu0 0.0
    %225 = vmatprep.subr.mxu0 0.0
    %226 = vmatpush1.msra.mxu0 0.0
    %227 = vmatprep.subr.mxu0 0.0
    %228 = vmatpush1.msra.mxu0 0.0
    %229 = vmatprep.subr.mxu0 0.0
    %230 = vmatpush1.msra.mxu0 0.0
    %231 = vmatprep.subr.mxu0 0.0
    %232 = vmatpush1.msra.mxu0 0.0
    %233 = vmatprep.subr.mxu0 0.0
    %234 = vmatpush1.msra.mxu0 0.0
    %235 = vmatprep.subr.mxu0 0.0
    %236 = vmatpush1.msra.mxu0 0.0
    %237 = vmatprep.subr.mxu0 0.0
    %238 = vmatpush1.msra.mxu0 0.0
    %239 = vmatprep.subr.mxu0 0.0
    %240 = vmatpush1.msra.mxu0 0.0
    %241 = vmatprep.subr.mxu0 0.0
    %242 = vmatpush1.msra.mxu0 0.0
    %243 = vmatprep.subr.mxu0 0.0
    %244 = vmatpush1.msra.mxu0 0.0
    %245 = vmatprep.subr.mxu0 0.0
    %246 = vmatpush1.msra.mxu0 %v48
    %247 = vmatprep.subr.mxu0 0.0
    %248 = vmatpush1.msra.mxu0 %v47
    %249 = vmatprep.subr.mxu0 0.0
    %250 = vmatpush1.msra.mxu0 %v46
    %251 = vmatprep.subr.mxu0 0.0
    %252 = vmatpush1.msra.mxu0 %v45
    %253 = vmatprep.subr.mxu0 0.0
    %254 = vmatpush2.msra.mxu0 0.0
    %255 = vmatprep.subr.mxu0 0.0
    %256 = vmatpush2.msra.mxu0 0.0
    %257 = vmatprep.subr.mxu0 0.0
    %258 = vmatpush2.msra.mxu0 0.0
    %259 = vmatprep.subr.mxu0 0.0
    %260 = vmatpush2.msra.mxu0 0.0
    %261 = vmatprep.subr.mxu0 0.0
    %262 = vmatpush2.msra.mxu0 0.0
    %263 = vmatprep.subr.mxu0 0.0
    %264 = vmatpush2.msra.mxu0 0.0
    %265 = vmatprep.subr.mxu0 0.0
    %266 = vmatpush2.msra.mxu0 0.0
    %267 = vmatprep.subr.mxu0 0.0
    %268 = vmatpush2.msra.mxu0 0.0
    %269 = vmatprep.subr.mxu0 0.0
    %270 = vmatpush2.msra.mxu0 0.0
    %271 = vmatprep.subr.mxu0 0.0
    %272 = vmatpush2.msra.mxu0 0.0
    %273 = vmatprep.subr.mxu0 0.0
    %274 = vmatpush2.msra.mxu0 0.0
    %275 = vmatprep.subr.mxu0 0.0
    %276 = vmatpush2.msra.mxu0 0.0
    %277 = vmatprep.subr.mxu0 0.0
    %278 = vmatpush2.msra.mxu0 0.0
    %279 = vmatprep.subr.mxu0 0.0
    %280 = vmatpush2.msra.mxu0 0.0
    %281 = vmatprep.subr.mxu0 0.0
    %282 = vmatpush2.msra.mxu0 0.0
    %283 = vmatprep.subr.mxu0 0.0
    %284 = vmatpush2.msra.mxu0 0.0
    %285 = vmatprep.mubr.f32.mxu0 0.0
    %286 = vmatmul.mubr.f32.gmra.mxu0 %v219
    %v287 = vpop.f32.mrf.mxu0
    %v288 = vadd.f32 0.0, %v287
    %v289 = vpop.f32.mrf.mxu0
    %290 = vdwg.mxu0
    %v291 = vadd.f32 %v179, %v288
    %v292 = vxor.u32 %v291, 2147483648
    %v293 = vmul.f32 %v292, 1.442695
    %v294 = vpow.pop %v293
    %v295 = vadd.f32 %v294, 1.0
    %v296 = vrcp.pop %v295
    %v297 = vmul.f32 1.0, %v296
    %298 = vrot.lane.b32.xlu0 %v65, 64
    %v299 = vpop.permute.xlu0 %298
    %v301 = vadd.f32 %v288, %v299
    %303 = vrot.lane.b32.xlu0 %v301, 64
    %v304 = vpop.permute.xlu0 %303
    %v306 = vmul.f32 %v297, %v304
    %308 = vrot.lane.b32.xlu0 %v306, 64
    %v309 = vpop.permute.xlu0 %308
    %v311 = vadd.f32 %v179, %v309
    %v312 = vtanh.pop %v311
    %v313 = vsub.f32 1.0, %v297
    %315 = vrot.lane.b32.xlu0 %v312, 96
    %v316 = vpop.permute.xlu0 %315
    %v318 = vmul.f32 %v313, %v316
    %v319 = vmul.f32 %v297, 0.0
    %v320 = vadd.f32 %v318, %v319
    %322 = vrot.lane.b32.xlu0 %v320, 96
    %v323 = vpop.permute.xlu0 %322
    %v324 = vsel %vm217, %v323, 0
    %326 = vmatprep.subr.mxu0 0.0
    %327 = vmatpush1.msra.mxu0 0.0
    %328 = vmatprep.subr.mxu0 0.0
    %329 = vmatpush1.msra.mxu0 0.0
    %330 = vmatprep.subr.mxu0 0.0
    %331 = vmatpush1.msra.mxu0 0.0
    %332 = vmatprep.subr.mxu0 0.0
    %333 = vmatpush1.msra.mxu0 0.0
    %334 = vmatprep.subr.mxu0 0.0
    %335 = vmatpush1.msra.mxu0 0.0
    %336 = vmatprep.subr.mxu0 0.0
    %337 = vmatpush1.msra.mxu0 0.0
    %338 = vmatprep.subr.mxu0 0.0
    %339 = vmatpush1.msra.mxu0 0.0
    %340 = vmatprep.subr.mxu0 0.0
    %341 = vmatpush1.msra.mxu0 0.0
    %342 = vmatprep.subr.mxu0 0.0
    %343 = vmatpush1.msra.mxu0 0.0
    %344 = vmatprep.subr.mxu0 0.0
    %345 = vmatpush1.msra.mxu0 0.0
    %346 = vmatprep.subr.mxu0 0.0
    %347 = vmatpush1.msra.mxu0 0.0
    %348 = vmatprep.subr.mxu0 0.0
    %349 = vmatpush1.msra.mxu0 0.0
    %350 = vmatprep.subr.mxu0 0.0
    %351 = vmatpush1.msra.mxu0 %v44
    %352 = vmatprep.subr.mxu0 0.0
    %353 = vmatpush1.msra.mxu0 %v43
    %354 = vmatprep.subr.mxu0 0.0
    %355 = vmatpush1.msra.mxu0 %v42
    %356 = vmatprep.subr.mxu0 0.0
    %357 = vmatpush1.msra.mxu0 %v41
    %358 = vmatprep.subr.mxu0 0.0
    %359 = vmatpush2.msra.mxu0 0.0
    %360 = vmatprep.subr.mxu0 0.0
    %361 = vmatpush2.msra.mxu0 0.0
    %362 = vmatprep.subr.mxu0 0.0
    %363 = vmatpush2.msra.mxu0 0.0
    %364 = vmatprep.subr.mxu0 0.0
    %365 = vmatpush2.msra.mxu0 0.0
    %366 = vmatprep.subr.mxu0 0.0
    %367 = vmatpush2.msra.mxu0 0.0
    %368 = vmatprep.subr.mxu0 0.0
    %369 = vmatpush2.msra.mxu0 0.0
    %370 = vmatprep.subr.mxu0 0.0
    %371 = vmatpush2.msra.mxu0 0.0
    %372 = vmatprep.subr.mxu0 0.0
    %373 = vmatpush2.msra.mxu0 0.0
    %374 = vmatprep.subr.mxu0 0.0
    %375 = vmatpush2.msra.mxu0 0.0
    %376 = vmatprep.subr.mxu0 0.0
    %377 = vmatpush2.msra.mxu0 0.0
    %378 = vmatprep.subr.mxu0 0.0
    %379 = vmatpush2.msra.mxu0 0.0
    %380 = vmatprep.subr.mxu0 0.0
    %381 = vmatpush2.msra.mxu0 0.0
    %382 = vmatprep.subr.mxu0 0.0
    %383 = vmatpush2.msra.mxu0 0.0
    %384 = vmatprep.subr.mxu0 0.0
    %385 = vmatpush2.msra.mxu0 0.0
    %386 = vmatprep.subr.mxu0 0.0
    %387 = vmatpush2.msra.mxu0 0.0
    %388 = vmatprep.subr.mxu0 0.0
    %389 = vmatpush2.msra.mxu0 0.0
    %390 = vmatprep.mubr.f32.mxu0 0.0
    %391 = vmatmul.mubr.f32.gmra.mxu0 %v324
    %v392 = vpop.f32.mrf.mxu0
    %v393 = vadd.f32 %v58, %v392
    %v394 = vpop.f32.mrf.mxu0
    %395 = vdwg.mxu0
    %396 = vmatprep.subr.mxu0 0.0
    %397 = vmatpush1.msra.mxu0 0.0
    %398 = vmatprep.subr.mxu0 0.0
    %399 = vmatpush1.msra.mxu0 0.0
    %400 = vmatprep.subr.mxu0 0.0
    %401 = vmatpush1.msra.mxu0 0.0
    %402 = vmatprep.subr.mxu0 0.0
    %403 = vmatpush1.msra.mxu0 0.0
    %404 = vmatprep.subr.mxu0 0.0
    %405 = vmatpush1.msra.mxu0 0.0
    %406 = vmatprep.subr.mxu0 0.0
    %407 = vmatpush1.msra.mxu0 0.0
    %408 = vmatprep.subr.mxu0 0.0
    %409 = vmatpush1.msra.mxu0 0.0
    %410 = vmatprep.subr.mxu0 0.0
    %411 = vmatpush1.msra.mxu0 0.0
    %412 = vmatprep.subr.mxu0 0.0
    %413 = vmatpush1.msra.mxu0 0.0
    %414 = vmatprep.subr.mxu0 0.0
    %415 = vmatpush1.msra.mxu0 0.0
    %416 = vmatprep.subr.mxu0 0.0
    %417 = vmatpush1.msra.mxu0 0.0
    %418 = vmatprep.subr.mxu0 0.0
    %419 = vmatpush1.msra.mxu0 0.0
    %420 = vmatprep.subr.mxu0 0.0
    %421 = vmatpush1.msra.mxu0 %v52
    %422 = vmatprep.subr.mxu0 0.0
    %423 = vmatpush1.msra.mxu0 %v51
    %424 = vmatprep.subr.mxu0 0.0
    %425 = vmatpush1.msra.mxu0 %v50
    %426 = vmatprep.subr.mxu0 0.0
    %427 = vmatpush1.msra.mxu0 %v49
    %428 = vmatprep.subr.mxu0 0.0
    %429 = vmatpush2.msra.mxu0 0.0
    %430 = vmatprep.subr.mxu0 0.0
    %431 = vmatpush2.msra.mxu0 0.0
    %432 = vmatprep.subr.mxu0 0.0
    %433 = vmatpush2.msra.mxu0 0.0
    %434 = vmatprep.subr.mxu0 0.0
    %435 = vmatpush2.msra.mxu0 0.0
    %436 = vmatprep.subr.mxu0 0.0
    %437 = vmatpush2.msra.mxu0 0.0
    %438 = vmatprep.subr.mxu0 0.0
    %439 = vmatpush2.msra.mxu0 0.0
    %440 = vmatprep.subr.mxu0 0.0
    %441 = vmatpush2.msra.mxu0 0.0
    %442 = vmatprep.subr.mxu0 0.0
    %443 = vmatpush2.msra.mxu0 0.0
    %444 = vmatprep.subr.mxu0 0.0
    %445 = vmatpush2.msra.mxu0 0.0
    %446 = vmatprep.subr.mxu0 0.0
    %447 = vmatpush2.msra.mxu0 0.0
    %448 = vmatprep.subr.mxu0 0.0
    %449 = vmatpush2.msra.mxu0 0.0
    %450 = vmatprep.subr.mxu0 0.0
    %451 = vmatpush2.msra.mxu0 0.0
    %452 = vmatprep.subr.mxu0 0.0
    %453 = vmatpush2.msra.mxu0 0.0
    %454 = vmatprep.subr.mxu0 0.0
    %455 = vmatpush2.msra.mxu0 0.0
    %456 = vmatprep.subr.mxu0 0.0
    %457 = vmatpush2.msra.mxu0 0.0
    %458 = vmatprep.subr.mxu0 0.0
    %459 = vmatpush2.msra.mxu0 0.0
    %460 = vmatprep.mubr.f32.mxu0 0.0
    %461 = vmatmul.mubr.f32.gmra.mxu0 %v219
    %v462 = vpop.f32.mrf.mxu0
    %v463 = vadd.f32 0.0, %v462
    %v464 = vpop.f32.mrf.mxu0
    %465 = vdwg.mxu0
    %v466 = vadd.f32 %v393, %v463
    %v467 = vxor.u32 %v466, 2147483648
    %v468 = vmul.f32 %v467, 1.442695
    %v469 = vpow.pop %v468
    %v470 = vadd.f32 %v469, 1.0
    %v471 = vrcp.pop %v470
    %v472 = vmul.f32 1.0, %v471
    %473 = vrot.lane.b32.xlu0 %v71, 64
    %v474 = vpop.permute.xlu0 %473
    %v476 = vadd.f32 %v463, %v474
    %478 = vrot.lane.b32.xlu0 %v476, 64
    %v479 = vpop.permute.xlu0 %478
    %v481 = vmul.f32 %v472, %v479
    %483 = vrot.lane.b32.xlu0 %v481, 64
    %v484 = vpop.permute.xlu0 %483
    %v486 = vadd.f32 %v393, %v484
    %v487 = vtanh.pop %v486
    %v488 = vsub.f32 1.0, %v472
    %490 = vrot.lane.b32.xlu0 %v487, 96
    %v491 = vpop.permute.xlu0 %490
    %v493 = vmul.f32 %v488, %v491
    %v494 = vmul.f32 %v472, 0.0
    %v495 = vadd.f32 %v493, %v494
    %496 = vmatprep.subr.mxu0 0.0
    %497 = vmatpush1.msra.mxu0 0.0
    %498 = vmatprep.subr.mxu0 0.0
    %499 = vmatpush1.msra.mxu0 0.0
    %500 = vmatprep.subr.mxu0 0.0
    %501 = vmatpush1.msra.mxu0 0.0
    %502 = vmatprep.subr.mxu0 0.0
    %503 = vmatpush1.msra.mxu0 0.0
    %504 = vmatprep.subr.mxu0 0.0
    %505 = vmatpush1.msra.mxu0 0.0
    %506 = vmatprep.subr.mxu0 0.0
    %507 = vmatpush1.msra.mxu0 0.0
    %508 = vmatprep.subr.mxu0 0.0
    %509 = vmatpush1.msra.mxu0 0.0
    %510 = vmatprep.subr.mxu0 0.0
    %511 = vmatpush1.msra.mxu0 0.0
    %512 = vmatprep.subr.mxu0 0.0
    %513 = vmatpush1.msra.mxu0 0.0
    %514 = vmatprep.subr.mxu0 0.0
    %515 = vmatpush1.msra.mxu0 0.0
    %516 = vmatprep.subr.mxu0 0.0
    %517 = vmatpush1.msra.mxu0 0.0
    %518 = vmatprep.subr.mxu0 0.0
    %519 = vmatpush1.msra.mxu0 0.0
    %520 = vmatprep.subr.mxu0 0.0
    %521 = vmatpush1.msra.mxu0 %v48
    %522 = vmatprep.subr.mxu0 0.0
    %523 = vmatpush1.msra.mxu0 %v47
    %524 = vmatprep.subr.mxu0 0.0
    %525 = vmatpush1.msra.mxu0 %v46
    %526 = vmatprep.subr.mxu0 0.0
    %527 = vmatpush1.msra.mxu0 %v45
    %528 = vmatprep.subr.mxu0 0.0
    %529 = vmatpush2.msra.mxu0 0.0
    %530 = vmatprep.subr.mxu0 0.0
    %531 = vmatpush2.msra.mxu0 0.0
    %532 = vmatprep.subr.mxu0 0.0
    %533 = vmatpush2.msra.mxu0 0.0
    %534 = vmatprep.subr.mxu0 0.0
    %535 = vmatpush2.msra.mxu0 0.0
    %536 = vmatprep.subr.mxu0 0.0
    %537 = vmatpush2.msra.mxu0 0.0
    %538 = vmatprep.subr.mxu0 0.0
    %539 = vmatpush2.msra.mxu0 0.0
    %540 = vmatprep.subr.mxu0 0.0
    %541 = vmatpush2.msra.mxu0 0.0
    %542 = vmatprep.subr.mxu0 0.0
    %543 = vmatpush2.msra.mxu0 0.0
    %544 = vmatprep.subr.mxu0 0.0
    %545 = vmatpush2.msra.mxu0 0.0
    %546 = vmatprep.subr.mxu0 0.0
    %547 = vmatpush2.msra.mxu0 0.0
    %548 = vmatprep.subr.mxu0 0.0
    %549 = vmatpush2.msra.mxu0 0.0
    %550 = vmatprep.subr.mxu0 0.0
    %551 = vmatpush2.msra.mxu0 0.0
    %552 = vmatprep.subr.mxu0 0.0
    %553 = vmatpush2.msra.mxu0 0.0
    %554 = vmatprep.subr.mxu0 0.0
    %555 = vmatpush2.msra.mxu0 0.0
    %556 = vmatprep.subr.mxu0 0.0
    %557 = vmatpush2.msra.mxu0 0.0
    %558 = vmatprep.subr.mxu0 0.0
    %559 = vmatpush2.msra.mxu0 0.0
    %560 = vmatprep.mubr.f32.mxu0 0.0
    %561 = vmatmul.mubr.f32.gmra.mxu0 %v324
    %v562 = vpop.f32.mrf.mxu0
    %v563 = vadd.f32 0.0, %v562
    %v564 = vpop.f32.mrf.mxu0
    %565 = vdwg.mxu0
    %v566 = vadd.f32 %v184, %v563
    %v567 = vxor.u32 %v566, 2147483648
    %v568 = vmul.f32 %v567, 1.442695
    %v569 = vpow.pop %v568
    %v570 = vadd.f32 %v569, 1.0
    %v571 = vrcp.pop %v570
    %v572 = vmul.f32 1.0, %v571
    %v573 = vadd.f32 %v563, %v299
    %575 = vrot.lane.b32.xlu0 %v573, 64
    %v576 = vpop.permute.xlu0 %575
    %v578 = vmul.f32 %v572, %v576
    %580 = vrot.lane.b32.xlu0 %v578, 64
    %v581 = vpop.permute.xlu0 %580
    %v583 = vadd.f32 %v184, %v581
    %v584 = vtanh.pop %v583
    %v585 = vsub.f32 1.0, %v572
    %587 = vrot.lane.b32.xlu0 %v584, 96
    %v588 = vpop.permute.xlu0 %587
    %v590 = vmul.f32 %v585, %v588
    %v591 = vmul.f32 %v572, %v320
    %v592 = vadd.f32 %v590, %v591
    %594 = vrot.lane.b32.xlu0 %v592, 96
    %v595 = vpop.permute.xlu0 %594
    %v596 = vsel %vm217, %v595, 0
    %598 = vmatprep.subr.mxu0 0.0
    %599 = vmatpush1.msra.mxu0 0.0
    %600 = vmatprep.subr.mxu0 0.0
    %601 = vmatpush1.msra.mxu0 0.0
    %602 = vmatprep.subr.mxu0 0.0
    %603 = vmatpush1.msra.mxu0 0.0
    %604 = vmatprep.subr.mxu0 0.0
    %605 = vmatpush1.msra.mxu0 0.0
    %606 = vmatprep.subr.mxu0 0.0
    %607 = vmatpush1.msra.mxu0 0.0
    %608 = vmatprep.subr.mxu0 0.0
    %609 = vmatpush1.msra.mxu0 0.0
    %610 = vmatprep.subr.mxu0 0.0
    %611 = vmatpush1.msra.mxu0 0.0
    %612 = vmatprep.subr.mxu0 0.0
    %613 = vmatpush1.msra.mxu0 0.0
    %614 = vmatprep.subr.mxu0 0.0
    %615 = vmatpush1.msra.mxu0 0.0
    %616 = vmatprep.subr.mxu0 0.0
    %617 = vmatpush1.msra.mxu0 0.0
    %618 = vmatprep.subr.mxu0 0.0
    %619 = vmatpush1.msra.mxu0 0.0
    %620 = vmatprep.subr.mxu0 0.0
    %621 = vmatpush1.msra.mxu0 0.0
    %622 = vmatprep.subr.mxu0 0.0
    %623 = vmatpush1.msra.mxu0 %v44
    %624 = vmatprep.subr.mxu0 0.0
    %625 = vmatpush1.msra.mxu0 %v43
    %626 = vmatprep.subr.mxu0 0.0
    %627 = vmatpush1.msra.mxu0 %v42
    %628 = vmatprep.subr.mxu0 0.0
    %629 = vmatpush1.msra.mxu0 %v41
    %630 = vmatprep.subr.mxu0 0.0
    %631 = vmatpush2.msra.mxu0 0.0
    %632 = vmatprep.subr.mxu0 0.0
    %633 = vmatpush2.msra.mxu0 0.0
    %634 = vmatprep.subr.mxu0 0.0
    %635 = vmatpush2.msra.mxu0 0.0
    %636 = vmatprep.subr.mxu0 0.0
    %637 = vmatpush2.msra.mxu0 0.0
    %638 = vmatprep.subr.mxu0 0.0
    %639 = vmatpush2.msra.mxu0 0.0
    %640 = vmatprep.subr.mxu0 0.0
    %641 = vmatpush2.msra.mxu0 0.0
    %642 = vmatprep.subr.mxu0 0.0
    %643 = vmatpush2.msra.mxu0 0.0
    %644 = vmatprep.subr.mxu0 0.0
    %645 = vmatpush2.msra.mxu0 0.0
    %646 = vmatprep.subr.mxu0 0.0
    %647 = vmatpush2.msra.mxu0 0.0
    %648 = vmatprep.subr.mxu0 0.0
    %649 = vmatpush2.msra.mxu0 0.0
    %650 = vmatprep.subr.mxu0 0.0
    %651 = vmatpush2.msra.mxu0 0.0
    %652 = vmatprep.subr.mxu0 0.0
    %653 = vmatpush2.msra.mxu0 0.0
    %654 = vmatprep.subr.mxu0 0.0
    %655 = vmatpush2.msra.mxu0 0.0
    %656 = vmatprep.subr.mxu0 0.0
    %657 = vmatpush2.msra.mxu0 0.0
    %658 = vmatprep.subr.mxu0 0.0
    %659 = vmatpush2.msra.mxu0 0.0
    %660 = vmatprep.subr.mxu0 0.0
    %661 = vmatpush2.msra.mxu0 0.0
    %662 = vmatprep.mubr.f32.mxu0 0.0
    %663 = vmatmul.mubr.f32.gmra.mxu0 %v596
    %v664 = vpop.f32.mrf.mxu0
    %v665 = vadd.f32 %v58, %v664
    %v666 = vpop.f32.mrf.mxu0
    %667 = vdwg.mxu0
    %669 = vrot.lane.b32.xlu0 %v495, 96
    %v670 = vpop.permute.xlu0 %669
    %v671 = vsel %vm217, %v670, 0
    %673 = vmatprep.subr.mxu0 0.0
    %674 = vmatpush1.msra.mxu0 0.0
    %675 = vmatprep.subr.mxu0 0.0
    %676 = vmatpush1.msra.mxu0 0.0
    %677 = vmatprep.subr.mxu0 0.0
    %678 = vmatpush1.msra.mxu0 0.0
    %679 = vmatprep.subr.mxu0 0.0
    %680 = vmatpush1.msra.mxu0 0.0
    %681 = vmatprep.subr.mxu0 0.0
    %682 = vmatpush1.msra.mxu0 0.0
    %683 = vmatprep.subr.mxu0 0.0
    %684 = vmatpush1.msra.mxu0 0.0
    %685 = vmatprep.subr.mxu0 0.0
    %686 = vmatpush1.msra.mxu0 0.0
    %687 = vmatprep.subr.mxu0 0.0
    %688 = vmatpush1.msra.mxu0 0.0
    %689 = vmatprep.subr.mxu0 0.0
    %690 = vmatpush1.msra.mxu0 0.0
    %691 = vmatprep.subr.mxu0 0.0
    %692 = vmatpush1.msra.mxu0 0.0
    %693 = vmatprep.subr.mxu0 0.0
    %694 = vmatpush1.msra.mxu0 0.0
    %695 = vmatprep.subr.mxu0 0.0
    %696 = vmatpush1.msra.mxu0 0.0
    %697 = vmatprep.subr.mxu0 0.0
    %698 = vmatpush1.msra.mxu0 %v52
    %699 = vmatprep.subr.mxu0 0.0
    %700 = vmatpush1.msra.mxu0 %v51
    %701 = vmatprep.subr.mxu0 0.0
    %702 = vmatpush1.msra.mxu0 %v50
    %703 = vmatprep.subr.mxu0 0.0
    %704 = vmatpush1.msra.mxu0 %v49
    %705 = vmatprep.subr.mxu0 0.0
    %706 = vmatpush2.msra.mxu0 0.0
    %707 = vmatprep.subr.mxu0 0.0
    %708 = vmatpush2.msra.mxu0 0.0
    %709 = vmatprep.subr.mxu0 0.0
    %710 = vmatpush2.msra.mxu0 0.0
    %711 = vmatprep.subr.mxu0 0.0
    %712 = vmatpush2.msra.mxu0 0.0
    %713 = vmatprep.subr.mxu0 0.0
    %714 = vmatpush2.msra.mxu0 0.0
    %715 = vmatprep.subr.mxu0 0.0
    %716 = vmatpush2.msra.mxu0 0.0
    %717 = vmatprep.subr.mxu0 0.0
    %718 = vmatpush2.msra.mxu0 0.0
    %719 = vmatprep.subr.mxu0 0.0
    %720 = vmatpush2.msra.mxu0 0.0
    %721 = vmatprep.subr.mxu0 0.0
    %722 = vmatpush2.msra.mxu0 0.0
    %723 = vmatprep.subr.mxu0 0.0
    %724 = vmatpush2.msra.mxu0 0.0
    %725 = vmatprep.subr.mxu0 0.0
    %726 = vmatpush2.msra.mxu0 0.0
    %727 = vmatprep.subr.mxu0 0.0
    %728 = vmatpush2.msra.mxu0 0.0
    %729 = vmatprep.subr.mxu0 0.0
    %730 = vmatpush2.msra.mxu0 0.0
    %731 = vmatprep.subr.mxu0 0.0
    %732 = vmatpush2.msra.mxu0 0.0
    %733 = vmatprep.subr.mxu0 0.0
    %734 = vmatpush2.msra.mxu0 0.0
    %735 = vmatprep.subr.mxu0 0.0
    %736 = vmatpush2.msra.mxu0 0.0
    %737 = vmatprep.mubr.f32.mxu0 0.0
    %738 = vmatmul.mubr.f32.gmra.mxu0 %v671
    %v739 = vpop.f32.mrf.mxu0
    %v740 = vadd.f32 0.0, %v739
    %v741 = vpop.f32.mrf.mxu0
    %742 = vdwg.mxu0
    %v743 = vadd.f32 %v665, %v740
    %v744 = vxor.u32 %v743, 2147483648
    %v745 = vmul.f32 %v744, 1.442695
    %v746 = vpow.pop %v745
    %v747 = vadd.f32 %v746, 1.0
    %v748 = vrcp.pop %v747
    %v749 = vmul.f32 1.0, %v748
    %v750 = vadd.f32 %v740, %v474
    %752 = vrot.lane.b32.xlu0 %v750, 64
    %v753 = vpop.permute.xlu0 %752
    %v755 = vmul.f32 %v749, %v753
    %757 = vrot.lane.b32.xlu0 %v755, 64
    %v758 = vpop.permute.xlu0 %757
    %v760 = vadd.f32 %v665, %v758
    %v761 = vtanh.pop %v760
    %v762 = vsub.f32 1.0, %v749
    %764 = vrot.lane.b32.xlu0 %v761, 96
    %v765 = vpop.permute.xlu0 %764
    %v767 = vmul.f32 %v762, %v765
    %v768 = vmul.f32 %v749, %v495
    %v769 = vadd.f32 %v767, %v768
    %770 = vmatprep.subr.mxu0 0.0
    %771 = vmatpush1.msra.mxu0 0.0
    %772 = vmatprep.subr.mxu0 0.0
    %773 = vmatpush1.msra.mxu0 0.0
    %774 = vmatprep.subr.mxu0 0.0
    %775 = vmatpush1.msra.mxu0 0.0
    %776 = vmatprep.subr.mxu0 0.0
    %777 = vmatpush1.msra.mxu0 0.0
    %778 = vmatprep.subr.mxu0 0.0
    %779 = vmatpush1.msra.mxu0 0.0
    %780 = vmatprep.subr.mxu0 0.0
    %781 = vmatpush1.msra.mxu0 0.0
    %782 = vmatprep.subr.mxu0 0.0
    %783 = vmatpush1.msra.mxu0 0.0
    %784 = vmatprep.subr.mxu0 0.0
    %785 = vmatpush1.msra.mxu0 0.0
    %786 = vmatprep.subr.mxu0 0.0
    %787 = vmatpush1.msra.mxu0 0.0
    %788 = vmatprep.subr.mxu0 0.0
    %789 = vmatpush1.msra.mxu0 0.0
    %790 = vmatprep.subr.mxu0 0.0
    %791 = vmatpush1.msra.mxu0 0.0
    %792 = vmatprep.subr.mxu0 0.0
    %793 = vmatpush1.msra.mxu0 0.0
    %794 = vmatprep.subr.mxu0 0.0
    %795 = vmatpush1.msra.mxu0 %v48
    %796 = vmatprep.subr.mxu0 0.0
    %797 = vmatpush1.msra.mxu0 %v47
    %798 = vmatprep.subr.mxu0 0.0
    %799 = vmatpush1.msra.mxu0 %v46
    %800 = vmatprep.subr.mxu0 0.0
    %801 = vmatpush1.msra.mxu0 %v45
    %802 = vmatprep.subr.mxu0 0.0
    %803 = vmatpush2.msra.mxu0 0.0
    %804 = vmatprep.subr.mxu0 0.0
    %805 = vmatpush2.msra.mxu0 0.0
    %806 = vmatprep.subr.mxu0 0.0
    %807 = vmatpush2.msra.mxu0 0.0
    %808 = vmatprep.subr.mxu0 0.0
    %809 = vmatpush2.msra.mxu0 0.0
    %810 = vmatprep.subr.mxu0 0.0
    %811 = vmatpush2.msra.mxu0 0.0
    %812 = vmatprep.subr.mxu0 0.0
    %813 = vmatpush2.msra.mxu0 0.0
    %814 = vmatprep.subr.mxu0 0.0
    %815 = vmatpush2.msra.mxu0 0.0
    %816 = vmatprep.subr.mxu0 0.0
    %817 = vmatpush2.msra.mxu0 0.0
    %818 = vmatprep.subr.mxu0 0.0
    %819 = vmatpush2.msra.mxu0 0.0
    %820 = vmatprep.subr.mxu0 0.0
    %821 = vmatpush2.msra.mxu0 0.0
    %822 = vmatprep.subr.mxu0 0.0
    %823 = vmatpush2.msra.mxu0 0.0
    %824 = vmatprep.subr.mxu0 0.0
    %825 = vmatpush2.msra.mxu0 0.0
    %826 = vmatprep.subr.mxu0 0.0
    %827 = vmatpush2.msra.mxu0 0.0
    %828 = vmatprep.subr.mxu0 0.0
    %829 = vmatpush2.msra.mxu0 0.0
    %830 = vmatprep.subr.mxu0 0.0
    %831 = vmatpush2.msra.mxu0 0.0
    %832 = vmatprep.subr.mxu0 0.0
    %833 = vmatpush2.msra.mxu0 0.0
    %834 = vmatprep.mubr.f32.mxu0 0.0
    %835 = vmatmul.mubr.f32.gmra.mxu0 %v596
    %v836 = vpop.f32.mrf.mxu0
    %v837 = vadd.f32 0.0, %v836
    %v838 = vpop.f32.mrf.mxu0
    %839 = vdwg.mxu0
    %v840 = vadd.f32 %v189, %v837
    %v841 = vxor.u32 %v840, 2147483648
    %v842 = vmul.f32 %v841, 1.442695
    %v843 = vpow.pop %v842
    %v844 = vadd.f32 %v843, 1.0
    %v845 = vrcp.pop %v844
    %v846 = vmul.f32 1.0, %v845
    %v847 = vadd.f32 %v837, %v299
    %849 = vrot.lane.b32.xlu0 %v847, 64
    %v850 = vpop.permute.xlu0 %849
    %v852 = vmul.f32 %v846, %v850
    %854 = vrot.lane.b32.xlu0 %v852, 64
    %v855 = vpop.permute.xlu0 %854
    %v857 = vadd.f32 %v189, %v855
    %v858 = vtanh.pop %v857
    %v859 = vsub.f32 1.0, %v846
    %861 = vrot.lane.b32.xlu0 %v858, 96
    %v862 = vpop.permute.xlu0 %861
    %v864 = vmul.f32 %v859, %v862
    %v865 = vmul.f32 %v846, %v592
    %v866 = vadd.f32 %v864, %v865
    %868 = vrot.lane.b32.xlu0 %v866, 96
    %v869 = vpop.permute.xlu0 %868
    %v870 = vsel %vm217, %v869, 0
    %872 = vmatprep.subr.mxu0 0.0
    %873 = vmatpush1.msra.mxu0 0.0
    %874 = vmatprep.subr.mxu0 0.0
    %875 = vmatpush1.msra.mxu0 0.0
    %876 = vmatprep.subr.mxu0 0.0
    %877 = vmatpush1.msra.mxu0 0.0
    %878 = vmatprep.subr.mxu0 0.0
    %879 = vmatpush1.msra.mxu0 0.0
    %880 = vmatprep.subr.mxu0 0.0
    %881 = vmatpush1.msra.mxu0 0.0
    %882 = vmatprep.subr.mxu0 0.0
    %883 = vmatpush1.msra.mxu0 0.0
    %884 = vmatprep.subr.mxu0 0.0
    %885 = vmatpush1.msra.mxu0 0.0
    %886 = vmatprep.subr.mxu0 0.0
    %887 = vmatpush1.msra.mxu0 0.0
    %888 = vmatprep.subr.mxu0 0.0
    %889 = vmatpush1.msra.mxu0 0.0
    %890 = vmatprep.subr.mxu0 0.0
    %891 = vmatpush1.msra.mxu0 0.0
    %892 = vmatprep.subr.mxu0 0.0
    %893 = vmatpush1.msra.mxu0 0.0
    %894 = vmatprep.subr.mxu0 0.0
    %895 = vmatpush1.msra.mxu0 0.0
    %896 = vmatprep.subr.mxu0 0.0
    %897 = vmatpush1.msra.mxu0 %v44
    %898 = vmatprep.subr.mxu0 0.0
    %899 = vmatpush1.msra.mxu0 %v43
    %900 = vmatprep.subr.mxu0 0.0
    %901 = vmatpush1.msra.mxu0 %v42
    %902 = vmatprep.subr.mxu0 0.0
    %903 = vmatpush1.msra.mxu0 %v41
    %904 = vmatprep.subr.mxu0 0.0
    %905 = vmatpush2.msra.mxu0 0.0
    %906 = vmatprep.subr.mxu0 0.0
    %907 = vmatpush2.msra.mxu0 0.0
    %908 = vmatprep.subr.mxu0 0.0
    %909 = vmatpush2.msra.mxu0 0.0
    %910 = vmatprep.subr.mxu0 0.0
    %911 = vmatpush2.msra.mxu0 0.0
    %912 = vmatprep.subr.mxu0 0.0
    %913 = vmatpush2.msra.mxu0 0.0
    %914 = vmatprep.subr.mxu0 0.0
    %915 = vmatpush2.msra.mxu0 0.0
    %916 = vmatprep.subr.mxu0 0.0
    %917 = vmatpush2.msra.mxu0 0.0
    %918 = vmatprep.subr.mxu0 0.0
    %919 = vmatpush2.msra.mxu0 0.0
    %920 = vmatprep.subr.mxu0 0.0
    %921 = vmatpush2.msra.mxu0 0.0
    %922 = vmatprep.subr.mxu0 0.0
    %923 = vmatpush2.msra.mxu0 0.0
    %924 = vmatprep.subr.mxu0 0.0
    %925 = vmatpush2.msra.mxu0 0.0
    %926 = vmatprep.subr.mxu0 0.0
    %927 = vmatpush2.msra.mxu0 0.0
    %928 = vmatprep.subr.mxu0 0.0
    %929 = vmatpush2.msra.mxu0 0.0
    %930 = vmatprep.subr.mxu0 0.0
    %931 = vmatpush2.msra.mxu0 0.0
    %932 = vmatprep.subr.mxu0 0.0
    %933 = vmatpush2.msra.mxu0 0.0
    %934 = vmatprep.subr.mxu0 0.0
    %935 = vmatpush2.msra.mxu0 0.0
    %936 = vmatprep.mubr.f32.mxu0 0.0
    %937 = vmatmul.mubr.f32.gmra.mxu0 %v870
    %v938 = vpop.f32.mrf.mxu0
    %v939 = vadd.f32 %v58, %v938
    %v940 = vpop.f32.mrf.mxu0
    %941 = vdwg.mxu0
    %943 = vrot.lane.b32.xlu0 %v769, 96
    %v944 = vpop.permute.xlu0 %943
    %v945 = vsel %vm217, %v944, 0
    %947 = vmatprep.subr.mxu0 0.0
    %948 = vmatpush1.msra.mxu0 0.0
    %949 = vmatprep.subr.mxu0 0.0
    %950 = vmatpush1.msra.mxu0 0.0
    %951 = vmatprep.subr.mxu0 0.0
    %952 = vmatpush1.msra.mxu0 0.0
    %953 = vmatprep.subr.mxu0 0.0
    %954 = vmatpush1.msra.mxu0 0.0
    %955 = vmatprep.subr.mxu0 0.0
    %956 = vmatpush1.msra.mxu0 0.0
    %957 = vmatprep.subr.mxu0 0.0
    %958 = vmatpush1.msra.mxu0 0.0
    %959 = vmatprep.subr.mxu0 0.0
    %960 = vmatpush1.msra.mxu0 0.0
    %961 = vmatprep.subr.mxu0 0.0
    %962 = vmatpush1.msra.mxu0 0.0
    %963 = vmatprep.subr.mxu0 0.0
    %964 = vmatpush1.msra.mxu0 0.0
    %965 = vmatprep.subr.mxu0 0.0
    %966 = vmatpush1.msra.mxu0 0.0
    %967 = vmatprep.subr.mxu0 0.0
    %968 = vmatpush1.msra.mxu0 0.0
    %969 = vmatprep.subr.mxu0 0.0
    %970 = vmatpush1.msra.mxu0 0.0
    %971 = vmatprep.subr.mxu0 0.0
    %972 = vmatpush1.msra.mxu0 %v52
    %973 = vmatprep.subr.mxu0 0.0
    %974 = vmatpush1.msra.mxu0 %v51
    %975 = vmatprep.subr.mxu0 0.0
    %976 = vmatpush1.msra.mxu0 %v50
    %977 = vmatprep.subr.mxu0 0.0
    %978 = vmatpush1.msra.mxu0 %v49
    %979 = vmatprep.subr.mxu0 0.0
    %980 = vmatpush2.msra.mxu0 0.0
    %981 = vmatprep.subr.mxu0 0.0
    %982 = vmatpush2.msra.mxu0 0.0
    %983 = vmatprep.subr.mxu0 0.0
    %984 = vmatpush2.msra.mxu0 0.0
    %985 = vmatprep.subr.mxu0 0.0
    %986 = vmatpush2.msra.mxu0 0.0
    %987 = vmatprep.subr.mxu0 0.0
    %988 = vmatpush2.msra.mxu0 0.0
    %989 = vmatprep.subr.mxu0 0.0
    %990 = vmatpush2.msra.mxu0 0.0
    %991 = vmatprep.subr.mxu0 0.0
    %992 = vmatpush2.msra.mxu0 0.0
    %993 = vmatprep.subr.mxu0 0.0
    %994 = vmatpush2.msra.mxu0 0.0
    %995 = vmatprep.subr.mxu0 0.0
    %996 = vmatpush2.msra.mxu0 0.0
    %997 = vmatprep.subr.mxu0 0.0
    %998 = vmatpush2.msra.mxu0 0.0
    %999 = vmatprep.subr.mxu0 0.0
    %1000 = vmatpush2.msra.mxu0 0.0
    %1001 = vmatprep.subr.mxu0 0.0
    %1002 = vmatpush2.msra.mxu0 0.0
    %1003 = vmatprep.subr.mxu0 0.0
    %1004 = vmatpush2.msra.mxu0 0.0
    %1005 = vmatprep.subr.mxu0 0.0
    %1006 = vmatpush2.msra.mxu0 0.0
    %1007 = vmatprep.subr.mxu0 0.0
    %1008 = vmatpush2.msra.mxu0 0.0
    %1009 = vmatprep.subr.mxu0 0.0
    %1010 = vmatpush2.msra.mxu0 0.0
    %1011 = vmatprep.mubr.f32.mxu0 0.0
    %1012 = vmatmul.mubr.f32.gmra.mxu0 %v945
    %v1013 = vpop.f32.mrf.mxu0
    %v1014 = vadd.f32 0.0, %v1013
    %v1015 = vpop.f32.mrf.mxu0
    %1016 = vdwg.mxu0
    %v1017 = vadd.f32 %v939, %v1014
    %v1018 = vxor.u32 %v1017, 2147483648
    %v1019 = vmul.f32 %v1018, 1.442695
    %v1020 = vpow.pop %v1019
    %v1021 = vadd.f32 %v1020, 1.0
    %v1022 = vrcp.pop %v1021
    %v1023 = vmul.f32 1.0, %v1022
    %v1024 = vadd.f32 %v1014, %v474
    %1026 = vrot.lane.b32.xlu0 %v1024, 64
    %v1027 = vpop.permute.xlu0 %1026
    %v1029 = vmul.f32 %v1023, %v1027
    %1031 = vrot.lane.b32.xlu0 %v1029, 64
    %v1032 = vpop.permute.xlu0 %1031
    %v1034 = vadd.f32 %v939, %v1032
    %v1035 = vtanh.pop %v1034
    %v1036 = vsub.f32 1.0, %v1023
    %1038 = vrot.lane.b32.xlu0 %v1035, 96
    %v1039 = vpop.permute.xlu0 %1038
    %v1041 = vmul.f32 %v1036, %v1039
    %v1042 = vmul.f32 %v1023, %v769
    %v1043 = vadd.f32 %v1041, %v1042
    %1044 = vmatprep.subr.mxu0 0.0
    %1045 = vmatpush1.msra.mxu0 0.0
    %1046 = vmatprep.subr.mxu0 0.0
    %1047 = vmatpush1.msra.mxu0 0.0
    %1048 = vmatprep.subr.mxu0 0.0
    %1049 = vmatpush1.msra.mxu0 0.0
    %1050 = vmatprep.subr.mxu0 0.0
    %1051 = vmatpush1.msra.mxu0 0.0
    %1052 = vmatprep.subr.mxu0 0.0
    %1053 = vmatpush1.msra.mxu0 0.0
    %1054 = vmatprep.subr.mxu0 0.0
    %1055 = vmatpush1.msra.mxu0 0.0
    %1056 = vmatprep.subr.mxu0 0.0
    %1057 = vmatpush1.msra.mxu0 0.0
    %1058 = vmatprep.subr.mxu0 0.0
    %1059 = vmatpush1.msra.mxu0 0.0
    %1060 = vmatprep.subr.mxu0 0.0
    %1061 = vmatpush1.msra.mxu0 0.0
    %1062 = vmatprep.subr.mxu0 0.0
    %1063 = vmatpush1.msra.mxu0 0.0
    %1064 = vmatprep.subr.mxu0 0.0
    %1065 = vmatpush1.msra.mxu0 0.0
    %1066 = vmatprep.subr.mxu0 0.0
    %1067 = vmatpush1.msra.mxu0 0.0
    %1068 = vmatprep.subr.mxu0 0.0
    %1069 = vmatpush1.msra.mxu0 %v48
    %1070 = vmatprep.subr.mxu0 0.0
    %1071 = vmatpush1.msra.mxu0 %v47
    %1072 = vmatprep.subr.mxu0 0.0
    %1073 = vmatpush1.msra.mxu0 %v46
    %1074 = vmatprep.subr.mxu0 0.0
    %1075 = vmatpush1.msra.mxu0 %v45
    %1076 = vmatprep.subr.mxu0 0.0
    %1077 = vmatpush2.msra.mxu0 0.0
    %1078 = vmatprep.subr.mxu0 0.0
    %1079 = vmatpush2.msra.mxu0 0.0
    %1080 = vmatprep.subr.mxu0 0.0
    %1081 = vmatpush2.msra.mxu0 0.0
    %1082 = vmatprep.subr.mxu0 0.0
    %1083 = vmatpush2.msra.mxu0 0.0
    %1084 = vmatprep.subr.mxu0 0.0
    %1085 = vmatpush2.msra.mxu0 0.0
    %1086 = vmatprep.subr.mxu0 0.0
    %1087 = vmatpush2.msra.mxu0 0.0
    %1088 = vmatprep.subr.mxu0 0.0
    %1089 = vmatpush2.msra.mxu0 0.0
    %1090 = vmatprep.subr.mxu0 0.0
    %1091 = vmatpush2.msra.mxu0 0.0
    %1092 = vmatprep.subr.mxu0 0.0
    %1093 = vmatpush2.msra.mxu0 0.0
    %1094 = vmatprep.subr.mxu0 0.0
    %1095 = vmatpush2.msra.mxu0 0.0
    %1096 = vmatprep.subr.mxu0 0.0
    %1097 = vmatpush2.msra.mxu0 0.0
    %1098 = vmatprep.subr.mxu0 0.0
    %1099 = vmatpush2.msra.mxu0 0.0
    %1100 = vmatprep.subr.mxu0 0.0
    %1101 = vmatpush2.msra.mxu0 0.0
    %1102 = vmatprep.subr.mxu0 0.0
    %1103 = vmatpush2.msra.mxu0 0.0
    %1104 = vmatprep.subr.mxu0 0.0
    %1105 = vmatpush2.msra.mxu0 0.0
    %1106 = vmatprep.subr.mxu0 0.0
    %1107 = vmatpush2.msra.mxu0 0.0
    %1108 = vmatprep.mubr.f32.mxu0 0.0
    %1109 = vmatmul.mubr.f32.gmra.mxu0 %v870
    %v1110 = vpop.f32.mrf.mxu0
    %v1111 = vadd.f32 0.0, %v1110
    %v1112 = vpop.f32.mrf.mxu0
    %1113 = vdwg.mxu0
    %v1114 = vadd.f32 %v194, %v1111
    %v1115 = vxor.u32 %v1114, 2147483648
    %v1116 = vmul.f32 %v1115, 1.442695
    %v1117 = vpow.pop %v1116
    %v1118 = vadd.f32 %v1117, 1.0
    %v1119 = vrcp.pop %v1118
    %v1120 = vmul.f32 1.0, %v1119
    %v1121 = vadd.f32 %v1111, %v299
    %1123 = vrot.lane.b32.xlu0 %v1121, 64
    %v1124 = vpop.permute.xlu0 %1123
    %v1126 = vmul.f32 %v1120, %v1124
    %1128 = vrot.lane.b32.xlu0 %v1126, 64
    %v1129 = vpop.permute.xlu0 %1128
    %v1131 = vadd.f32 %v194, %v1129
    %v1132 = vtanh.pop %v1131
    %v1133 = vsub.f32 1.0, %v1120
    %1135 = vrot.lane.b32.xlu0 %v1132, 96
    %v1136 = vpop.permute.xlu0 %1135
    %v1138 = vmul.f32 %v1133, %v1136
    %v1139 = vmul.f32 %v1120, %v866
    %v1140 = vadd.f32 %v1138, %v1139
    %1142 = vrot.lane.b32.xlu0 %v1140, 96
    %v1143 = vpop.permute.xlu0 %1142
    %v1144 = vsel %vm217, %v1143, 0
    %1146 = vmatprep.subr.mxu0 0.0
    %1147 = vmatpush1.msra.mxu0 0.0
    %1148 = vmatprep.subr.mxu0 0.0
    %1149 = vmatpush1.msra.mxu0 0.0
    %1150 = vmatprep.subr.mxu0 0.0
    %1151 = vmatpush1.msra.mxu0 0.0
    %1152 = vmatprep.subr.mxu0 0.0
    %1153 = vmatpush1.msra.mxu0 0.0
    %1154 = vmatprep.subr.mxu0 0.0
    %1155 = vmatpush1.msra.mxu0 0.0
    %1156 = vmatprep.subr.mxu0 0.0
    %1157 = vmatpush1.msra.mxu0 0.0
    %1158 = vmatprep.subr.mxu0 0.0
    %1159 = vmatpush1.msra.mxu0 0.0
    %1160 = vmatprep.subr.mxu0 0.0
    %1161 = vmatpush1.msra.mxu0 0.0
    %1162 = vmatprep.subr.mxu0 0.0
    %1163 = vmatpush1.msra.mxu0 0.0
    %1164 = vmatprep.subr.mxu0 0.0
    %1165 = vmatpush1.msra.mxu0 0.0
    %1166 = vmatprep.subr.mxu0 0.0
    %1167 = vmatpush1.msra.mxu0 0.0
    %1168 = vmatprep.subr.mxu0 0.0
    %1169 = vmatpush1.msra.mxu0 0.0
    %1170 = vmatprep.subr.mxu0 0.0
    %1171 = vmatpush1.msra.mxu0 %v44
    %1172 = vmatprep.subr.mxu0 0.0
    %1173 = vmatpush1.msra.mxu0 %v43
    %1174 = vmatprep.subr.mxu0 0.0
    %1175 = vmatpush1.msra.mxu0 %v42
    %1176 = vmatprep.subr.mxu0 0.0
    %1177 = vmatpush1.msra.mxu0 %v41
    %1178 = vmatprep.subr.mxu0 0.0
    %1179 = vmatpush2.msra.mxu0 0.0
    %1180 = vmatprep.subr.mxu0 0.0
    %1181 = vmatpush2.msra.mxu0 0.0
    %1182 = vmatprep.subr.mxu0 0.0
    %1183 = vmatpush2.msra.mxu0 0.0
    %1184 = vmatprep.subr.mxu0 0.0
    %1185 = vmatpush2.msra.mxu0 0.0
    %1186 = vmatprep.subr.mxu0 0.0
    %1187 = vmatpush2.msra.mxu0 0.0
    %1188 = vmatprep.subr.mxu0 0.0
    %1189 = vmatpush2.msra.mxu0 0.0
    %1190 = vmatprep.subr.mxu0 0.0
    %1191 = vmatpush2.msra.mxu0 0.0
    %1192 = vmatprep.subr.mxu0 0.0
    %1193 = vmatpush2.msra.mxu0 0.0
    %1194 = vmatprep.subr.mxu0 0.0
    %1195 = vmatpush2.msra.mxu0 0.0
    %1196 = vmatprep.subr.mxu0 0.0
    %1197 = vmatpush2.msra.mxu0 0.0
    %1198 = vmatprep.subr.mxu0 0.0
    %1199 = vmatpush2.msra.mxu0 0.0
    %1200 = vmatprep.subr.mxu0 0.0
    %1201 = vmatpush2.msra.mxu0 0.0
    %1202 = vmatprep.subr.mxu0 0.0
    %1203 = vmatpush2.msra.mxu0 0.0
    %1204 = vmatprep.subr.mxu0 0.0
    %1205 = vmatpush2.msra.mxu0 0.0
    %1206 = vmatprep.subr.mxu0 0.0
    %1207 = vmatpush2.msra.mxu0 0.0
    %1208 = vmatprep.subr.mxu0 0.0
    %1209 = vmatpush2.msra.mxu0 0.0
    %1210 = vmatprep.mubr.f32.mxu0 0.0
    %1211 = vmatmul.mubr.f32.gmra.mxu0 %v1144
    %v1212 = vpop.f32.mrf.mxu0
    %v1213 = vadd.f32 %v58, %v1212
    %v1214 = vpop.f32.mrf.mxu0
    %1215 = vdwg.mxu0
    %1217 = vrot.lane.b32.xlu0 %v1043, 96
    %v1218 = vpop.permute.xlu0 %1217
    %v1219 = vsel %vm217, %v1218, 0
    %1221 = vmatprep.subr.mxu0 0.0
    %1222 = vmatpush1.msra.mxu0 0.0
    %1223 = vmatprep.subr.mxu0 0.0
    %1224 = vmatpush1.msra.mxu0 0.0
    %1225 = vmatprep.subr.mxu0 0.0
    %1226 = vmatpush1.msra.mxu0 0.0
    %1227 = vmatprep.subr.mxu0 0.0
    %1228 = vmatpush1.msra.mxu0 0.0
    %1229 = vmatprep.subr.mxu0 0.0
    %1230 = vmatpush1.msra.mxu0 0.0
    %1231 = vmatprep.subr.mxu0 0.0
    %1232 = vmatpush1.msra.mxu0 0.0
    %1233 = vmatprep.subr.mxu0 0.0
    %1234 = vmatpush1.msra.mxu0 0.0
    %1235 = vmatprep.subr.mxu0 0.0
    %1236 = vmatpush1.msra.mxu0 0.0
    %1237 = vmatprep.subr.mxu0 0.0
    %1238 = vmatpush1.msra.mxu0 0.0
    %1239 = vmatprep.subr.mxu0 0.0
    %1240 = vmatpush1.msra.mxu0 0.0
    %1241 = vmatprep.subr.mxu0 0.0
    %1242 = vmatpush1.msra.mxu0 0.0
    %1243 = vmatprep.subr.mxu0 0.0
    %1244 = vmatpush1.msra.mxu0 0.0
    %1245 = vmatprep.subr.mxu0 0.0
    %1246 = vmatpush1.msra.mxu0 %v52
    %1247 = vmatprep.subr.mxu0 0.0
    %1248 = vmatpush1.msra.mxu0 %v51
    %1249 = vmatprep.subr.mxu0 0.0
    %1250 = vmatpush1.msra.mxu0 %v50
    %1251 = vmatprep.subr.mxu0 0.0
    %1252 = vmatpush1.msra.mxu0 %v49
    %1253 = vmatprep.subr.mxu0 0.0
    %1254 = vmatpush2.msra.mxu0 0.0
    %1255 = vmatprep.subr.mxu0 0.0
    %1256 = vmatpush2.msra.mxu0 0.0
    %1257 = vmatprep.subr.mxu0 0.0
    %1258 = vmatpush2.msra.mxu0 0.0
    %1259 = vmatprep.subr.mxu0 0.0
    %1260 = vmatpush2.msra.mxu0 0.0
    %1261 = vmatprep.subr.mxu0 0.0
    %1262 = vmatpush2.msra.mxu0 0.0
    %1263 = vmatprep.subr.mxu0 0.0
    %1264 = vmatpush2.msra.mxu0 0.0
    %1265 = vmatprep.subr.mxu0 0.0
    %1266 = vmatpush2.msra.mxu0 0.0
    %1267 = vmatprep.subr.mxu0 0.0
    %1268 = vmatpush2.msra.mxu0 0.0
    %1269 = vmatprep.subr.mxu0 0.0
    %1270 = vmatpush2.msra.mxu0 0.0
    %1271 = vmatprep.subr.mxu0 0.0
    %1272 = vmatpush2.msra.mxu0 0.0
    %1273 = vmatprep.subr.mxu0 0.0
    %1274 = vmatpush2.msra.mxu0 0.0
    %1275 = vmatprep.subr.mxu0 0.0
    %1276 = vmatpush2.msra.mxu0 0.0
    %1277 = vmatprep.subr.mxu0 0.0
    %1278 = vmatpush2.msra.mxu0 0.0
    %1279 = vmatprep.subr.mxu0 0.0
    %1280 = vmatpush2.msra.mxu0 0.0
    %1281 = vmatprep.subr.mxu0 0.0
    %1282 = vmatpush2.msra.mxu0 0.0
    %1283 = vmatprep.subr.mxu0 0.0
    %1284 = vmatpush2.msra.mxu0 0.0
    %1285 = vmatprep.mubr.f32.mxu0 0.0
    %1286 = vmatmul.mubr.f32.gmra.mxu0 %v1219
    %v1287 = vpop.f32.mrf.mxu0
    %v1288 = vadd.f32 0.0, %v1287
    %v1289 = vpop.f32.mrf.mxu0
    %1290 = vdwg.mxu0
    %v1291 = vadd.f32 %v1213, %v1288
    %v1292 = vxor.u32 %v1291, 2147483648
    %v1293 = vmul.f32 %v1292, 1.442695
    %v1294 = vpow.pop %v1293
    %v1295 = vadd.f32 %v1294, 1.0
    %v1296 = vrcp.pop %v1295
    %v1297 = vmul.f32 1.0, %v1296
    %v1298 = vadd.f32 %v1288, %v474
    %1300 = vrot.lane.b32.xlu0 %v1298, 64
    %v1301 = vpop.permute.xlu0 %1300
    %v1303 = vmul.f32 %v1297, %v1301
    %1305 = vrot.lane.b32.xlu0 %v1303, 64
    %v1306 = vpop.permute.xlu0 %1305
    %v1308 = vadd.f32 %v1213, %v1306
    %v1309 = vtanh.pop %v1308
    %v1310 = vsub.f32 1.0, %v1297
    %1312 = vrot.lane.b32.xlu0 %v1309, 96
    %v1313 = vpop.permute.xlu0 %1312
    %v1315 = vmul.f32 %v1310, %v1313
    %v1316 = vmul.f32 %v1297, %v1043
    %v1317 = vadd.f32 %v1315, %v1316
    %1318 = vmatprep.subr.mxu0 0.0
    %1319 = vmatpush1.msra.mxu0 0.0
    %1320 = vmatprep.subr.mxu0 0.0
    %1321 = vmatpush1.msra.mxu0 0.0
    %1322 = vmatprep.subr.mxu0 0.0
    %1323 = vmatpush1.msra.mxu0 0.0
    %1324 = vmatprep.subr.mxu0 0.0
    %1325 = vmatpush1.msra.mxu0 0.0
    %1326 = vmatprep.subr.mxu0 0.0
    %1327 = vmatpush1.msra.mxu0 0.0
    %1328 = vmatprep.subr.mxu0 0.0
    %1329 = vmatpush1.msra.mxu0 0.0
    %1330 = vmatprep.subr.mxu0 0.0
    %1331 = vmatpush1.msra.mxu0 0.0
    %1332 = vmatprep.subr.mxu0 0.0
    %1333 = vmatpush1.msra.mxu0 0.0
    %1334 = vmatprep.subr.mxu0 0.0
    %1335 = vmatpush1.msra.mxu0 0.0
    %1336 = vmatprep.subr.mxu0 0.0
    %1337 = vmatpush1.msra.mxu0 0.0
    %1338 = vmatprep.subr.mxu0 0.0
    %1339 = vmatpush1.msra.mxu0 0.0
    %1340 = vmatprep.subr.mxu0 0.0
    %1341 = vmatpush1.msra.mxu0 0.0
    %1342 = vmatprep.subr.mxu0 0.0
    %1343 = vmatpush1.msra.mxu0 %v48
    %1344 = vmatprep.subr.mxu0 0.0
    %1345 = vmatpush1.msra.mxu0 %v47
    %1346 = vmatprep.subr.mxu0 0.0
    %1347 = vmatpush1.msra.mxu0 %v46
    %1348 = vmatprep.subr.mxu0 0.0
    %1349 = vmatpush1.msra.mxu0 %v45
    %1350 = vmatprep.subr.mxu0 0.0
    %1351 = vmatpush2.msra.mxu0 0.0
    %1352 = vmatprep.subr.mxu0 0.0
    %1353 = vmatpush2.msra.mxu0 0.0
    %1354 = vmatprep.subr.mxu0 0.0
    %1355 = vmatpush2.msra.mxu0 0.0
    %1356 = vmatprep.subr.mxu0 0.0
    %1357 = vmatpush2.msra.mxu0 0.0
    %1358 = vmatprep.subr.mxu0 0.0
    %1359 = vmatpush2.msra.mxu0 0.0
    %1360 = vmatprep.subr.mxu0 0.0
    %1361 = vmatpush2.msra.mxu0 0.0
    %1362 = vmatprep.subr.mxu0 0.0
    %1363 = vmatpush2.msra.mxu0 0.0
    %1364 = vmatprep.subr.mxu0 0.0
    %1365 = vmatpush2.msra.mxu0 0.0
    %1366 = vmatprep.subr.mxu0 0.0
    %1367 = vmatpush2.msra.mxu0 0.0
    %1368 = vmatprep.subr.mxu0 0.0
    %1369 = vmatpush2.msra.mxu0 0.0
    %1370 = vmatprep.subr.mxu0 0.0
    %1371 = vmatpush2.msra.mxu0 0.0
    %1372 = vmatprep.subr.mxu0 0.0
    %1373 = vmatpush2.msra.mxu0 0.0
    %1374 = vmatprep.subr.mxu0 0.0
    %1375 = vmatpush2.msra.mxu0 0.0
    %1376 = vmatprep.subr.mxu0 0.0
    %1377 = vmatpush2.msra.mxu0 0.0
    %1378 = vmatprep.subr.mxu0 0.0
    %1379 = vmatpush2.msra.mxu0 0.0
    %1380 = vmatprep.subr.mxu0 0.0
    %1381 = vmatpush2.msra.mxu0 0.0
    %1382 = vmatprep.mubr.f32.mxu0 0.0
    %1383 = vmatmul.mubr.f32.gmra.mxu0 %v1144
    %v1384 = vpop.f32.mrf.mxu0
    %v1385 = vadd.f32 0.0, %v1384
    %v1386 = vpop.f32.mrf.mxu0
    %1387 = vdwg.mxu0
    %v1388 = vadd.f32 %v199, %v1385
    %v1389 = vxor.u32 %v1388, 2147483648
    %v1390 = vmul.f32 %v1389, 1.442695
    %v1391 = vpow.pop %v1390
    %v1392 = vadd.f32 %v1391, 1.0
    %v1393 = vrcp.pop %v1392
    %v1394 = vmul.f32 1.0, %v1393
    %v1395 = vadd.f32 %v1385, %v299
    %1397 = vrot.lane.b32.xlu0 %v1395, 64
    %v1398 = vpop.permute.xlu0 %1397
    %v1400 = vmul.f32 %v1394, %v1398
    %1402 = vrot.lane.b32.xlu0 %v1400, 64
    %v1403 = vpop.permute.xlu0 %1402
    %v1405 = vadd.f32 %v199, %v1403
    %v1406 = vtanh.pop %v1405
    %v1407 = vsub.f32 1.0, %v1394
    %1409 = vrot.lane.b32.xlu0 %v1406, 96
    %v1410 = vpop.permute.xlu0 %1409
    %v1412 = vmul.f32 %v1407, %v1410
    %v1413 = vmul.f32 %v1394, %v1140
    %v1414 = vadd.f32 %v1412, %v1413
    %1416 = vrot.lane.b32.xlu0 %v1414, 96
    %v1417 = vpop.permute.xlu0 %1416
    %v1418 = vsel %vm217, %v1417, 0
    %1420 = vmatprep.subr.mxu0 0.0
    %1421 = vmatpush1.msra.mxu0 0.0
    %1422 = vmatprep.subr.mxu0 0.0
    %1423 = vmatpush1.msra.mxu0 0.0
    %1424 = vmatprep.subr.mxu0 0.0
    %1425 = vmatpush1.msra.mxu0 0.0
    %1426 = vmatprep.subr.mxu0 0.0
    %1427 = vmatpush1.msra.mxu0 0.0
    %1428 = vmatprep.subr.mxu0 0.0
    %1429 = vmatpush1.msra.mxu0 0.0
    %1430 = vmatprep.subr.mxu0 0.0
    %1431 = vmatpush1.msra.mxu0 0.0
    %1432 = vmatprep.subr.mxu0 0.0
    %1433 = vmatpush1.msra.mxu0 0.0
    %1434 = vmatprep.subr.mxu0 0.0
    %1435 = vmatpush1.msra.mxu0 0.0
    %1436 = vmatprep.subr.mxu0 0.0
    %1437 = vmatpush1.msra.mxu0 0.0
    %1438 = vmatprep.subr.mxu0 0.0
    %1439 = vmatpush1.msra.mxu0 0.0
    %1440 = vmatprep.subr.mxu0 0.0
    %1441 = vmatpush1.msra.mxu0 0.0
    %1442 = vmatprep.subr.mxu0 0.0
    %1443 = vmatpush1.msra.mxu0 0.0
    %1444 = vmatprep.subr.mxu0 0.0
    %1445 = vmatpush1.msra.mxu0 %v44
    %1446 = vmatprep.subr.mxu0 0.0
    %1447 = vmatpush1.msra.mxu0 %v43
    %1448 = vmatprep.subr.mxu0 0.0
    %1449 = vmatpush1.msra.mxu0 %v42
    %1450 = vmatprep.subr.mxu0 0.0
    %1451 = vmatpush1.msra.mxu0 %v41
    %1452 = vmatprep.subr.mxu0 0.0
    %1453 = vmatpush2.msra.mxu0 0.0
    %1454 = vmatprep.subr.mxu0 0.0
    %1455 = vmatpush2.msra.mxu0 0.0
    %1456 = vmatprep.subr.mxu0 0.0
    %1457 = vmatpush2.msra.mxu0 0.0
    %1458 = vmatprep.subr.mxu0 0.0
    %1459 = vmatpush2.msra.mxu0 0.0
    %1460 = vmatprep.subr.mxu0 0.0
    %1461 = vmatpush2.msra.mxu0 0.0
    %1462 = vmatprep.subr.mxu0 0.0
    %1463 = vmatpush2.msra.mxu0 0.0
    %1464 = vmatprep.subr.mxu0 0.0
    %1465 = vmatpush2.msra.mxu0 0.0
    %1466 = vmatprep.subr.mxu0 0.0
    %1467 = vmatpush2.msra.mxu0 0.0
    %1468 = vmatprep.subr.mxu0 0.0
    %1469 = vmatpush2.msra.mxu0 0.0
    %1470 = vmatprep.subr.mxu0 0.0
    %1471 = vmatpush2.msra.mxu0 0.0
    %1472 = vmatprep.subr.mxu0 0.0
    %1473 = vmatpush2.msra.mxu0 0.0
    %1474 = vmatprep.subr.mxu0 0.0
    %1475 = vmatpush2.msra.mxu0 0.0
    %1476 = vmatprep.subr.mxu0 0.0
    %1477 = vmatpush2.msra.mxu0 0.0
    %1478 = vmatprep.subr.mxu0 0.0
    %1479 = vmatpush2.msra.mxu0 0.0
    %1480 = vmatprep.subr.mxu0 0.0
    %1481 = vmatpush2.msra.mxu0 0.0
    %1482 = vmatprep.subr.mxu0 0.0
    %1483 = vmatpush2.msra.mxu0 0.0
    %1484 = vmatprep.mubr.f32.mxu0 0.0
    %1485 = vmatmul.mubr.f32.gmra.mxu0 %v1418
    %v1486 = vpop.f32.mrf.mxu0
    %v1487 = vadd.f32 %v58, %v1486
    %v1488 = vpop.f32.mrf.mxu0
    %1489 = vdwg.mxu0
    %1491 = vrot.lane.b32.xlu0 %v1317, 96
    %v1492 = vpop.permute.xlu0 %1491
    %v1493 = vsel %vm217, %v1492, 0
    %1495 = vmatprep.subr.mxu0 0.0
    %1496 = vmatpush1.msra.mxu0 0.0
    %1497 = vmatprep.subr.mxu0 0.0
    %1498 = vmatpush1.msra.mxu0 0.0
    %1499 = vmatprep.subr.mxu0 0.0
    %1500 = vmatpush1.msra.mxu0 0.0
    %1501 = vmatprep.subr.mxu0 0.0
    %1502 = vmatpush1.msra.mxu0 0.0
    %1503 = vmatprep.subr.mxu0 0.0
    %1504 = vmatpush1.msra.mxu0 0.0
    %1505 = vmatprep.subr.mxu0 0.0
    %1506 = vmatpush1.msra.mxu0 0.0
    %1507 = vmatprep.subr.mxu0 0.0
    %1508 = vmatpush1.msra.mxu0 0.0
    %1509 = vmatprep.subr.mxu0 0.0
    %1510 = vmatpush1.msra.mxu0 0.0
    %1511 = vmatprep.subr.mxu0 0.0
    %1512 = vmatpush1.msra.mxu0 0.0
    %1513 = vmatprep.subr.mxu0 0.0
    %1514 = vmatpush1.msra.mxu0 0.0
    %1515 = vmatprep.subr.mxu0 0.0
    %1516 = vmatpush1.msra.mxu0 0.0
    %1517 = vmatprep.subr.mxu0 0.0
    %1518 = vmatpush1.msra.mxu0 0.0
    %1519 = vmatprep.subr.mxu0 0.0
    %1520 = vmatpush1.msra.mxu0 %v52
    %1521 = vmatprep.subr.mxu0 0.0
    %1522 = vmatpush1.msra.mxu0 %v51
    %1523 = vmatprep.subr.mxu0 0.0
    %1524 = vmatpush1.msra.mxu0 %v50
    %1525 = vmatprep.subr.mxu0 0.0
    %1526 = vmatpush1.msra.mxu0 %v49
    %1527 = vmatprep.subr.mxu0 0.0
    %1528 = vmatpush2.msra.mxu0 0.0
    %1529 = vmatprep.subr.mxu0 0.0
    %1530 = vmatpush2.msra.mxu0 0.0
    %1531 = vmatprep.subr.mxu0 0.0
    %1532 = vmatpush2.msra.mxu0 0.0
    %1533 = vmatprep.subr.mxu0 0.0
    %1534 = vmatpush2.msra.mxu0 0.0
    %1535 = vmatprep.subr.mxu0 0.0
    %1536 = vmatpush2.msra.mxu0 0.0
    %1537 = vmatprep.subr.mxu0 0.0
    %1538 = vmatpush2.msra.mxu0 0.0
    %1539 = vmatprep.subr.mxu0 0.0
    %1540 = vmatpush2.msra.mxu0 0.0
    %1541 = vmatprep.subr.mxu0 0.0
    %1542 = vmatpush2.msra.mxu0 0.0
    %1543 = vmatprep.subr.mxu0 0.0
    %1544 = vmatpush2.msra.mxu0 0.0
    %1545 = vmatprep.subr.mxu0 0.0
    %1546 = vmatpush2.msra.mxu0 0.0
    %1547 = vmatprep.subr.mxu0 0.0
    %1548 = vmatpush2.msra.mxu0 0.0
    %1549 = vmatprep.subr.mxu0 0.0
    %1550 = vmatpush2.msra.mxu0 0.0
    %1551 = vmatprep.subr.mxu0 0.0
    %1552 = vmatpush2.msra.mxu0 0.0
    %1553 = vmatprep.subr.mxu0 0.0
    %1554 = vmatpush2.msra.mxu0 0.0
    %1555 = vmatprep.subr.mxu0 0.0
    %1556 = vmatpush2.msra.mxu0 0.0
    %1557 = vmatprep.subr.mxu0 0.0
    %1558 = vmatpush2.msra.mxu0 0.0
    %1559 = vmatprep.mubr.f32.mxu0 0.0
    %1560 = vmatmul.mubr.f32.gmra.mxu0 %v1493
    %v1561 = vpop.f32.mrf.mxu0
    %v1562 = vadd.f32 0.0, %v1561
    %v1563 = vpop.f32.mrf.mxu0
    %1564 = vdwg.mxu0
    %v1565 = vadd.f32 %v1487, %v1562
    %v1566 = vxor.u32 %v1565, 2147483648
    %v1567 = vmul.f32 %v1566, 1.442695
    %v1568 = vpow.pop %v1567
    %v1569 = vadd.f32 %v1568, 1.0
    %v1570 = vrcp.pop %v1569
    %v1571 = vmul.f32 1.0, %v1570
    %v1572 = vadd.f32 %v1562, %v474
    %1574 = vrot.lane.b32.xlu0 %v1572, 64
    %v1575 = vpop.permute.xlu0 %1574
    %v1577 = vmul.f32 %v1571, %v1575
    %1579 = vrot.lane.b32.xlu0 %v1577, 64
    %v1580 = vpop.permute.xlu0 %1579
    %v1582 = vadd.f32 %v1487, %v1580
    %v1583 = vtanh.pop %v1582
    %v1584 = vsub.f32 1.0, %v1571
    %1586 = vrot.lane.b32.xlu0 %v1583, 96
    %v1587 = vpop.permute.xlu0 %1586
    %v1589 = vmul.f32 %v1584, %v1587
    %v1590 = vmul.f32 %v1571, %v1317
    %v1591 = vadd.f32 %v1589, %v1590
    %1592 = vmatprep.subr.mxu0 0.0
    %1593 = vmatpush1.msra.mxu0 0.0
    %1594 = vmatprep.subr.mxu0 0.0
    %1595 = vmatpush1.msra.mxu0 0.0
    %1596 = vmatprep.subr.mxu0 0.0
    %1597 = vmatpush1.msra.mxu0 0.0
    %1598 = vmatprep.subr.mxu0 0.0
    %1599 = vmatpush1.msra.mxu0 0.0
    %1600 = vmatprep.subr.mxu0 0.0
    %1601 = vmatpush1.msra.mxu0 0.0
    %1602 = vmatprep.subr.mxu0 0.0
    %1603 = vmatpush1.msra.mxu0 0.0
    %1604 = vmatprep.subr.mxu0 0.0
    %1605 = vmatpush1.msra.mxu0 0.0
    %1606 = vmatprep.subr.mxu0 0.0
    %1607 = vmatpush1.msra.mxu0 0.0
    %1608 = vmatprep.subr.mxu0 0.0
    %1609 = vmatpush1.msra.mxu0 0.0
    %1610 = vmatprep.subr.mxu0 0.0
    %1611 = vmatpush1.msra.mxu0 0.0
    %1612 = vmatprep.subr.mxu0 0.0
    %1613 = vmatpush1.msra.mxu0 0.0
    %1614 = vmatprep.subr.mxu0 0.0
    %1615 = vmatpush1.msra.mxu0 0.0
    %1616 = vmatprep.subr.mxu0 0.0
    %1617 = vmatpush1.msra.mxu0 %v48
    %1618 = vmatprep.subr.mxu0 0.0
    %1619 = vmatpush1.msra.mxu0 %v47
    %1620 = vmatprep.subr.mxu0 0.0
    %1621 = vmatpush1.msra.mxu0 %v46
    %1622 = vmatprep.subr.mxu0 0.0
    %1623 = vmatpush1.msra.mxu0 %v45
    %1624 = vmatprep.subr.mxu0 0.0
    %1625 = vmatpush2.msra.mxu0 0.0
    %1626 = vmatprep.subr.mxu0 0.0
    %1627 = vmatpush2.msra.mxu0 0.0
    %1628 = vmatprep.subr.mxu0 0.0
    %1629 = vmatpush2.msra.mxu0 0.0
    %1630 = vmatprep.subr.mxu0 0.0
    %1631 = vmatpush2.msra.mxu0 0.0
    %1632 = vmatprep.subr.mxu0 0.0
    %1633 = vmatpush2.msra.mxu0 0.0
    %1634 = vmatprep.subr.mxu0 0.0
    %1635 = vmatpush2.msra.mxu0 0.0
    %1636 = vmatprep.subr.mxu0 0.0
    %1637 = vmatpush2.msra.mxu0 0.0
    %1638 = vmatprep.subr.mxu0 0.0
    %1639 = vmatpush2.msra.mxu0 0.0
    %1640 = vmatprep.subr.mxu0 0.0
    %1641 = vmatpush2.msra.mxu0 0.0
    %1642 = vmatprep.subr.mxu0 0.0
    %1643 = vmatpush2.msra.mxu0 0.0
    %1644 = vmatprep.subr.mxu0 0.0
    %1645 = vmatpush2.msra.mxu0 0.0
    %1646 = vmatprep.subr.mxu0 0.0
    %1647 = vmatpush2.msra.mxu0 0.0
    %1648 = vmatprep.subr.mxu0 0.0
    %1649 = vmatpush2.msra.mxu0 0.0
    %1650 = vmatprep.subr.mxu0 0.0
    %1651 = vmatpush2.msra.mxu0 0.0
    %1652 = vmatprep.subr.mxu0 0.0
    %1653 = vmatpush2.msra.mxu0 0.0
    %1654 = vmatprep.subr.mxu0 0.0
    %1655 = vmatpush2.msra.mxu0 0.0
    %1656 = vmatprep.mubr.f32.mxu0 0.0
    %1657 = vmatmul.mubr.f32.gmra.mxu0 %v1418
    %v1658 = vpop.f32.mrf.mxu0
    %v1659 = vadd.f32 0.0, %v1658
    %v1660 = vpop.f32.mrf.mxu0
    %1661 = vdwg.mxu0
    %v1662 = vadd.f32 %v204, %v1659
    %v1663 = vxor.u32 %v1662, 2147483648
    %v1664 = vmul.f32 %v1663, 1.442695
    %v1665 = vpow.pop %v1664
    %v1666 = vadd.f32 %v1665, 1.0
    %v1667 = vrcp.pop %v1666
    %v1668 = vmul.f32 1.0, %v1667
    %v1669 = vadd.f32 %v1659, %v299
    %1671 = vrot.lane.b32.xlu0 %v1669, 64
    %v1672 = vpop.permute.xlu0 %1671
    %v1674 = vmul.f32 %v1668, %v1672
    %1676 = vrot.lane.b32.xlu0 %v1674, 64
    %v1677 = vpop.permute.xlu0 %1676
    %v1679 = vadd.f32 %v204, %v1677
    %v1680 = vtanh.pop %v1679
    %v1681 = vsub.f32 1.0, %v1668
    %1683 = vrot.lane.b32.xlu0 %v1680, 96
    %v1684 = vpop.permute.xlu0 %1683
    %v1686 = vmul.f32 %v1681, %v1684
    %v1687 = vmul.f32 %v1668, %v1414
    %v1688 = vadd.f32 %v1686, %v1687
    %1690 = vrot.lane.b32.xlu0 %v1688, 96
    %v1691 = vpop.permute.xlu0 %1690
    %v1692 = vsel %vm217, %v1691, 0
    %1694 = vmatprep.subr.mxu0 0.0
    %1695 = vmatpush1.msra.mxu0 0.0
    %1696 = vmatprep.subr.mxu0 0.0
    %1697 = vmatpush1.msra.mxu0 0.0
    %1698 = vmatprep.subr.mxu0 0.0
    %1699 = vmatpush1.msra.mxu0 0.0
    %1700 = vmatprep.subr.mxu0 0.0
    %1701 = vmatpush1.msra.mxu0 0.0
    %1702 = vmatprep.subr.mxu0 0.0
    %1703 = vmatpush1.msra.mxu0 0.0
    %1704 = vmatprep.subr.mxu0 0.0
    %1705 = vmatpush1.msra.mxu0 0.0
    %1706 = vmatprep.subr.mxu0 0.0
    %1707 = vmatpush1.msra.mxu0 0.0
    %1708 = vmatprep.subr.mxu0 0.0
    %1709 = vmatpush1.msra.mxu0 0.0
    %1710 = vmatprep.subr.mxu0 0.0
    %1711 = vmatpush1.msra.mxu0 0.0
    %1712 = vmatprep.subr.mxu0 0.0
    %1713 = vmatpush1.msra.mxu0 0.0
    %1714 = vmatprep.subr.mxu0 0.0
    %1715 = vmatpush1.msra.mxu0 0.0
    %1716 = vmatprep.subr.mxu0 0.0
    %1717 = vmatpush1.msra.mxu0 0.0
    %1718 = vmatprep.subr.mxu0 0.0
    %1719 = vmatpush1.msra.mxu0 %v44
    %1720 = vmatprep.subr.mxu0 0.0
    %1721 = vmatpush1.msra.mxu0 %v43
    %1722 = vmatprep.subr.mxu0 0.0
    %1723 = vmatpush1.msra.mxu0 %v42
    %1724 = vmatprep.subr.mxu0 0.0
    %1725 = vmatpush1.msra.mxu0 %v41
    %1726 = vmatprep.subr.mxu0 0.0
    %1727 = vmatpush2.msra.mxu0 0.0
    %1728 = vmatprep.subr.mxu0 0.0
    %1729 = vmatpush2.msra.mxu0 0.0
    %1730 = vmatprep.subr.mxu0 0.0
    %1731 = vmatpush2.msra.mxu0 0.0
    %1732 = vmatprep.subr.mxu0 0.0
    %1733 = vmatpush2.msra.mxu0 0.0
    %1734 = vmatprep.subr.mxu0 0.0
    %1735 = vmatpush2.msra.mxu0 0.0
    %1736 = vmatprep.subr.mxu0 0.0
    %1737 = vmatpush2.msra.mxu0 0.0
    %1738 = vmatprep.subr.mxu0 0.0
    %1739 = vmatpush2.msra.mxu0 0.0
    %1740 = vmatprep.subr.mxu0 0.0
    %1741 = vmatpush2.msra.mxu0 0.0
    %1742 = vmatprep.subr.mxu0 0.0
    %1743 = vmatpush2.msra.mxu0 0.0
    %1744 = vmatprep.subr.mxu0 0.0
    %1745 = vmatpush2.msra.mxu0 0.0
    %1746 = vmatprep.subr.mxu0 0.0
    %1747 = vmatpush2.msra.mxu0 0.0
    %1748 = vmatprep.subr.mxu0 0.0
    %1749 = vmatpush2.msra.mxu0 0.0
    %1750 = vmatprep.subr.mxu0 0.0
    %1751 = vmatpush2.msra.mxu0 0.0
    %1752 = vmatprep.subr.mxu0 0.0
    %1753 = vmatpush2.msra.mxu0 0.0
    %1754 = vmatprep.subr.mxu0 0.0
    %1755 = vmatpush2.msra.mxu0 0.0
    %1756 = vmatprep.subr.mxu0 0.0
    %1757 = vmatpush2.msra.mxu0 0.0
    %1758 = vmatprep.mubr.f32.mxu0 0.0
    %1759 = vmatmul.mubr.f32.gmra.mxu0 %v1692
    %v1760 = vpop.f32.mrf.mxu0
    %v1761 = vadd.f32 %v58, %v1760
    %v1762 = vpop.f32.mrf.mxu0
    %1763 = vdwg.mxu0
    %1765 = vrot.lane.b32.xlu0 %v1591, 96
    %v1766 = vpop.permute.xlu0 %1765
    %v1767 = vsel %vm217, %v1766, 0
    %1769 = vmatprep.subr.mxu0 0.0
    %1770 = vmatpush1.msra.mxu0 0.0
    %1771 = vmatprep.subr.mxu0 0.0
    %1772 = vmatpush1.msra.mxu0 0.0
    %1773 = vmatprep.subr.mxu0 0.0
    %1774 = vmatpush1.msra.mxu0 0.0
    %1775 = vmatprep.subr.mxu0 0.0
    %1776 = vmatpush1.msra.mxu0 0.0
    %1777 = vmatprep.subr.mxu0 0.0
    %1778 = vmatpush1.msra.mxu0 0.0
    %1779 = vmatprep.subr.mxu0 0.0
    %1780 = vmatpush1.msra.mxu0 0.0
    %1781 = vmatprep.subr.mxu0 0.0
    %1782 = vmatpush1.msra.mxu0 0.0
    %1783 = vmatprep.subr.mxu0 0.0
    %1784 = vmatpush1.msra.mxu0 0.0
    %1785 = vmatprep.subr.mxu0 0.0
    %1786 = vmatpush1.msra.mxu0 0.0
    %1787 = vmatprep.subr.mxu0 0.0
    %1788 = vmatpush1.msra.mxu0 0.0
    %1789 = vmatprep.subr.mxu0 0.0
    %1790 = vmatpush1.msra.mxu0 0.0
    %1791 = vmatprep.subr.mxu0 0.0
    %1792 = vmatpush1.msra.mxu0 0.0
    %1793 = vmatprep.subr.mxu0 0.0
    %1794 = vmatpush1.msra.mxu0 %v52
    %1795 = vmatprep.subr.mxu0 0.0
    %1796 = vmatpush1.msra.mxu0 %v51
    %1797 = vmatprep.subr.mxu0 0.0
    %1798 = vmatpush1.msra.mxu0 %v50
    %1799 = vmatprep.subr.mxu0 0.0
    %1800 = vmatpush1.msra.mxu0 %v49
    %1801 = vmatprep.subr.mxu0 0.0
    %1802 = vmatpush2.msra.mxu0 0.0
    %1803 = vmatprep.subr.mxu0 0.0
    %1804 = vmatpush2.msra.mxu0 0.0
    %1805 = vmatprep.subr.mxu0 0.0
    %1806 = vmatpush2.msra.mxu0 0.0
    %1807 = vmatprep.subr.mxu0 0.0
    %1808 = vmatpush2.msra.mxu0 0.0
    %1809 = vmatprep.subr.mxu0 0.0
    %1810 = vmatpush2.msra.mxu0 0.0
    %1811 = vmatprep.subr.mxu0 0.0
    %1812 = vmatpush2.msra.mxu0 0.0
    %1813 = vmatprep.subr.mxu0 0.0
    %1814 = vmatpush2.msra.mxu0 0.0
    %1815 = vmatprep.subr.mxu0 0.0
    %1816 = vmatpush2.msra.mxu0 0.0
    %1817 = vmatprep.subr.mxu0 0.0
    %1818 = vmatpush2.msra.mxu0 0.0
    %1819 = vmatprep.subr.mxu0 0.0
    %1820 = vmatpush2.msra.mxu0 0.0
    %1821 = vmatprep.subr.mxu0 0.0
    %1822 = vmatpush2.msra.mxu0 0.0
    %1823 = vmatprep.subr.mxu0 0.0
    %1824 = vmatpush2.msra.mxu0 0.0
    %1825 = vmatprep.subr.mxu0 0.0
    %1826 = vmatpush2.msra.mxu0 0.0
    %1827 = vmatprep.subr.mxu0 0.0
    %1828 = vmatpush2.msra.mxu0 0.0
    %1829 = vmatprep.subr.mxu0 0.0
    %1830 = vmatpush2.msra.mxu0 0.0
    %1831 = vmatprep.subr.mxu0 0.0
    %1832 = vmatpush2.msra.mxu0 0.0
    %1833 = vmatprep.mubr.f32.mxu0 0.0
    %1834 = vmatmul.mubr.f32.gmra.mxu0 %v1767
    %v1835 = vpop.f32.mrf.mxu0
    %v1836 = vadd.f32 0.0, %v1835
    %v1837 = vpop.f32.mrf.mxu0
    %1838 = vdwg.mxu0
    %v1839 = vadd.f32 %v1761, %v1836
    %v1840 = vxor.u32 %v1839, 2147483648
    %v1841 = vmul.f32 %v1840, 1.442695
    %v1842 = vpow.pop %v1841
    %v1843 = vadd.f32 %v1842, 1.0
    %v1844 = vrcp.pop %v1843
    %v1845 = vmul.f32 1.0, %v1844
    %v1846 = vadd.f32 %v1836, %v474
    %1848 = vrot.lane.b32.xlu0 %v1846, 64
    %v1849 = vpop.permute.xlu0 %1848
    %v1851 = vmul.f32 %v1845, %v1849
    %1853 = vrot.lane.b32.xlu0 %v1851, 64
    %v1854 = vpop.permute.xlu0 %1853
    %v1856 = vadd.f32 %v1761, %v1854
    %v1857 = vtanh.pop %v1856
    %v1858 = vsub.f32 1.0, %v1845
    %1860 = vrot.lane.b32.xlu0 %v1857, 96
    %v1861 = vpop.permute.xlu0 %1860
    %v1863 = vmul.f32 %v1858, %v1861
    %v1864 = vmul.f32 %v1845, %v1591
    %v1865 = vadd.f32 %v1863, %v1864
    %1866 = vmatprep.subr.mxu0 0.0
    %1867 = vmatpush1.msra.mxu0 0.0
    %1868 = vmatprep.subr.mxu0 0.0
    %1869 = vmatpush1.msra.mxu0 0.0
    %1870 = vmatprep.subr.mxu0 0.0
    %1871 = vmatpush1.msra.mxu0 0.0
    %1872 = vmatprep.subr.mxu0 0.0
    %1873 = vmatpush1.msra.mxu0 0.0
    %1874 = vmatprep.subr.mxu0 0.0
    %1875 = vmatpush1.msra.mxu0 0.0
    %1876 = vmatprep.subr.mxu0 0.0
    %1877 = vmatpush1.msra.mxu0 0.0
    %1878 = vmatprep.subr.mxu0 0.0
    %1879 = vmatpush1.msra.mxu0 0.0
    %1880 = vmatprep.subr.mxu0 0.0
    %1881 = vmatpush1.msra.mxu0 0.0
    %1882 = vmatprep.subr.mxu0 0.0
    %1883 = vmatpush1.msra.mxu0 0.0
    %1884 = vmatprep.subr.mxu0 0.0
    %1885 = vmatpush1.msra.mxu0 0.0
    %1886 = vmatprep.subr.mxu0 0.0
    %1887 = vmatpush1.msra.mxu0 0.0
    %1888 = vmatprep.subr.mxu0 0.0
    %1889 = vmatpush1.msra.mxu0 0.0
    %1890 = vmatprep.subr.mxu0 0.0
    %1891 = vmatpush1.msra.mxu0 %v48
    %1892 = vmatprep.subr.mxu0 0.0
    %1893 = vmatpush1.msra.mxu0 %v47
    %1894 = vmatprep.subr.mxu0 0.0
    %1895 = vmatpush1.msra.mxu0 %v46
    %1896 = vmatprep.subr.mxu0 0.0
    %1897 = vmatpush1.msra.mxu0 %v45
    %1898 = vmatprep.subr.mxu0 0.0
    %1899 = vmatpush2.msra.mxu0 0.0
    %1900 = vmatprep.subr.mxu0 0.0
    %1901 = vmatpush2.msra.mxu0 0.0
    %1902 = vmatprep.subr.mxu0 0.0
    %1903 = vmatpush2.msra.mxu0 0.0
    %1904 = vmatprep.subr.mxu0 0.0
    %1905 = vmatpush2.msra.mxu0 0.0
    %1906 = vmatprep.subr.mxu0 0.0
    %1907 = vmatpush2.msra.mxu0 0.0
    %1908 = vmatprep.subr.mxu0 0.0
    %1909 = vmatpush2.msra.mxu0 0.0
    %1910 = vmatprep.subr.mxu0 0.0
    %1911 = vmatpush2.msra.mxu0 0.0
    %1912 = vmatprep.subr.mxu0 0.0
    %1913 = vmatpush2.msra.mxu0 0.0
    %1914 = vmatprep.subr.mxu0 0.0
    %1915 = vmatpush2.msra.mxu0 0.0
    %1916 = vmatprep.subr.mxu0 0.0
    %1917 = vmatpush2.msra.mxu0 0.0
    %1918 = vmatprep.subr.mxu0 0.0
    %1919 = vmatpush2.msra.mxu0 0.0
    %1920 = vmatprep.subr.mxu0 0.0
    %1921 = vmatpush2.msra.mxu0 0.0
    %1922 = vmatprep.subr.mxu0 0.0
    %1923 = vmatpush2.msra.mxu0 0.0
    %1924 = vmatprep.subr.mxu0 0.0
    %1925 = vmatpush2.msra.mxu0 0.0
    %1926 = vmatprep.subr.mxu0 0.0
    %1927 = vmatpush2.msra.mxu0 0.0
    %1928 = vmatprep.subr.mxu0 0.0
    %1929 = vmatpush2.msra.mxu0 0.0
    %1930 = vmatprep.mubr.f32.mxu0 0.0
    %1931 = vmatmul.mubr.f32.gmra.mxu0 %v1692
    %v1932 = vpop.f32.mrf.mxu0
    %v1933 = vadd.f32 0.0, %v1932
    %v1934 = vpop.f32.mrf.mxu0
    %1935 = vdwg.mxu0
    %v1936 = vadd.f32 %v209, %v1933
    %v1937 = vxor.u32 %v1936, 2147483648
    %v1938 = vmul.f32 %v1937, 1.442695
    %v1939 = vpow.pop %v1938
    %v1940 = vadd.f32 %v1939, 1.0
    %v1941 = vrcp.pop %v1940
    %v1942 = vmul.f32 1.0, %v1941
    %v1943 = vadd.f32 %v1933, %v299
    %1945 = vrot.lane.b32.xlu0 %v1943, 64
    %v1946 = vpop.permute.xlu0 %1945
    %v1948 = vmul.f32 %v1942, %v1946
    %1950 = vrot.lane.b32.xlu0 %v1948, 64
    %v1951 = vpop.permute.xlu0 %1950
    %v1953 = vadd.f32 %v209, %v1951
    %v1954 = vtanh.pop %v1953
    %v1955 = vsub.f32 1.0, %v1942
    %1957 = vrot.lane.b32.xlu0 %v1954, 96
    %v1958 = vpop.permute.xlu0 %1957
    %v1960 = vmul.f32 %v1955, %v1958
    %v1961 = vmul.f32 %v1942, %v1688
    %v1962 = vadd.f32 %v1960, %v1961
    %1964 = vrot.lane.b32.xlu0 %v1962, 96
    %v1965 = vpop.permute.xlu0 %1964
    %v1966 = vsel %vm217, %v1965, 0
    %1968 = vmatprep.subr.mxu0 0.0
    %1969 = vmatpush1.msra.mxu0 0.0
    %1970 = vmatprep.subr.mxu0 0.0
    %1971 = vmatpush1.msra.mxu0 0.0
    %1972 = vmatprep.subr.mxu0 0.0
    %1973 = vmatpush1.msra.mxu0 0.0
    %1974 = vmatprep.subr.mxu0 0.0
    %1975 = vmatpush1.msra.mxu0 0.0
    %1976 = vmatprep.subr.mxu0 0.0
    %1977 = vmatpush1.msra.mxu0 0.0
    %1978 = vmatprep.subr.mxu0 0.0
    %1979 = vmatpush1.msra.mxu0 0.0
    %1980 = vmatprep.subr.mxu0 0.0
    %1981 = vmatpush1.msra.mxu0 0.0
    %1982 = vmatprep.subr.mxu0 0.0
    %1983 = vmatpush1.msra.mxu0 0.0
    %1984 = vmatprep.subr.mxu0 0.0
    %1985 = vmatpush1.msra.mxu0 0.0
    %1986 = vmatprep.subr.mxu0 0.0
    %1987 = vmatpush1.msra.mxu0 0.0
    %1988 = vmatprep.subr.mxu0 0.0
    %1989 = vmatpush1.msra.mxu0 0.0
    %1990 = vmatprep.subr.mxu0 0.0
    %1991 = vmatpush1.msra.mxu0 0.0
    %1992 = vmatprep.subr.mxu0 0.0
    %1993 = vmatpush1.msra.mxu0 %v44
    %1994 = vmatprep.subr.mxu0 0.0
    %1995 = vmatpush1.msra.mxu0 %v43
    %1996 = vmatprep.subr.mxu0 0.0
    %1997 = vmatpush1.msra.mxu0 %v42
    %1998 = vmatprep.subr.mxu0 0.0
    %1999 = vmatpush1.msra.mxu0 %v41
    %2000 = vmatprep.subr.mxu0 0.0
    %2001 = vmatpush2.msra.mxu0 0.0
    %2002 = vmatprep.subr.mxu0 0.0
    %2003 = vmatpush2.msra.mxu0 0.0
    %2004 = vmatprep.subr.mxu0 0.0
    %2005 = vmatpush2.msra.mxu0 0.0
    %2006 = vmatprep.subr.mxu0 0.0
    %2007 = vmatpush2.msra.mxu0 0.0
    %2008 = vmatprep.subr.mxu0 0.0
    %2009 = vmatpush2.msra.mxu0 0.0
    %2010 = vmatprep.subr.mxu0 0.0
    %2011 = vmatpush2.msra.mxu0 0.0
    %2012 = vmatprep.subr.mxu0 0.0
    %2013 = vmatpush2.msra.mxu0 0.0
    %2014 = vmatprep.subr.mxu0 0.0
    %2015 = vmatpush2.msra.mxu0 0.0
    %2016 = vmatprep.subr.mxu0 0.0
    %2017 = vmatpush2.msra.mxu0 0.0
    %2018 = vmatprep.subr.mxu0 0.0
    %2019 = vmatpush2.msra.mxu0 0.0
    %2020 = vmatprep.subr.mxu0 0.0
    %2021 = vmatpush2.msra.mxu0 0.0
    %2022 = vmatprep.subr.mxu0 0.0
    %2023 = vmatpush2.msra.mxu0 0.0
    %2024 = vmatprep.subr.mxu0 0.0
    %2025 = vmatpush2.msra.mxu0 0.0
    %2026 = vmatprep.subr.mxu0 0.0
    %2027 = vmatpush2.msra.mxu0 0.0
    %2028 = vmatprep.subr.mxu0 0.0
    %2029 = vmatpush2.msra.mxu0 0.0
    %2030 = vmatprep.subr.mxu0 0.0
    %2031 = vmatpush2.msra.mxu0 0.0
    %2032 = vmatprep.mubr.f32.mxu0 0.0
    %2033 = vmatmul.mubr.f32.gmra.mxu0 %v1966
    %v2034 = vpop.f32.mrf.mxu0
    %v2035 = vadd.f32 %v58, %v2034
    %v2036 = vpop.f32.mrf.mxu0
    %2037 = vdwg.mxu0
    %2039 = vrot.lane.b32.xlu0 %v1865, 96
    %v2040 = vpop.permute.xlu0 %2039
    %v2041 = vsel %vm217, %v2040, 0
    %2043 = vmatprep.subr.mxu0 0.0
    %2044 = vmatpush1.msra.mxu0 0.0
    %2045 = vmatprep.subr.mxu0 0.0
    %2046 = vmatpush1.msra.mxu0 0.0
    %2047 = vmatprep.subr.mxu0 0.0
    %2048 = vmatpush1.msra.mxu0 0.0
    %2049 = vmatprep.subr.mxu0 0.0
    %2050 = vmatpush1.msra.mxu0 0.0
    %2051 = vmatprep.subr.mxu0 0.0
    %2052 = vmatpush1.msra.mxu0 0.0
    %2053 = vmatprep.subr.mxu0 0.0
    %2054 = vmatpush1.msra.mxu0 0.0
    %2055 = vmatprep.subr.mxu0 0.0
    %2056 = vmatpush1.msra.mxu0 0.0
    %2057 = vmatprep.subr.mxu0 0.0
    %2058 = vmatpush1.msra.mxu0 0.0
    %2059 = vmatprep.subr.mxu0 0.0
    %2060 = vmatpush1.msra.mxu0 0.0
    %2061 = vmatprep.subr.mxu0 0.0
    %2062 = vmatpush1.msra.mxu0 0.0
    %2063 = vmatprep.subr.mxu0 0.0
    %2064 = vmatpush1.msra.mxu0 0.0
    %2065 = vmatprep.subr.mxu0 0.0
    %2066 = vmatpush1.msra.mxu0 0.0
    %2067 = vmatprep.subr.mxu0 0.0
    %2068 = vmatpush1.msra.mxu0 %v52
    %2069 = vmatprep.subr.mxu0 0.0
    %2070 = vmatpush1.msra.mxu0 %v51
    %2071 = vmatprep.subr.mxu0 0.0
    %2072 = vmatpush1.msra.mxu0 %v50
    %2073 = vmatprep.subr.mxu0 0.0
    %2074 = vmatpush1.msra.mxu0 %v49
    %2075 = vmatprep.subr.mxu0 0.0
    %2076 = vmatpush2.msra.mxu0 0.0
    %2077 = vmatprep.subr.mxu0 0.0
    %2078 = vmatpush2.msra.mxu0 0.0
    %2079 = vmatprep.subr.mxu0 0.0
    %2080 = vmatpush2.msra.mxu0 0.0
    %2081 = vmatprep.subr.mxu0 0.0
    %2082 = vmatpush2.msra.mxu0 0.0
    %2083 = vmatprep.subr.mxu0 0.0
    %2084 = vmatpush2.msra.mxu0 0.0
    %2085 = vmatprep.subr.mxu0 0.0
    %2086 = vmatpush2.msra.mxu0 0.0
    %2087 = vmatprep.subr.mxu0 0.0
    %2088 = vmatpush2.msra.mxu0 0.0
    %2089 = vmatprep.subr.mxu0 0.0
    %2090 = vmatpush2.msra.mxu0 0.0
    %2091 = vmatprep.subr.mxu0 0.0
    %2092 = vmatpush2.msra.mxu0 0.0
    %2093 = vmatprep.subr.mxu0 0.0
    %2094 = vmatpush2.msra.mxu0 0.0
    %2095 = vmatprep.subr.mxu0 0.0
    %2096 = vmatpush2.msra.mxu0 0.0
    %2097 = vmatprep.subr.mxu0 0.0
    %2098 = vmatpush2.msra.mxu0 0.0
    %2099 = vmatprep.subr.mxu0 0.0
    %2100 = vmatpush2.msra.mxu0 0.0
    %2101 = vmatprep.subr.mxu0 0.0
    %2102 = vmatpush2.msra.mxu0 0.0
    %2103 = vmatprep.subr.mxu0 0.0
    %2104 = vmatpush2.msra.mxu0 0.0
    %2105 = vmatprep.subr.mxu0 0.0
    %2106 = vmatpush2.msra.mxu0 0.0
    %2107 = vmatprep.mubr.f32.mxu0 0.0
    %2108 = vmatmul.mubr.f32.gmra.mxu0 %v2041
    %v2109 = vpop.f32.mrf.mxu0
    %v2110 = vadd.f32 0.0, %v2109
    %v2111 = vpop.f32.mrf.mxu0
    %2112 = vdwg.mxu0
    %v2113 = vadd.f32 %v2035, %v2110
    %v2114 = vxor.u32 %v2113, 2147483648
    %v2115 = vmul.f32 %v2114, 1.442695
    %v2116 = vpow.pop %v2115
    %v2117 = vadd.f32 %v2116, 1.0
    %v2118 = vrcp.pop %v2117
    %v2119 = vmul.f32 1.0, %v2118
    %v2120 = vadd.f32 %v2110, %v474
    %2122 = vrot.lane.b32.xlu0 %v2120, 64
    %v2123 = vpop.permute.xlu0 %2122
    %v2125 = vmul.f32 %v2119, %v2123
    %2127 = vrot.lane.b32.xlu0 %v2125, 64
    %v2128 = vpop.permute.xlu0 %2127
    %v2130 = vadd.f32 %v2035, %v2128
    %v2131 = vtanh.pop %v2130
    %v2132 = vsub.f32 1.0, %v2119
    %2134 = vrot.lane.b32.xlu0 %v2131, 96
    %v2135 = vpop.permute.xlu0 %2134
    %v2137 = vmul.f32 %v2132, %v2135
    %v2138 = vmul.f32 %v2119, %v1865
    %v2139 = vadd.f32 %v2137, %v2138
    %2140 = vmatprep.subr.mxu0 0.0
    %2141 = vmatpush1.msra.mxu0 0.0
    %2142 = vmatprep.subr.mxu0 0.0
    %2143 = vmatpush1.msra.mxu0 0.0
    %2144 = vmatprep.subr.mxu0 0.0
    %2145 = vmatpush1.msra.mxu0 0.0
    %2146 = vmatprep.subr.mxu0 0.0
    %2147 = vmatpush1.msra.mxu0 0.0
    %2148 = vmatprep.subr.mxu0 0.0
    %2149 = vmatpush1.msra.mxu0 0.0
    %2150 = vmatprep.subr.mxu0 0.0
    %2151 = vmatpush1.msra.mxu0 0.0
    %2152 = vmatprep.subr.mxu0 0.0
    %2153 = vmatpush1.msra.mxu0 0.0
    %2154 = vmatprep.subr.mxu0 0.0
    %2155 = vmatpush1.msra.mxu0 0.0
    %2156 = vmatprep.subr.mxu0 0.0
    %2157 = vmatpush1.msra.mxu0 0.0
    %2158 = vmatprep.subr.mxu0 0.0
    %2159 = vmatpush1.msra.mxu0 0.0
    %2160 = vmatprep.subr.mxu0 0.0
    %2161 = vmatpush1.msra.mxu0 0.0
    %2162 = vmatprep.subr.mxu0 0.0
    %2163 = vmatpush1.msra.mxu0 0.0
    %2164 = vmatprep.subr.mxu0 0.0
    %2165 = vmatpush1.msra.mxu0 %v48
    %2166 = vmatprep.subr.mxu0 0.0
    %2167 = vmatpush1.msra.mxu0 %v47
    %2168 = vmatprep.subr.mxu0 0.0
    %2169 = vmatpush1.msra.mxu0 %v46
    %2170 = vmatprep.subr.mxu0 0.0
    %2171 = vmatpush1.msra.mxu0 %v45
    %2172 = vmatprep.subr.mxu0 0.0
    %2173 = vmatpush2.msra.mxu0 0.0
    %2174 = vmatprep.subr.mxu0 0.0
    %2175 = vmatpush2.msra.mxu0 0.0
    %2176 = vmatprep.subr.mxu0 0.0
    %2177 = vmatpush2.msra.mxu0 0.0
    %2178 = vmatprep.subr.mxu0 0.0
    %2179 = vmatpush2.msra.mxu0 0.0
    %2180 = vmatprep.subr.mxu0 0.0
    %2181 = vmatpush2.msra.mxu0 0.0
    %2182 = vmatprep.subr.mxu0 0.0
    %2183 = vmatpush2.msra.mxu0 0.0
    %2184 = vmatprep.subr.mxu0 0.0
    %2185 = vmatpush2.msra.mxu0 0.0
    %2186 = vmatprep.subr.mxu0 0.0
    %2187 = vmatpush2.msra.mxu0 0.0
    %2188 = vmatprep.subr.mxu0 0.0
    %2189 = vmatpush2.msra.mxu0 0.0
    %2190 = vmatprep.subr.mxu0 0.0
    %2191 = vmatpush2.msra.mxu0 0.0
    %2192 = vmatprep.subr.mxu0 0.0
    %2193 = vmatpush2.msra.mxu0 0.0
    %2194 = vmatprep.subr.mxu0 0.0
    %2195 = vmatpush2.msra.mxu0 0.0
    %2196 = vmatprep.subr.mxu0 0.0
    %2197 = vmatpush2.msra.mxu0 0.0
    %2198 = vmatprep.subr.mxu0 0.0
    %2199 = vmatpush2.msra.mxu0 0.0
    %2200 = vmatprep.subr.mxu0 0.0
    %2201 = vmatpush2.msra.mxu0 0.0
    %2202 = vmatprep.subr.mxu0 0.0
    %2203 = vmatpush2.msra.mxu0 0.0
    %2204 = vmatprep.mubr.f32.mxu0 0.0
    %2205 = vmatmul.mubr.f32.gmra.mxu0 %v1966
    %v2206 = vpop.f32.mrf.mxu0
    %v2207 = vadd.f32 0.0, %v2206
    %v2208 = vpop.f32.mrf.mxu0
    %2209 = vdwg.mxu0
    %v2210 = vadd.f32 %v214, %v2207
    %v2211 = vxor.u32 %v2210, 2147483648
    %v2212 = vmul.f32 %v2211, 1.442695
    %v2213 = vpow.pop %v2212
    %v2214 = vadd.f32 %v2213, 1.0
    %v2215 = vrcp.pop %v2214
    %v2216 = vmul.f32 1.0, %v2215
    %v2217 = vadd.f32 %v2207, %v299
    %2219 = vrot.lane.b32.xlu0 %v2217, 64
    %v2220 = vpop.permute.xlu0 %2219
    %v2222 = vmul.f32 %v2216, %v2220
    %2224 = vrot.lane.b32.xlu0 %v2222, 64
    %v2225 = vpop.permute.xlu0 %2224
    %v2227 = vadd.f32 %v214, %v2225
    %v2228 = vtanh.pop %v2227
    %v2229 = vsub.f32 1.0, %v2216
    %2231 = vrot.lane.b32.xlu0 %v2228, 96
    %v2232 = vpop.permute.xlu0 %2231
    %v2234 = vmul.f32 %v2229, %v2232
    %v2235 = vmul.f32 %v2216, %v1962
    %v2236 = vadd.f32 %v2234, %v2235
    %2238 = vrot.lane.b32.xlu0 %v2236, 96
    %v2239 = vpop.permute.xlu0 %2238
    %v2240 = vsel %vm217, %v2239, 0
    %2242 = vmatprep.subr.mxu0 0.0
    %2243 = vmatpush1.msra.mxu0 0.0
    %2244 = vmatprep.subr.mxu0 0.0
    %2245 = vmatpush1.msra.mxu0 0.0
    %2246 = vmatprep.subr.mxu0 0.0
    %2247 = vmatpush1.msra.mxu0 0.0
    %2248 = vmatprep.subr.mxu0 0.0
    %2249 = vmatpush1.msra.mxu0 0.0
    %2250 = vmatprep.subr.mxu0 0.0
    %2251 = vmatpush1.msra.mxu0 0.0
    %2252 = vmatprep.subr.mxu0 0.0
    %2253 = vmatpush1.msra.mxu0 0.0
    %2254 = vmatprep.subr.mxu0 0.0
    %2255 = vmatpush1.msra.mxu0 0.0
    %2256 = vmatprep.subr.mxu0 0.0
    %2257 = vmatpush1.msra.mxu0 0.0
    %2258 = vmatprep.subr.mxu0 0.0
    %2259 = vmatpush1.msra.mxu0 0.0
    %2260 = vmatprep.subr.mxu0 0.0
    %2261 = vmatpush1.msra.mxu0 0.0
    %2262 = vmatprep.subr.mxu0 0.0
    %2263 = vmatpush1.msra.mxu0 0.0
    %2264 = vmatprep.subr.mxu0 0.0
    %2265 = vmatpush1.msra.mxu0 0.0
    %2266 = vmatprep.subr.mxu0 0.0
    %2267 = vmatpush1.msra.mxu0 %v44
    %2268 = vmatprep.subr.mxu0 0.0
    %2269 = vmatpush1.msra.mxu0 %v43
    %2270 = vmatprep.subr.mxu0 0.0
    %2271 = vmatpush1.msra.mxu0 %v42
    %2272 = vmatprep.subr.mxu0 0.0
    %2273 = vmatpush1.msra.mxu0 %v41
    %2274 = vmatprep.subr.mxu0 0.0
    %2275 = vmatpush2.msra.mxu0 0.0
    %2276 = vmatprep.subr.mxu0 0.0
    %2277 = vmatpush2.msra.mxu0 0.0
    %2278 = vmatprep.subr.mxu0 0.0
    %2279 = vmatpush2.msra.mxu0 0.0
    %2280 = vmatprep.subr.mxu0 0.0
    %2281 = vmatpush2.msra.mxu0 0.0
    %2282 = vmatprep.subr.mxu0 0.0
    %2283 = vmatpush2.msra.mxu0 0.0
    %2284 = vmatprep.subr.mxu0 0.0
    %2285 = vmatpush2.msra.mxu0 0.0
    %2286 = vmatprep.subr.mxu0 0.0
    %2287 = vmatpush2.msra.mxu0 0.0
    %2288 = vmatprep.subr.mxu0 0.0
    %2289 = vmatpush2.msra.mxu0 0.0
    %2290 = vmatprep.subr.mxu0 0.0
    %2291 = vmatpush2.msra.mxu0 0.0
    %2292 = vmatprep.subr.mxu0 0.0
    %2293 = vmatpush2.msra.mxu0 0.0
    %2294 = vmatprep.subr.mxu0 0.0
    %2295 = vmatpush2.msra.mxu0 0.0
    %2296 = vmatprep.subr.mxu0 0.0
    %2297 = vmatpush2.msra.mxu0 0.0
    %2298 = vmatprep.subr.mxu0 0.0
    %2299 = vmatpush2.msra.mxu0 0.0
    %2300 = vmatprep.subr.mxu0 0.0
    %2301 = vmatpush2.msra.mxu0 0.0
    %2302 = vmatprep.subr.mxu0 0.0
    %2303 = vmatpush2.msra.mxu0 0.0
    %2304 = vmatprep.subr.mxu0 0.0
    %2305 = vmatpush2.msra.mxu0 0.0
    %2306 = vmatprep.mubr.f32.mxu0 0.0
    %2307 = vmatmul.mubr.f32.gmra.mxu0 %v2240
    %v2308 = vpop.f32.mrf.mxu0
    %v2309 = vadd.f32 %v58, %v2308
    %v2310 = vpop.f32.mrf.mxu0
    %2311 = vdwg.mxu0
    %2313 = vrot.lane.b32.xlu0 %v2139, 96
    %v2314 = vpop.permute.xlu0 %2313
    %v2315 = vsel %vm217, %v2314, 0
    %2317 = vmatprep.subr.mxu0 0.0
    %2318 = vmatpush1.msra.mxu0 0.0
    %2319 = vmatprep.subr.mxu0 0.0
    %2320 = vmatpush1.msra.mxu0 0.0
    %2321 = vmatprep.subr.mxu0 0.0
    %2322 = vmatpush1.msra.mxu0 0.0
    %2323 = vmatprep.subr.mxu0 0.0
    %2324 = vmatpush1.msra.mxu0 0.0
    %2325 = vmatprep.subr.mxu0 0.0
    %2326 = vmatpush1.msra.mxu0 0.0
    %2327 = vmatprep.subr.mxu0 0.0
    %2328 = vmatpush1.msra.mxu0 0.0
    %2329 = vmatprep.subr.mxu0 0.0
    %2330 = vmatpush1.msra.mxu0 0.0
    %2331 = vmatprep.subr.mxu0 0.0
    %2332 = vmatpush1.msra.mxu0 0.0
    %2333 = vmatprep.subr.mxu0 0.0
    %2334 = vmatpush1.msra.mxu0 0.0
    %2335 = vmatprep.subr.mxu0 0.0
    %2336 = vmatpush1.msra.mxu0 0.0
    %2337 = vmatprep.subr.mxu0 0.0
    %2338 = vmatpush1.msra.mxu0 0.0
    %2339 = vmatprep.subr.mxu0 0.0
    %2340 = vmatpush1.msra.mxu0 0.0
    %2341 = vmatprep.subr.mxu0 0.0
    %2342 = vmatpush1.msra.mxu0 %v52
    %2343 = vmatprep.subr.mxu0 0.0
    %2344 = vmatpush1.msra.mxu0 %v51
    %2345 = vmatprep.subr.mxu0 0.0
    %2346 = vmatpush1.msra.mxu0 %v50
    %2347 = vmatprep.subr.mxu0 0.0
    %2348 = vmatpush1.msra.mxu0 %v49
    %2349 = vmatprep.subr.mxu0 0.0
    %2350 = vmatpush2.msra.mxu0 0.0
    %2351 = vmatprep.subr.mxu0 0.0
    %2352 = vmatpush2.msra.mxu0 0.0
    %2353 = vmatprep.subr.mxu0 0.0
    %2354 = vmatpush2.msra.mxu0 0.0
    %2355 = vmatprep.subr.mxu0 0.0
    %2356 = vmatpush2.msra.mxu0 0.0
    %2357 = vmatprep.subr.mxu0 0.0
    %2358 = vmatpush2.msra.mxu0 0.0
    %2359 = vmatprep.subr.mxu0 0.0
    %2360 = vmatpush2.msra.mxu0 0.0
    %2361 = vmatprep.subr.mxu0 0.0
    %2362 = vmatpush2.msra.mxu0 0.0
    %2363 = vmatprep.subr.mxu0 0.0
    %2364 = vmatpush2.msra.mxu0 0.0
    %2365 = vmatprep.subr.mxu0 0.0
    %2366 = vmatpush2.msra.mxu0 0.0
    %2367 = vmatprep.subr.mxu0 0.0
    %2368 = vmatpush2.msra.mxu0 0.0
    %2369 = vmatprep.subr.mxu0 0.0
    %2370 = vmatpush2.msra.mxu0 0.0
    %2371 = vmatprep.subr.mxu0 0.0
    %2372 = vmatpush2.msra.mxu0 0.0
    %2373 = vmatprep.subr.mxu0 0.0
    %2374 = vmatpush2.msra.mxu0 0.0
    %2375 = vmatprep.subr.mxu0 0.0
    %2376 = vmatpush2.msra.mxu0 0.0
    %2377 = vmatprep.subr.mxu0 0.0
    %2378 = vmatpush2.msra.mxu0 0.0
    %2379 = vmatprep.subr.mxu0 0.0
    %2380 = vmatpush2.msra.mxu0 0.0
    %2381 = vmatprep.mubr.f32.mxu0 0.0
    %2382 = vmatmul.mubr.f32.gmra.mxu0 %v2315
    %v2383 = vpop.f32.mrf.mxu0
    %v2384 = vadd.f32 0.0, %v2383
    %v2385 = vpop.f32.mrf.mxu0
    %2386 = vdwg.mxu0
    %v2387 = vadd.f32 %v2309, %v2384
    %v2388 = vxor.u32 %v2387, 2147483648
    %v2389 = vmul.f32 %v2388, 1.442695
    %v2390 = vpow.pop %v2389
    %v2391 = vadd.f32 %v2390, 1.0
    %v2392 = vrcp.pop %v2391
    %v2393 = vmul.f32 1.0, %v2392
    %v2394 = vadd.f32 %v2384, %v474
    %2396 = vrot.lane.b32.xlu0 %v2394, 64
    %v2397 = vpop.permute.xlu0 %2396
    %v2399 = vmul.f32 %v2393, %v2397
    %2401 = vrot.lane.b32.xlu0 %v2399, 64
    %v2402 = vpop.permute.xlu0 %2401
    %v2404 = vadd.f32 %v2309, %v2402
    %v2405 = vtanh.pop %v2404
    %v2406 = vsub.f32 1.0, %v2393
    %2408 = vrot.lane.b32.xlu0 %v2405, 96
    %v2409 = vpop.permute.xlu0 %2408
    %v2411 = vmul.f32 %v2406, %v2409
    %v2412 = vmul.f32 %v2393, %v2139
    %v2413 = vadd.f32 %v2411, %v2412
    %v2414 = vld [vmem:[%s9] sm:$0xff]
    %v2415 = vld [vmem:[%s9 + $0x8] sm:$0xff]
    %v2416 = vld [vmem:[%s9 + $0x10] sm:$0xff]
    %v2417 = vld [vmem:[%s9 + $0x18] sm:$0xff]
    %v2418 = vld [vmem:[%s10] sm:$0x1]
    %v2420 = vlaneseq
    %v2421 = vshrl.u32 %v2420, 7
    %v2422 = vsub.s32 0, %v2421
    %v2423 = vrot.slane %v2418, %v2422
    %2426 = vrot.lane.b32.xlu0 %v2413, 96
    %v2427 = vpop.permute.xlu0 %2426
    %v2428 = vsel %vm217, %v2427, 0
    %2430 = vmatprep.subr.mxu0 0.0
    %2431 = vmatpush1.msra.mxu0 0.0
    %2432 = vmatprep.subr.mxu0 0.0
    %2433 = vmatpush1.msra.mxu0 0.0
    %2434 = vmatprep.subr.mxu0 0.0
    %2435 = vmatpush1.msra.mxu0 0.0
    %2436 = vmatprep.subr.mxu0 0.0
    %2437 = vmatpush1.msra.mxu0 0.0
    %2438 = vmatprep.subr.mxu0 0.0
    %2439 = vmatpush1.msra.mxu0 0.0
    %2440 = vmatprep.subr.mxu0 0.0
    %2441 = vmatpush1.msra.mxu0 0.0
    %2442 = vmatprep.subr.mxu0 0.0
    %2443 = vmatpush1.msra.mxu0 0.0
    %2444 = vmatprep.subr.mxu0 0.0
    %2445 = vmatpush1.msra.mxu0 0.0
    %2446 = vmatprep.subr.mxu0 0.0
    %2447 = vmatpush1.msra.mxu0 0.0
    %2448 = vmatprep.subr.mxu0 0.0
    %2449 = vmatpush1.msra.mxu0 0.0
    %2450 = vmatprep.subr.mxu0 0.0
    %2451 = vmatpush1.msra.mxu0 0.0
    %2452 = vmatprep.subr.mxu0 0.0
    %2453 = vmatpush1.msra.mxu0 0.0
    %2454 = vmatprep.subr.mxu0 0.0
    %2455 = vmatpush1.msra.mxu0 %v2417
    %2456 = vmatprep.subr.mxu0 0.0
    %2457 = vmatpush1.msra.mxu0 %v2416
    %2458 = vmatprep.subr.mxu0 0.0
    %2459 = vmatpush1.msra.mxu0 %v2415
    %2460 = vmatprep.subr.mxu0 0.0
    %2461 = vmatpush1.msra.mxu0 %v2414
    %2462 = vmatprep.subr.mxu0 0.0
    %2463 = vmatpush2.msra.mxu0 0.0
    %2464 = vmatprep.subr.mxu0 0.0
    %2465 = vmatpush2.msra.mxu0 0.0
    %2466 = vmatprep.subr.mxu0 0.0
    %2467 = vmatpush2.msra.mxu0 0.0
    %2468 = vmatprep.subr.mxu0 0.0
    %2469 = vmatpush2.msra.mxu0 0.0
    %2470 = vmatprep.subr.mxu0 0.0
    %2471 = vmatpush2.msra.mxu0 0.0
    %2472 = vmatprep.subr.mxu0 0.0
    %2473 = vmatpush2.msra.mxu0 0.0
    %2474 = vmatprep.subr.mxu0 0.0
    %2475 = vmatpush2.msra.mxu0 0.0
    %2476 = vmatprep.subr.mxu0 0.0
    %2477 = vmatpush2.msra.mxu0 0.0
    %2478 = vmatprep.subr.mxu0 0.0
    %2479 = vmatpush2.msra.mxu0 0.0
    %2480 = vmatprep.subr.mxu0 0.0
    %2481 = vmatpush2.msra.mxu0 0.0
    %2482 = vmatprep.subr.mxu0 0.0
    %2483 = vmatpush2.msra.mxu0 0.0
    %2484 = vmatprep.subr.mxu0 0.0
    %2485 = vmatpush2.msra.mxu0 0.0
    %2486 = vmatprep.subr.mxu0 0.0
    %2487 = vmatpush2.msra.mxu0 0.0
    %2488 = vmatprep.subr.mxu0 0.0
    %2489 = vmatpush2.msra.mxu0 0.0
    %2490 = vmatprep.subr.mxu0 0.0
    %2491 = vmatpush2.msra.mxu0 0.0
    %2492 = vmatprep.subr.mxu0 0.0
    %2493 = vmatpush2.msra.mxu0 0.0
    %2494 = vmatprep.mubr.f32.mxu0 0.0
    %2495 = vmatmul.mubr.f32.gmra.mxu0 %v2428
    %v2496 = vpop.f32.mrf.mxu0
    %v2497 = vadd.f32 %v2423, %v2496
    %v2498 = vpop.f32.mrf.mxu0
    %2499 = vdwg.mxu0
    %vm2500 = vcmask 64512
    %2501 = vst.msk [vmem:[#allocation2] sm:$0xff] %vm2500, %v2497
    // Predicated region
    $region46: #{tpu_custom_call.1} parent=1 // pred_check
      _
    $region47: #{tpu_custom_call.1} parent=1 // pred_check_branch
      %2503 = sbr.rel (0) target = $region49
    $region48: #{tpu_custom_call.1} parent=1 // pred_region
      %s2505 = ssub.s32 128, 128
      %2506 = vsyncadd [#allocation3], %s2505
      %s2508 = sshll.u32 [#allocation2], 4
      %s2509 = int_to_ptr.vmem [resolvable:$true] %s2508
      %2511 = dma.vmem_to_hbm [thread:$0]  %s2509, 128, %s11, [#allocation3]
    $region49: #{tpu_custom_call.1} parent=1 // pred_fallthru
      _
    // Predicated region
    $region50: #{tpu_custom_call.1} parent=1 // pred_check
      _
    $region51: #{tpu_custom_call.1} parent=1 // pred_check_branch
      %2513 = sbr.rel (0) target = $region53
    $region52: #{tpu_custom_call.1} parent=1 // pred_region
      %2514 = dma.done [#allocation3], 128
    $region53: #{tpu_custom_call.1} parent=1 // pred_fallthru
      _
    %2515 = vsyncpa [#allocation3], 1

</llo_original>
